<compile_context>
chip_gen: v5e
topology: v5e:2x2
jax: 0.10.0
libtpu: 0.0.40
codegen_flags: <defaults>
</compile_context>

<pallas_src>
import numpy as np
import jax
import jax.numpy as jnp
from jax.experimental import pallas as pl
from jax.experimental.pallas import tpu as pltpu

FEATURE_LEN_LIST = [29, 6, 12, 4, 1, 9, 1, 5]   # sums to 67 == num_features
GROUP = 8                                        # features per grid step


# ----------------------------------------------------------------------------
# Encoder kernel: grid over groups of GROUP encoded features.  For each group
# run a small batched LSTM over time, project to (mu, logvar), reparameterize
# with precomputed eps, and accumulate (z, mu, logvar) into resident output
# blocks.  The KL term is computed in-kernel on the last grid step.
# Padded feature slots carry all-zero weights and zero eps -> contribute 0.
# ----------------------------------------------------------------------------
def _enc_kernel(x_ref, wih_ref, whh_ref, b_ref, wmu_ref, bmu_ref, wlv_ref,
                blv_ref, eps_ref, z_ref, mu_ref, lv_ref, kl_ref):
    gi = pl.program_id(0)
    ng = pl.num_programs(0)

    @pl.when(gi == 0)
    def _init():
        z_ref[...] = jnp.zeros_like(z_ref)
        mu_ref[...] = jnp.zeros_like(mu_ref)
        lv_ref[...] = jnp.zeros_like(lv_ref)
        kl_ref[...] = jnp.zeros_like(kl_ref)

    G, B, T = x_ref.shape
    H = whh_ref.shape[1]

    x = x_ref[...]                                     # (G, B, T)
    whh = whh_ref[...]                                 # (G, H, 4H)
    # Hoist broadcasts out of the unrolled time loop (not CSE'd by JAX).
    wih_b = jnp.broadcast_to(wih_ref[...], (G, B, 4 * H))
    b_b = jnp.broadcast_to(b_ref[...], (G, B, 4 * H))

    h = jnp.zeros((G, B, H), jnp.float32)
    c = jnp.zeros((G, B, H), jnp.float32)
    for t in range(T):                                 # static unroll (T small)
        x_t = x[:, :, t:t + 1]                         # (G, B, 1)
        gates = (x_t * wih_b + b_b
                 + jnp.einsum('gbh,ghk->gbk', h, whh,
                              preferred_element_type=jnp.float32))
        i_g = jax.nn.sigmoid(gates[:, :, 0:H])
        f_g = jax.nn.sigmoid(gates[:, :, H:2 * H])
        g_g = jnp.tanh(gates[:, :, 2 * H:3 * H])
        o_g = jax.nn.sigmoid(gates[:, :, 3 * H:4 * H])
        c = f_g * c + i_g * g_g
        h = o_g * jnp.tanh(c)

    mu = jnp.einsum('gbh,ghl->gbl', h, wmu_ref[...],
                    preferred_element_type=jnp.float32) + bmu_ref[...]
    lv = jnp.einsum('gbh,ghl->gbl', h, wlv_ref[...],
                    preferred_element_type=jnp.float32) + blv_ref[...]
    z = mu + jnp.exp(0.5 * lv) * eps_ref[...]

    # Accumulate into resident output blocks (sum over the group axis).
    z_ref[...] = z_ref[...] + jnp.sum(z, axis=0)
    mu_ref[...] = mu_ref[...] + jnp.sum(mu, axis=0)
    lv_ref[...] = lv_ref[...] + jnp.sum(lv, axis=0)

    @pl.when(gi == ng - 1)
    def _finalize():
        m = mu_ref[...]
        l = lv_ref[...]
        kl_b = -0.5 * jnp.sum(1.0 + l - m * m - jnp.exp(l), axis=1,
                              keepdims=True)            # (B, 1)
        kl_ref[...] = jnp.mean(kl_b, axis=0, keepdims=True)


def _pad_lead(a, total):
    pad = total - a.shape[0]
    if pad == 0:
        return a
    return jnp.pad(a, [(0, pad)] + [(0, 0)] * (a.ndim - 1))


def encoder_pallas(x_all, ep, eps, group=GROUP):
    NF, B, T = x_all.shape
    H = ep["whh"].shape[1]
    L = ep["wmu"].shape[2]
    ng = pl.cdiv(NF, group)
    NFp = ng * group
    x_all = _pad_lead(x_all, NFp)
    eps = _pad_lead(eps, NFp)
    ep = {k: _pad_lead(v, NFp) for k, v in ep.items()}

    grp = lambda shape: pl.BlockSpec((group,) + shape, lambda g: (g, 0, 0))
    acc = lambda shape: pl.BlockSpec(shape, lambda g: (0, 0))
    return pl.pallas_call(
        _enc_kernel,
        out_shape=(
            jax.ShapeDtypeStruct((B, L), jnp.float32),   # z_sum
            jax.ShapeDtypeStruct((B, L), jnp.float32),   # mu_sum
            jax.ShapeDtypeStruct((B, L), jnp.float32),   # logvar_sum
            jax.ShapeDtypeStruct((1, 1), jnp.float32),   # kl
        ),
        grid_spec=pltpu.PrefetchScalarGridSpec(
            num_scalar_prefetch=0,
            grid=(ng,),
            in_specs=[
                grp((B, T)),           # x
                grp((1, 4 * H)),       # W_ih
                grp((H, 4 * H)),       # W_hh
                grp((1, 4 * H)),       # bias
                grp((H, L)),           # W_mu
                grp((1, L)),           # b_mu
                grp((H, L)),           # W_logvar
                grp((1, L)),           # b_logvar
                grp((B, L)),           # eps
            ],
            out_specs=[acc((B, L)), acc((B, L)), acc((B, L)), acc((1, 1))],
        ),
        compiler_params=pltpu.CompilerParams(
            dimension_semantics=("arbitrary",)),   # resident accumulators
    )(x_all, ep["wih"], ep["whh"], ep["b"], ep["wmu"], ep["bmu"],
      ep["wlv"], ep["blv"], eps)


# ----------------------------------------------------------------------------
# Decoder kernel: grid over groups of GROUP decoded features.  Each group runs
# a batched LSTM fed with the (summed) latent z at every step and writes a
# (G, B, T) slab with a single lane-dense block store.
# ----------------------------------------------------------------------------
def _dec_kernel(z_ref, wih_ref, whh_ref, b_ref, wout_ref, bout_ref, y_ref):
    G, B, T = y_ref.shape
    H = whh_ref.shape[1]
    L = z_ref.shape[1]

    whh = whh_ref[...]                                 # (G, H, 4H)
    wout = wout_ref[...]                               # (G, 1, H)
    bout = bout_ref[...]                               # (G, 1, 1)

    # Latent shared across features; input contribution identical at every
    # step -> hoist entirely out of the recurrence.
    z = jnp.broadcast_to(z_ref[...][None, :, :], (G, B, L))
    gx = (jnp.einsum('gbl,glk->gbk', z, wih_ref[...],
                     preferred_element_type=jnp.float32)
          + jnp.broadcast_to(b_ref[...], (G, B, 4 * H)))

    h = jnp.zeros((G, B, H), jnp.float32)
    c = jnp.zeros((G, B, H), jnp.float32)
    ys = []
    for t in range(T):                                 # static unroll
        gates = gx + jnp.einsum('gbh,ghk->gbk', h, whh,
                                preferred_element_type=jnp.float32)
        i_g = jax.nn.sigmoid(gates[:, :, 0:H])
        f_g = jax.nn.sigmoid(gates[:, :, H:2 * H])
        g_g = jnp.tanh(gates[:, :, 2 * H:3 * H])
        o_g = jax.nn.sigmoid(gates[:, :, 3 * H:4 * H])
        c = f_g * c + i_g * g_g
        h = o_g * jnp.tanh(c)
        ys.append(jnp.sum(h * wout, axis=2, keepdims=True) + bout)  # (G, B, 1)
    # One full-block store per feature group (no per-t masked column stores).
    y_ref[...] = jnp.concatenate(ys, axis=2)


def decoder_pallas(z_sum, dp, T, group=GROUP):
    ND = dp["wih"].shape[0]
    L = dp["wih"].shape[1]
    H = dp["whh"].shape[1]
    B = z_sum.shape[0]
    ng = pl.cdiv(ND, group)
    NDp = ng * group
    dp = {k: _pad_lead(v, NDp) for k, v in dp.items()}

    grp = lambda shape: pl.BlockSpec((group,) + shape, lambda d: (d, 0, 0))
    y = pl.pallas_call(
        _dec_kernel,
        out_shape=jax.ShapeDtypeStruct((NDp, B, T), jnp.float32),
        grid_spec=pltpu.PrefetchScalarGridSpec(
            num_scalar_prefetch=0,
            grid=(ng,),
            in_specs=[
                pl.BlockSpec((B, L), lambda d: (0, 0)),   # z_sum (shared)
                grp((L, 4 * H)),                          # W_ih
                grp((H, 4 * H)),                          # W_hh
                grp((1, 4 * H)),                          # bias
                grp((1, H)),                              # W_out (transposed)
                grp((1, 1)),                              # b_out
            ],
            out_specs=pl.BlockSpec((group, B, T), lambda d: (d, 0, 0)),
        ),
        compiler_params=pltpu.CompilerParams(
            dimension_semantics=("parallel",)),   # independent -> v7x 2-TC split
    )(z_sum, dp["wih"], dp["whh"], dp["b"], dp["wout"], dp["bout"])
    return y[:ND]


# ----------------------------------------------------------------------------
# Glue that mirrors TimeseriesVAE2.forward exactly (index bookkeeping,
# per-feature weight gather, concatenation, KL).
# ----------------------------------------------------------------------------
def _compute_indices(inputs):
    enc_idx = []
    for input_idx, inp in enumerate(inputs):
        for feature_idx in range(inp.shape[2]):
            idx = feature_idx
            while idx >= FEATURE_LEN_LIST[input_idx]:
                idx -= FEATURE_LEN_LIST[input_idx]
            enc_idx.append(idx)
    dec_idx = []
    idx = 0
    for input_idx, inp in enumerate(inputs):
        for _feature_idx in range(inp.shape[2]):
            if idx >= FEATURE_LEN_LIST[input_idx]:
                idx -= FEATURE_LEN_LIST[input_idx]
            dec_idx.append(idx)
            idx += 1
    return enc_idx, dec_idx


def timeseries_vae2_forward(inputs, enc_params, dec_params, eps):
    T = inputs[0].shape[1]
    enc_idx, dec_idx = _compute_indices(inputs)
    # (NF, B, T): one slab per encoded feature column
    x_all = jnp.concatenate([jnp.transpose(inp, (2, 0, 1)) for inp in inputs],
                            axis=0)
    enc_g = {k: jnp.take(v, jnp.asarray(enc_idx), axis=0)
             for k, v in enc_params.items()}
    dec_g = {k: jnp.take(v, jnp.asarray(dec_idx), axis=0)
             for k, v in dec_params.items()}
    z_sum, mu_sum, lv_sum, kl = encoder_pallas(x_all, enc_g, eps)
    del mu_sum, lv_sum  # consumed inside the kernel for the KL term
    y = decoder_pallas(z_sum, dec_g, T)          # (ND, B, T)
    decoded_cat = jnp.transpose(y, (1, 2, 0))    # (B, T, ND) == torch.cat(dim=-1)
    return decoded_cat, kl[0, 0]


# ----------------------------------------------------------------------------
# Pure-JAX reference (same math, no Pallas) for a correctness check.
# ----------------------------------------------------------------------------
def _encode_ref(x_f, p, eps_f):
    B, T = x_f.shape
    H = p["whh"].shape[0]
    h = jnp.zeros((B, H)); c = jnp.zeros((B, H))
    for t in range(T):
        x_t = x_f[:, t:t + 1]
        gates = x_t * p["wih"] + h @ p["whh"] + p["b"]
        i = jax.nn.sigmoid(gates[:, :H]); f = jax.nn.sigmoid(gates[:, H:2 * H])
        g = jnp.tanh(gates[:, 2 * H:3 * H]); o = jax.nn.sigmoid(gates[:, 3 * H:])
        c = f * c + i * g
        h = o * jnp.tanh(c)
    mu = h @ p["wmu"] + p["bmu"]
    lv = h @ p["wlv"] + p["blv"]
    z = mu + jnp.exp(0.5 * lv) * eps_f
    return z, mu, lv


def _decode_ref(z, p, T):
    B = z.shape[0]
    H = p["whh"].shape[0]
    gx = z @ p["wih"] + p["b"]
    h = jnp.zeros((B, H)); c = jnp.zeros((B, H))
    ys = []
    for _t in range(T):
        gates = gx + h @ p["whh"]
        i = jax.nn.sigmoid(gates[:, :H]); f = jax.nn.sigmoid(gates[:, H:2 * H])
        g = jnp.tanh(gates[:, 2 * H:3 * H]); o = jax.nn.sigmoid(gates[:, 3 * H:])
        c = f * c + i * g
        h = o * jnp.tanh(c)
        ys.append(jnp.sum(h * p["wout"], axis=1, keepdims=True) + p["bout"])
    return jnp.concatenate(ys, axis=1)[:, :, None]   # (B, T, 1)


def timeseries_vae2_reference(inputs, enc_params, dec_params, eps):
    T = inputs[0].shape[1]
    enc_idx, dec_idx = _compute_indices(inputs)
    x_all = jnp.concatenate([jnp.transpose(inp, (2, 0, 1)) for inp in inputs],
                            axis=0)
    zs, mus, lvs = [], [], []
    for call, e_i in enumerate(enc_idx):
        p = {k: v[e_i] for k, v in enc_params.items()}
        z, mu, lv = _encode_ref(x_all[call], p, eps[call])
        zs.append(z); mus.append(mu); lvs.append(lv)
    z_sum = sum(zs); mu_sum = sum(mus); lv_sum = sum(lvs)
    kl = -0.5 * jnp.mean(jnp.sum(1.0 + lv_sum - mu_sum ** 2 - jnp.exp(lv_sum),
                                 axis=1))
    decs = []
    for d_i in dec_idx:
        p = {k: v[d_i] for k, v in dec_params.items()}
        decs.append(_decode_ref(z_sum, p, T))
    return jnp.concatenate(decs, axis=-1), kl


# ----------------------------------------------------------------------------
def init_params(key, n_modules, H, L):
    ks = jax.random.split(key, 12)
    s = 0.1
    enc = dict(
        wih=s * jax.random.normal(ks[0], (n_modules, 1, 4 * H), jnp.float32),
        whh=s * jax.random.normal(ks[1], (n_modules, H, 4 * H), jnp.float32),
        b=s * jax.random.normal(ks[2], (n_modules, 1, 4 * H), jnp.float32),
        wmu=s * jax.random.normal(ks[3], (n_modules, H, L), jnp.float32),
        bmu=s * jax.random.normal(ks[4], (n_modules, 1, L), jnp.float32),
        wlv=s * jax.random.normal(ks[5], (n_modules, H, L), jnp.float32),
        blv=s * jax.random.normal(ks[6], (n_modules, 1, L), jnp.float32),
    )
    dec = dict(
        wih=s * jax.random.normal(ks[7], (n_modules, L, 4 * H), jnp.float32),
        whh=s * jax.random.normal(ks[8], (n_modules, H, 4 * H), jnp.float32),
        b=s * jax.random.normal(ks[9], (n_modules, 1, 4 * H), jnp.float32),
        wout=s * jax.random.normal(ks[10], (n_modules, 1, H), jnp.float32),
        bout=s * jax.random.normal(ks[11], (n_modules, 1, 1), jnp.float32),
    )
    return enc, dec


if __name__ == "__main__":
    key = jax.random.PRNGKey(0)
    B, T = 4, 8                 # batch, sequence length
    H, L = 16, 8                # hidden_dim (hidden_layers[1]), latent_dim
    NUM_MODULES = 67            # self.num_features

    k_in, k_par, k_eps = jax.random.split(key, 3)
    in_keys = jax.random.split(k_in, len(FEATURE_LEN_LIST))
    inputs = [jax.random.normal(in_keys[i], (B, T, f), jnp.float32)
              for i, f in enumerate(FEATURE_LEN_LIST)]

    enc_params, dec_params = init_params(k_par, NUM_MODULES, H, L)
    n_calls = sum(inp.shape[2] for inp in inputs)          # 67 encoder calls
    eps = jax.random.normal(k_eps, (n_calls, B, L), jnp.float32)

    decoded, kl = timeseries_vae2_forward(inputs, enc_params, dec_params, eps)
    decoded = jax.block_until_ready(decoded)
    kl = jax.block_until_ready(kl)

    decoded_ref, kl_ref = timeseries_vae2_reference(inputs, enc_params,
                                                    dec_params, eps)
    np.testing.assert_allclose(np.asarray(decoded), np.asarray(decoded_ref),
                               rtol=5e-3, atol=5e-3)
    np.testing.assert_allclose(float(kl), float(kl_ref), rtol=5e-3, atol=5e-3)
    assert decoded.shape == (B, T, n_calls)
    print("KERNEL_OK")
</pallas_src>

<mosaic_0001>
module attributes {stable_mosaic.version = 11 : i64} {
  func.func @_enc_kernel(%arg0: i32, %arg1: memref<8x4x8xf32, #tpu.memory_space<vmem>>, %arg2: memref<8x1x64xf32, #tpu.memory_space<vmem>>, %arg3: memref<8x16x64xf32, #tpu.memory_space<vmem>>, %arg4: memref<8x1x64xf32, #tpu.memory_space<vmem>>, %arg5: memref<8x16x8xf32, #tpu.memory_space<vmem>>, %arg6: memref<8x1x8xf32, #tpu.memory_space<vmem>>, %arg7: memref<8x16x8xf32, #tpu.memory_space<vmem>>, %arg8: memref<8x1x8xf32, #tpu.memory_space<vmem>>, %arg9: memref<8x4x8xf32, #tpu.memory_space<vmem>>, %arg10: memref<4x8xf32, #tpu.memory_space<vmem>>, %arg11: memref<4x8xf32, #tpu.memory_space<vmem>>, %arg12: memref<4x8xf32, #tpu.memory_space<vmem>>, %arg13: memref<1x1xf32, #tpu.memory_space<vmem>>) attributes {dimension_semantics = [#tpu.dimension_semantics<arbitrary>], iteration_bounds = array<i64: 9>, scalar_prefetch = 0 : i64, scratch_operands = 0 : i64, tpu.core_type = #tpu.core_type<tc>, window_params = [{transform_indices = @transform_0, window_bounds = array<i64: 8, 4, 8>}, {transform_indices = @transform_1, window_bounds = array<i64: 8, 1, 64>}, {transform_indices = @transform_2, window_bounds = array<i64: 8, 16, 64>}, {transform_indices = @transform_3, window_bounds = array<i64: 8, 1, 64>}, {transform_indices = @transform_4, window_bounds = array<i64: 8, 16, 8>}, {transform_indices = @transform_5, window_bounds = array<i64: 8, 1, 8>}, {transform_indices = @transform_6, window_bounds = array<i64: 8, 16, 8>}, {transform_indices = @transform_7, window_bounds = array<i64: 8, 1, 8>}, {transform_indices = @transform_8, window_bounds = array<i64: 8, 4, 8>}, {pipeline_mode = #tpu.pipeline_mode<synchronous>, transform_indices = @transform_9, window_bounds = array<i64: 4, 8>}, {pipeline_mode = #tpu.pipeline_mode<synchronous>, transform_indices = @transform_10, window_bounds = array<i64: 4, 8>}, {pipeline_mode = #tpu.pipeline_mode<synchronous>, transform_indices = @transform_11, window_bounds = array<i64: 4, 8>}, {pipeline_mode = #tpu.pipeline_mode<synchronous>, transform_indices = @transform_12, window_bounds = array<i64: 1, 1>}]} {
    %c0_i32 = arith.constant 0 : i32
    %0 = arith.cmpi eq, %arg0, %c0_i32 : i32
    %1 = arith.extui %0 : i1 to i32
    %c0_i32_0 = arith.constant 0 : i32
    %2 = arith.cmpi ne, %1, %c0_i32_0 : i32
    scf.if %2 {
      %cst_79 = arith.constant 0.000000e+00 : f32
      %292 = vector.broadcast %cst_79 : f32 to vector<4x8xf32>
      %c0_80 = arith.constant 0 : index
      %c0_81 = arith.constant 0 : index
      %293 = vector.load %arg10[%c0_80, %c0_81] : memref<4x8xf32, #tpu.memory_space<vmem>>, vector<4x8xf32>
      tpu.vector_store %arg10[%c0_80, %c0_81], %292 {strides = array<i32>} : memref<4x8xf32, #tpu.memory_space<vmem>>, vector<4x8xf32>,
      %cst_82 = arith.constant 0.000000e+00 : f32
      %294 = vector.broadcast %cst_82 : f32 to vector<4x8xf32>
      %c0_83 = arith.constant 0 : index
      %c0_84 = arith.constant 0 : index
      %295 = vector.load %arg11[%c0_83, %c0_84] : memref<4x8xf32, #tpu.memory_space<vmem>>, vector<4x8xf32>
      tpu.vector_store %arg11[%c0_83, %c0_84], %294 {strides = array<i32>} : memref<4x8xf32, #tpu.memory_space<vmem>>, vector<4x8xf32>,
      %cst_85 = arith.constant 0.000000e+00 : f32
      %296 = vector.broadcast %cst_85 : f32 to vector<4x8xf32>
      %c0_86 = arith.constant 0 : index
      %c0_87 = arith.constant 0 : index
      %297 = vector.load %arg12[%c0_86, %c0_87] : memref<4x8xf32, #tpu.memory_space<vmem>>, vector<4x8xf32>
      tpu.vector_store %arg12[%c0_86, %c0_87], %296 {strides = array<i32>} : memref<4x8xf32, #tpu.memory_space<vmem>>, vector<4x8xf32>,
      %cst_88 = arith.constant 0.000000e+00 : f32
      %298 = vector.broadcast %cst_88 : f32 to vector<1x1xf32>
      %c0_89 = arith.constant 0 : index
      %c0_90 = arith.constant 0 : index
      %299 = vector.load %arg13[%c0_89, %c0_90] : memref<1x1xf32, #tpu.memory_space<vmem>>, vector<1x1xf32>
      tpu.vector_store %arg13[%c0_89, %c0_90], %298 {strides = array<i32>} : memref<1x1xf32, #tpu.memory_space<vmem>>, vector<1x1xf32>,
    } else {
    }
    %c0 = arith.constant 0 : index
    %c0_1 = arith.constant 0 : index
    %c0_2 = arith.constant 0 : index
    %3 = vector.load %arg1[%c0, %c0_1, %c0_2] : memref<8x4x8xf32, #tpu.memory_space<vmem>>, vector<8x4x8xf32>
    %c0_3 = arith.constant 0 : index
    %c0_4 = arith.constant 0 : index
    %c0_5 = arith.constant 0 : index
    %4 = vector.load %arg3[%c0_3, %c0_4, %c0_5] : memref<8x16x64xf32, #tpu.memory_space<vmem>>, vector<8x16x64xf32>
    %c0_6 = arith.constant 0 : index
    %c0_7 = arith.constant 0 : index
    %c0_8 = arith.constant 0 : index
    %5 = vector.load %arg2[%c0_6, %c0_7, %c0_8] : memref<8x1x64xf32, #tpu.memory_space<vmem>>, vector<8x1x64xf32>
    %6 = vector.shape_cast %5 : vector<8x1x64xf32> to vector<8x1x64xf32>
    %7 = vector.broadcast %6 : vector<8x1x64xf32> to vector<8x4x64xf32>
    %c0_9 = arith.constant 0 : index
    %c0_10 = arith.constant 0 : index
    %c0_11 = arith.constant 0 : index
    %8 = vector.load %arg4[%c0_9, %c0_10, %c0_11] : memref<8x1x64xf32, #tpu.memory_space<vmem>>, vector<8x1x64xf32>
    %9 = vector.shape_cast %8 : vector<8x1x64xf32> to vector<8x1x64xf32>
    %10 = vector.broadcast %9 : vector<8x1x64xf32> to vector<8x4x64xf32>
    %cst = arith.constant 0.000000e+00 : f32
    %11 = vector.broadcast %cst : f32 to vector<8x4x16xf32>
    %cst_12 = arith.constant 0.000000e+00 : f32
    %12 = vector.broadcast %cst_12 : f32 to vector<8x4x16xf32>
    %13 = vector.extract_strided_slice %3 {offsets = [0, 0, 0], sizes = [8, 4, 1], strides = [1, 1, 1]} : vector<8x4x8xf32> to vector<8x4x1xf32>
    %14 = vector.broadcast %13 : vector<8x4x1xf32> to vector<8x4x64xf32>
    %15 = arith.mulf %14, %7 : vector<8x4x64xf32>
    %16 = arith.addf %15, %10 : vector<8x4x64xf32>
    "tpu.trace_start"() <{level = 10 : i32, message = "gbh,ghk->gbk"}> : () -> ()
    %cst_13 = arith.constant dense<0.000000e+00> : vector<8x4x64xf32>
    %17 = tpu.matmul %11, %4, %cst_13 {dimension_numbers = #tpu.dot_dimension_numbers<[2], [1], [1], [2], [0, 0, 0, 1, 1, 2], [0], [0]>} : vector<8x4x16xf32>, vector<8x16x64xf32>, vector<8x4x64xf32> -> vector<8x4x64xf32>
    "tpu.trace_stop"() : () -> ()
    %18 = arith.addf %16, %17 : vector<8x4x64xf32>
    %19 = vector.extract_strided_slice %18 {offsets = [0, 0, 0], sizes = [8, 4, 16], strides = [1, 1, 1]} : vector<8x4x64xf32> to vector<8x4x16xf32>
    %20 = arith.negf %19 : vector<8x4x16xf32>
    %21 = math.exp %20 : vector<8x4x16xf32>
    %cst_14 = arith.constant 1.000000e+00 : f32
    %22 = vector.broadcast %cst_14 : f32 to vector<8x4x16xf32>
    %23 = arith.addf %22, %21 : vector<8x4x16xf32>
    %24 = arith.divf %22, %23 : vector<8x4x16xf32>
    %25 = vector.extract_strided_slice %18 {offsets = [0, 0, 16], sizes = [8, 4, 16], strides = [1, 1, 1]} : vector<8x4x64xf32> to vector<8x4x16xf32>
    %26 = arith.negf %25 : vector<8x4x16xf32>
    %27 = math.exp %26 : vector<8x4x16xf32>
    %cst_15 = arith.constant 1.000000e+00 : f32
    %28 = vector.broadcast %cst_15 : f32 to vector<8x4x16xf32>
    %29 = arith.addf %28, %27 : vector<8x4x16xf32>
    %30 = arith.divf %28, %29 : vector<8x4x16xf32>
    %31 = vector.extract_strided_slice %18 {offsets = [0, 0, 32], sizes = [8, 4, 16], strides = [1, 1, 1]} : vector<8x4x64xf32> to vector<8x4x16xf32>
    %32 = math.tanh %31 : vector<8x4x16xf32>
    %33 = vector.extract_strided_slice %18 {offsets = [0, 0, 48], sizes = [8, 4, 16], strides = [1, 1, 1]} : vector<8x4x64xf32> to vector<8x4x16xf32>
    %34 = arith.negf %33 : vector<8x4x16xf32>
    %35 = math.exp %34 : vector<8x4x16xf32>
    %cst_16 = arith.constant 1.000000e+00 : f32
    %36 = vector.broadcast %cst_16 : f32 to vector<8x4x16xf32>
    %37 = arith.addf %36, %35 : vector<8x4x16xf32>
    %38 = arith.divf %36, %37 : vector<8x4x16xf32>
    %39 = arith.mulf %30, %12 : vector<8x4x16xf32>
    %40 = arith.mulf %24, %32 : vector<8x4x16xf32>
    %41 = arith.addf %39, %40 : vector<8x4x16xf32>
    %42 = math.tanh %41 : vector<8x4x16xf32>
    %43 = arith.mulf %38, %42 : vector<8x4x16xf32>
    %44 = vector.extract_strided_slice %3 {offsets = [0, 0, 1], sizes = [8, 4, 1], strides = [1, 1, 1]} : vector<8x4x8xf32> to vector<8x4x1xf32>
    %45 = vector.broadcast %44 : vector<8x4x1xf32> to vector<8x4x64xf32>
    %46 = arith.mulf %45, %7 : vector<8x4x64xf32>
    %47 = arith.addf %46, %10 : vector<8x4x64xf32>
    "tpu.trace_start"() <{level = 10 : i32, message = "gbh,ghk->gbk"}> : () -> ()
    %cst_17 = arith.constant dense<0.000000e+00> : vector<8x4x64xf32>
    %48 = tpu.matmul %43, %4, %cst_17 {dimension_numbers = #tpu.dot_dimension_numbers<[2], [1], [1], [2], [0, 0, 0, 1, 1, 2], [0], [0]>} : vector<8x4x16xf32>, vector<8x16x64xf32>, vector<8x4x64xf32> -> vector<8x4x64xf32>
    "tpu.trace_stop"() : () -> ()
    %49 = arith.addf %47, %48 : vector<8x4x64xf32>
    %50 = vector.extract_strided_slice %49 {offsets = [0, 0, 0], sizes = [8, 4, 16], strides = [1, 1, 1]} : vector<8x4x64xf32> to vector<8x4x16xf32>
    %51 = arith.negf %50 : vector<8x4x16xf32>
    %52 = math.exp %51 : vector<8x4x16xf32>
    %cst_18 = arith.constant 1.000000e+00 : f32
    %53 = vector.broadcast %cst_18 : f32 to vector<8x4x16xf32>
    %54 = arith.addf %53, %52 : vector<8x4x16xf32>
    %55 = arith.divf %53, %54 : vector<8x4x16xf32>
    %56 = vector.extract_strided_slice %49 {offsets = [0, 0, 16], sizes = [8, 4, 16], strides = [1, 1, 1]} : vector<8x4x64xf32> to vector<8x4x16xf32>
    %57 = arith.negf %56 : vector<8x4x16xf32>
    %58 = math.exp %57 : vector<8x4x16xf32>
    %cst_19 = arith.constant 1.000000e+00 : f32
    %59 = vector.broadcast %cst_19 : f32 to vector<8x4x16xf32>
    %60 = arith.addf %59, %58 : vector<8x4x16xf32>
    %61 = arith.divf %59, %60 : vector<8x4x16xf32>
    %62 = vector.extract_strided_slice %49 {offsets = [0, 0, 32], sizes = [8, 4, 16], strides = [1, 1, 1]} : vector<8x4x64xf32> to vector<8x4x16xf32>
    %63 = math.tanh %62 : vector<8x4x16xf32>
    %64 = vector.extract_strided_slice %49 {offsets = [0, 0, 48], sizes = [8, 4, 16], strides = [1, 1, 1]} : vector<8x4x64xf32> to vector<8x4x16xf32>
    %65 = arith.negf %64 : vector<8x4x16xf32>
    %66 = math.exp %65 : vector<8x4x16xf32>
    %cst_20 = arith.constant 1.000000e+00 : f32
    %67 = vector.broadcast %cst_20 : f32 to vector<8x4x16xf32>
    %68 = arith.addf %67, %66 : vector<8x4x16xf32>
    %69 = arith.divf %67, %68 : vector<8x4x16xf32>
    %70 = arith.mulf %61, %41 : vector<8x4x16xf32>
    %71 = arith.mulf %55, %63 : vector<8x4x16xf32>
    %72 = arith.addf %70, %71 : vector<8x4x16xf32>
    %73 = math.tanh %72 : vector<8x4x16xf32>
    %74 = arith.mulf %69, %73 : vector<8x4x16xf32>
    %75 = vector.extract_strided_slice %3 {offsets = [0, 0, 2], sizes = [8, 4, 1], strides = [1, 1, 1]} : vector<8x4x8xf32> to vector<8x4x1xf32>
    %76 = vector.broadcast %75 : vector<8x4x1xf32> to vector<8x4x64xf32>
    %77 = arith.mulf %76, %7 : vector<8x4x64xf32>
    %78 = arith.addf %77, %10 : vector<8x4x64xf32>
    "tpu.trace_start"() <{level = 10 : i32, message = "gbh,ghk->gbk"}> : () -> ()
    %cst_21 = arith.constant dense<0.000000e+00> : vector<8x4x64xf32>
    %79 = tpu.matmul %74, %4, %cst_21 {dimension_numbers = #tpu.dot_dimension_numbers<[2], [1], [1], [2], [0, 0, 0, 1, 1, 2], [0], [0]>} : vector<8x4x16xf32>, vector<8x16x64xf32>, vector<8x4x64xf32> -> vector<8x4x64xf32>
    "tpu.trace_stop"() : () -> ()
    %80 = arith.addf %78, %79 : vector<8x4x64xf32>
    %81 = vector.extract_strided_slice %80 {offsets = [0, 0, 0], sizes = [8, 4, 16], strides = [1, 1, 1]} : vector<8x4x64xf32> to vector<8x4x16xf32>
    %82 = arith.negf %81 : vector<8x4x16xf32>
    %83 = math.exp %82 : vector<8x4x16xf32>
    %cst_22 = arith.constant 1.000000e+00 : f32
    %84 = vector.broadcast %cst_22 : f32 to vector<8x4x16xf32>
    %85 = arith.addf %84, %83 : vector<8x4x16xf32>
    %86 = arith.divf %84, %85 : vector<8x4x16xf32>
    %87 = vector.extract_strided_slice %80 {offsets = [0, 0, 16], sizes = [8, 4, 16], strides = [1, 1, 1]} : vector<8x4x64xf32> to vector<8x4x16xf32>
    %88 = arith.negf %87 : vector<8x4x16xf32>
    %89 = math.exp %88 : vector<8x4x16xf32>
    %cst_23 = arith.constant 1.000000e+00 : f32
    %90 = vector.broadcast %cst_23 : f32 to vector<8x4x16xf32>
    %91 = arith.addf %90, %89 : vector<8x4x16xf32>
    %92 = arith.divf %90, %91 : vector<8x4x16xf32>
    %93 = vector.extract_strided_slice %80 {offsets = [0, 0, 32], sizes = [8, 4, 16], strides = [1, 1, 1]} : vector<8x4x64xf32> to vector<8x4x16xf32>
    %94 = math.tanh %93 : vector<8x4x16xf32>
    %95 = vector.extract_strided_slice %80 {offsets = [0, 0, 48], sizes = [8, 4, 16], strides = [1, 1, 1]} : vector<8x4x64xf32> to vector<8x4x16xf32>
    %96 = arith.negf %95 : vector<8x4x16xf32>
    %97 = math.exp %96 : vector<8x4x16xf32>
    %cst_24 = arith.constant 1.000000e+00 : f32
    %98 = vector.broadcast %cst_24 : f32 to vector<8x4x16xf32>
    %99 = arith.addf %98, %97 : vector<8x4x16xf32>
    %100 = arith.divf %98, %99 : vector<8x4x16xf32>
    %101 = arith.mulf %92, %72 : vector<8x4x16xf32>
    %102 = arith.mulf %86, %94 : vector<8x4x16xf32>
    %103 = arith.addf %101, %102 : vector<8x4x16xf32>
    %104 = math.tanh %103 : vector<8x4x16xf32>
    %105 = arith.mulf %100, %104 : vector<8x4x16xf32>
    %106 = vector.extract_strided_slice %3 {offsets = [0, 0, 3], sizes = [8, 4, 1], strides = [1, 1, 1]} : vector<8x4x8xf32> to vector<8x4x1xf32>
    %107 = vector.broadcast %106 : vector<8x4x1xf32> to vector<8x4x64xf32>
    %108 = arith.mulf %107, %7 : vector<8x4x64xf32>
    %109 = arith.addf %108, %10 : vector<8x4x64xf32>
    "tpu.trace_start"() <{level = 10 : i32, message = "gbh,ghk->gbk"}> : () -> ()
    %cst_25 = arith.constant dense<0.000000e+00> : vector<8x4x64xf32>
    %110 = tpu.matmul %105, %4, %cst_25 {dimension_numbers = #tpu.dot_dimension_numbers<[2], [1], [1], [2], [0, 0, 0, 1, 1, 2], [0], [0]>} : vector<8x4x16xf32>, vector<8x16x64xf32>, vector<8x4x64xf32> -> vector<8x4x64xf32>
    "tpu.trace_stop"() : () -> ()
    %111 = arith.addf %109, %110 : vector<8x4x64xf32>
    %112 = vector.extract_strided_slice %111 {offsets = [0, 0, 0], sizes = [8, 4, 16], strides = [1, 1, 1]} : vector<8x4x64xf32> to vector<8x4x16xf32>
    %113 = arith.negf %112 : vector<8x4x16xf32>
    %114 = math.exp %113 : vector<8x4x16xf32>
    %cst_26 = arith.constant 1.000000e+00 : f32
    %115 = vector.broadcast %cst_26 : f32 to vector<8x4x16xf32>
    %116 = arith.addf %115, %114 : vector<8x4x16xf32>
    %117 = arith.divf %115, %116 : vector<8x4x16xf32>
    %118 = vector.extract_strided_slice %111 {offsets = [0, 0, 16], sizes = [8, 4, 16], strides = [1, 1, 1]} : vector<8x4x64xf32> to vector<8x4x16xf32>
    %119 = arith.negf %118 : vector<8x4x16xf32>
    %120 = math.exp %119 : vector<8x4x16xf32>
    %cst_27 = arith.constant 1.000000e+00 : f32
    %121 = vector.broadcast %cst_27 : f32 to vector<8x4x16xf32>
    %122 = arith.addf %121, %120 : vector<8x4x16xf32>
    %123 = arith.divf %121, %122 : vector<8x4x16xf32>
    %124 = vector.extract_strided_slice %111 {offsets = [0, 0, 32], sizes = [8, 4, 16], strides = [1, 1, 1]} : vector<8x4x64xf32> to vector<8x4x16xf32>
    %125 = math.tanh %124 : vector<8x4x16xf32>
    %126 = vector.extract_strided_slice %111 {offsets = [0, 0, 48], sizes = [8, 4, 16], strides = [1, 1, 1]} : vector<8x4x64xf32> to vector<8x4x16xf32>
    %127 = arith.negf %126 : vector<8x4x16xf32>
    %128 = math.exp %127 : vector<8x4x16xf32>
    %cst_28 = arith.constant 1.000000e+00 : f32
    %129 = vector.broadcast %cst_28 : f32 to vector<8x4x16xf32>
    %130 = arith.addf %129, %128 : vector<8x4x16xf32>
    %131 = arith.divf %129, %130 : vector<8x4x16xf32>
    %132 = arith.mulf %123, %103 : vector<8x4x16xf32>
    %133 = arith.mulf %117, %125 : vector<8x4x16xf32>
    %134 = arith.addf %132, %133 : vector<8x4x16xf32>
    %135 = math.tanh %134 : vector<8x4x16xf32>
    %136 = arith.mulf %131, %135 : vector<8x4x16xf32>
    %137 = vector.extract_strided_slice %3 {offsets = [0, 0, 4], sizes = [8, 4, 1], strides = [1, 1, 1]} : vector<8x4x8xf32> to vector<8x4x1xf32>
    %138 = vector.broadcast %137 : vector<8x4x1xf32> to vector<8x4x64xf32>
    %139 = arith.mulf %138, %7 : vector<8x4x64xf32>
    %140 = arith.addf %139, %10 : vector<8x4x64xf32>
    "tpu.trace_start"() <{level = 10 : i32, message = "gbh,ghk->gbk"}> : () -> ()
    %cst_29 = arith.constant dense<0.000000e+00> : vector<8x4x64xf32>
    %141 = tpu.matmul %136, %4, %cst_29 {dimension_numbers = #tpu.dot_dimension_numbers<[2], [1], [1], [2], [0, 0, 0, 1, 1, 2], [0], [0]>} : vector<8x4x16xf32>, vector<8x16x64xf32>, vector<8x4x64xf32> -> vector<8x4x64xf32>
    "tpu.trace_stop"() : () -> ()
    %142 = arith.addf %140, %141 : vector<8x4x64xf32>
    %143 = vector.extract_strided_slice %142 {offsets = [0, 0, 0], sizes = [8, 4, 16], strides = [1, 1, 1]} : vector<8x4x64xf32> to vector<8x4x16xf32>
    %144 = arith.negf %143 : vector<8x4x16xf32>
    %145 = math.exp %144 : vector<8x4x16xf32>
    %cst_30 = arith.constant 1.000000e+00 : f32
    %146 = vector.broadcast %cst_30 : f32 to vector<8x4x16xf32>
    %147 = arith.addf %146, %145 : vector<8x4x16xf32>
    %148 = arith.divf %146, %147 : vector<8x4x16xf32>
    %149 = vector.extract_strided_slice %142 {offsets = [0, 0, 16], sizes = [8, 4, 16], strides = [1, 1, 1]} : vector<8x4x64xf32> to vector<8x4x16xf32>
    %150 = arith.negf %149 : vector<8x4x16xf32>
    %151 = math.exp %150 : vector<8x4x16xf32>
    %cst_31 = arith.constant 1.000000e+00 : f32
    %152 = vector.broadcast %cst_31 : f32 to vector<8x4x16xf32>
    %153 = arith.addf %152, %151 : vector<8x4x16xf32>
    %154 = arith.divf %152, %153 : vector<8x4x16xf32>
    %155 = vector.extract_strided_slice %142 {offsets = [0, 0, 32], sizes = [8, 4, 16], strides = [1, 1, 1]} : vector<8x4x64xf32> to vector<8x4x16xf32>
    %156 = math.tanh %155 : vector<8x4x16xf32>
    %157 = vector.extract_strided_slice %142 {offsets = [0, 0, 48], sizes = [8, 4, 16], strides = [1, 1, 1]} : vector<8x4x64xf32> to vector<8x4x16xf32>
    %158 = arith.negf %157 : vector<8x4x16xf32>
    %159 = math.exp %158 : vector<8x4x16xf32>
    %cst_32 = arith.constant 1.000000e+00 : f32
    %160 = vector.broadcast %cst_32 : f32 to vector<8x4x16xf32>
    %161 = arith.addf %160, %159 : vector<8x4x16xf32>
    %162 = arith.divf %160, %161 : vector<8x4x16xf32>
    %163 = arith.mulf %154, %134 : vector<8x4x16xf32>
    %164 = arith.mulf %148, %156 : vector<8x4x16xf32>
    %165 = arith.addf %163, %164 : vector<8x4x16xf32>
    %166 = math.tanh %165 : vector<8x4x16xf32>
    %167 = arith.mulf %162, %166 : vector<8x4x16xf32>
    %168 = vector.extract_strided_slice %3 {offsets = [0, 0, 5], sizes = [8, 4, 1], strides = [1, 1, 1]} : vector<8x4x8xf32> to vector<8x4x1xf32>
    %169 = vector.broadcast %168 : vector<8x4x1xf32> to vector<8x4x64xf32>
    %170 = arith.mulf %169, %7 : vector<8x4x64xf32>
    %171 = arith.addf %170, %10 : vector<8x4x64xf32>
    "tpu.trace_start"() <{level = 10 : i32, message = "gbh,ghk->gbk"}> : () -> ()
    %cst_33 = arith.constant dense<0.000000e+00> : vector<8x4x64xf32>
    %172 = tpu.matmul %167, %4, %cst_33 {dimension_numbers = #tpu.dot_dimension_numbers<[2], [1], [1], [2], [0, 0, 0, 1, 1, 2], [0], [0]>} : vector<8x4x16xf32>, vector<8x16x64xf32>, vector<8x4x64xf32> -> vector<8x4x64xf32>
    "tpu.trace_stop"() : () -> ()
    %173 = arith.addf %171, %172 : vector<8x4x64xf32>
    %174 = vector.extract_strided_slice %173 {offsets = [0, 0, 0], sizes = [8, 4, 16], strides = [1, 1, 1]} : vector<8x4x64xf32> to vector<8x4x16xf32>
    %175 = arith.negf %174 : vector<8x4x16xf32>
    %176 = math.exp %175 : vector<8x4x16xf32>
    %cst_34 = arith.constant 1.000000e+00 : f32
    %177 = vector.broadcast %cst_34 : f32 to vector<8x4x16xf32>
    %178 = arith.addf %177, %176 : vector<8x4x16xf32>
    %179 = arith.divf %177, %178 : vector<8x4x16xf32>
    %180 = vector.extract_strided_slice %173 {offsets = [0, 0, 16], sizes = [8, 4, 16], strides = [1, 1, 1]} : vector<8x4x64xf32> to vector<8x4x16xf32>
    %181 = arith.negf %180 : vector<8x4x16xf32>
    %182 = math.exp %181 : vector<8x4x16xf32>
    %cst_35 = arith.constant 1.000000e+00 : f32
    %183 = vector.broadcast %cst_35 : f32 to vector<8x4x16xf32>
    %184 = arith.addf %183, %182 : vector<8x4x16xf32>
    %185 = arith.divf %183, %184 : vector<8x4x16xf32>
    %186 = vector.extract_strided_slice %173 {offsets = [0, 0, 32], sizes = [8, 4, 16], strides = [1, 1, 1]} : vector<8x4x64xf32> to vector<8x4x16xf32>
    %187 = math.tanh %186 : vector<8x4x16xf32>
    %188 = vector.extract_strided_slice %173 {offsets = [0, 0, 48], sizes = [8, 4, 16], strides = [1, 1, 1]} : vector<8x4x64xf32> to vector<8x4x16xf32>
    %189 = arith.negf %188 : vector<8x4x16xf32>
    %190 = math.exp %189 : vector<8x4x16xf32>
    %cst_36 = arith.constant 1.000000e+00 : f32
    %191 = vector.broadcast %cst_36 : f32 to vector<8x4x16xf32>
    %192 = arith.addf %191, %190 : vector<8x4x16xf32>
    %193 = arith.divf %191, %192 : vector<8x4x16xf32>
    %194 = arith.mulf %185, %165 : vector<8x4x16xf32>
    %195 = arith.mulf %179, %187 : vector<8x4x16xf32>
    %196 = arith.addf %194, %195 : vector<8x4x16xf32>
    %197 = math.tanh %196 : vector<8x4x16xf32>
    %198 = arith.mulf %193, %197 : vector<8x4x16xf32>
    %199 = vector.extract_strided_slice %3 {offsets = [0, 0, 6], sizes = [8, 4, 1], strides = [1, 1, 1]} : vector<8x4x8xf32> to vector<8x4x1xf32>
    %200 = vector.broadcast %199 : vector<8x4x1xf32> to vector<8x4x64xf32>
    %201 = arith.mulf %200, %7 : vector<8x4x64xf32>
    %202 = arith.addf %201, %10 : vector<8x4x64xf32>
    "tpu.trace_start"() <{level = 10 : i32, message = "gbh,ghk->gbk"}> : () -> ()
    %cst_37 = arith.constant dense<0.000000e+00> : vector<8x4x64xf32>
    %203 = tpu.matmul %198, %4, %cst_37 {dimension_numbers = #tpu.dot_dimension_numbers<[2], [1], [1], [2], [0, 0, 0, 1, 1, 2], [0], [0]>} : vector<8x4x16xf32>, vector<8x16x64xf32>, vector<8x4x64xf32> -> vector<8x4x64xf32>
    "tpu.trace_stop"() : () -> ()
    %204 = arith.addf %202, %203 : vector<8x4x64xf32>
    %205 = vector.extract_strided_slice %204 {offsets = [0, 0, 0], sizes = [8, 4, 16], strides = [1, 1, 1]} : vector<8x4x64xf32> to vector<8x4x16xf32>
    %206 = arith.negf %205 : vector<8x4x16xf32>
    %207 = math.exp %206 : vector<8x4x16xf32>
    %cst_38 = arith.constant 1.000000e+00 : f32
    %208 = vector.broadcast %cst_38 : f32 to vector<8x4x16xf32>
    %209 = arith.addf %208, %207 : vector<8x4x16xf32>
    %210 = arith.divf %208, %209 : vector<8x4x16xf32>
    %211 = vector.extract_strided_slice %204 {offsets = [0, 0, 16], sizes = [8, 4, 16], strides = [1, 1, 1]} : vector<8x4x64xf32> to vector<8x4x16xf32>
    %212 = arith.negf %211 : vector<8x4x16xf32>
    %213 = math.exp %212 : vector<8x4x16xf32>
    %cst_39 = arith.constant 1.000000e+00 : f32
    %214 = vector.broadcast %cst_39 : f32 to vector<8x4x16xf32>
    %215 = arith.addf %214, %213 : vector<8x4x16xf32>
    %216 = arith.divf %214, %215 : vector<8x4x16xf32>
    %217 = vector.extract_strided_slice %204 {offsets = [0, 0, 32], sizes = [8, 4, 16], strides = [1, 1, 1]} : vector<8x4x64xf32> to vector<8x4x16xf32>
    %218 = math.tanh %217 : vector<8x4x16xf32>
    %219 = vector.extract_strided_slice %204 {offsets = [0, 0, 48], sizes = [8, 4, 16], strides = [1, 1, 1]} : vector<8x4x64xf32> to vector<8x4x16xf32>
    %220 = arith.negf %219 : vector<8x4x16xf32>
    %221 = math.exp %220 : vector<8x4x16xf32>
    %cst_40 = arith.constant 1.000000e+00 : f32
    %222 = vector.broadcast %cst_40 : f32 to vector<8x4x16xf32>
    %223 = arith.addf %222, %221 : vector<8x4x16xf32>
    %224 = arith.divf %222, %223 : vector<8x4x16xf32>
    %225 = arith.mulf %216, %196 : vector<8x4x16xf32>
    %226 = arith.mulf %210, %218 : vector<8x4x16xf32>
    %227 = arith.addf %225, %226 : vector<8x4x16xf32>
    %228 = math.tanh %227 : vector<8x4x16xf32>
    %229 = arith.mulf %224, %228 : vector<8x4x16xf32>
    %230 = vector.extract_strided_slice %3 {offsets = [0, 0, 7], sizes = [8, 4, 1], strides = [1, 1, 1]} : vector<8x4x8xf32> to vector<8x4x1xf32>
    %231 = vector.broadcast %230 : vector<8x4x1xf32> to vector<8x4x64xf32>
    %232 = arith.mulf %231, %7 : vector<8x4x64xf32>
    %233 = arith.addf %232, %10 : vector<8x4x64xf32>
    "tpu.trace_start"() <{level = 10 : i32, message = "gbh,ghk->gbk"}> : () -> ()
    %cst_41 = arith.constant dense<0.000000e+00> : vector<8x4x64xf32>
    %234 = tpu.matmul %229, %4, %cst_41 {dimension_numbers = #tpu.dot_dimension_numbers<[2], [1], [1], [2], [0, 0, 0, 1, 1, 2], [0], [0]>} : vector<8x4x16xf32>, vector<8x16x64xf32>, vector<8x4x64xf32> -> vector<8x4x64xf32>
    "tpu.trace_stop"() : () -> ()
    %235 = arith.addf %233, %234 : vector<8x4x64xf32>
    %236 = vector.extract_strided_slice %235 {offsets = [0, 0, 0], sizes = [8, 4, 16], strides = [1, 1, 1]} : vector<8x4x64xf32> to vector<8x4x16xf32>
    %237 = arith.negf %236 : vector<8x4x16xf32>
    %238 = math.exp %237 : vector<8x4x16xf32>
    %cst_42 = arith.constant 1.000000e+00 : f32
    %239 = vector.broadcast %cst_42 : f32 to vector<8x4x16xf32>
    %240 = arith.addf %239, %238 : vector<8x4x16xf32>
    %241 = arith.divf %239, %240 : vector<8x4x16xf32>
    %242 = vector.extract_strided_slice %235 {offsets = [0, 0, 16], sizes = [8, 4, 16], strides = [1, 1, 1]} : vector<8x4x64xf32> to vector<8x4x16xf32>
    %243 = arith.negf %242 : vector<8x4x16xf32>
    %244 = math.exp %243 : vector<8x4x16xf32>
    %cst_43 = arith.constant 1.000000e+00 : f32
    %245 = vector.broadcast %cst_43 : f32 to vector<8x4x16xf32>
    %246 = arith.addf %245, %244 : vector<8x4x16xf32>
    %247 = arith.divf %245, %246 : vector<8x4x16xf32>
    %248 = vector.extract_strided_slice %235 {offsets = [0, 0, 32], sizes = [8, 4, 16], strides = [1, 1, 1]} : vector<8x4x64xf32> to vector<8x4x16xf32>
    %249 = math.tanh %248 : vector<8x4x16xf32>
    %250 = vector.extract_strided_slice %235 {offsets = [0, 0, 48], sizes = [8, 4, 16], strides = [1, 1, 1]} : vector<8x4x64xf32> to vector<8x4x16xf32>
    %251 = arith.negf %250 : vector<8x4x16xf32>
    %252 = math.exp %251 : vector<8x4x16xf32>
    %cst_44 = arith.constant 1.000000e+00 : f32
    %253 = vector.broadcast %cst_44 : f32 to vector<8x4x16xf32>
    %254 = arith.addf %253, %252 : vector<8x4x16xf32>
    %255 = arith.divf %253, %254 : vector<8x4x16xf32>
    %256 = arith.mulf %247, %227 : vector<8x4x16xf32>
    %257 = arith.mulf %241, %249 : vector<8x4x16xf32>
    %258 = arith.addf %256, %257 : vector<8x4x16xf32>
    %259 = math.tanh %258 : vector<8x4x16xf32>
    %260 = arith.mulf %255, %259 : vector<8x4x16xf32>
    %c0_45 = arith.constant 0 : index
    %c0_46 = arith.constant 0 : index
    %c0_47 = arith.constant 0 : index
    %261 = vector.load %arg5[%c0_45, %c0_46, %c0_47] : memref<8x16x8xf32, #tpu.memory_space<vmem>>, vector<8x16x8xf32>
    "tpu.trace_start"() <{level = 10 : i32, message = "gbh,ghl->gbl"}> : () -> ()
    %cst_48 = arith.constant dense<0.000000e+00> : vector<8x4x8xf32>
    %262 = tpu.matmul %260, %261, %cst_48 {dimension_numbers = #tpu.dot_dimension_numbers<[2], [1], [1], [2], [0, 0, 0, 1, 1, 2], [0], [0]>} : vector<8x4x16xf32>, vector<8x16x8xf32>, vector<8x4x8xf32> -> vector<8x4x8xf32>
    "tpu.trace_stop"() : () -> ()
    %c0_49 = arith.constant 0 : index
    %c0_50 = arith.constant 0 : index
    %c0_51 = arith.constant 0 : index
    %263 = vector.load %arg6[%c0_49, %c0_50, %c0_51] : memref<8x1x8xf32, #tpu.memory_space<vmem>>, vector<8x1x8xf32>
    %264 = vector.broadcast %263 : vector<8x1x8xf32> to vector<8x4x8xf32>
    %265 = arith.addf %262, %264 : vector<8x4x8xf32>
    %c0_52 = arith.constant 0 : index
    %c0_53 = arith.constant 0 : index
    %c0_54 = arith.constant 0 : index
    %266 = vector.load %arg7[%c0_52, %c0_53, %c0_54] : memref<8x16x8xf32, #tpu.memory_space<vmem>>, vector<8x16x8xf32>
    "tpu.trace_start"() <{level = 10 : i32, message = "gbh,ghl->gbl"}> : () -> ()
    %cst_55 = arith.constant dense<0.000000e+00> : vector<8x4x8xf32>
    %267 = tpu.matmul %260, %266, %cst_55 {dimension_numbers = #tpu.dot_dimension_numbers<[2], [1], [1], [2], [0, 0, 0, 1, 1, 2], [0], [0]>} : vector<8x4x16xf32>, vector<8x16x8xf32>, vector<8x4x8xf32> -> vector<8x4x8xf32>
    "tpu.trace_stop"() : () -> ()
    %c0_56 = arith.constant 0 : index
    %c0_57 = arith.constant 0 : index
    %c0_58 = arith.constant 0 : index
    %268 = vector.load %arg8[%c0_56, %c0_57, %c0_58] : memref<8x1x8xf32, #tpu.memory_space<vmem>>, vector<8x1x8xf32>
    %269 = vector.broadcast %268 : vector<8x1x8xf32> to vector<8x4x8xf32>
    %270 = arith.addf %267, %269 : vector<8x4x8xf32>
    %cst_59 = arith.constant 5.000000e-01 : f32
    %271 = vector.broadcast %cst_59 : f32 to vector<8x4x8xf32>
    %272 = arith.mulf %271, %270 : vector<8x4x8xf32>
    %273 = math.exp %272 : vector<8x4x8xf32>
    %c0_60 = arith.constant 0 : index
    %c0_61 = arith.constant 0 : index
    %c0_62 = arith.constant 0 : index
    %274 = vector.load %arg9[%c0_60, %c0_61, %c0_62] : memref<8x4x8xf32, #tpu.memory_space<vmem>>, vector<8x4x8xf32>
    %275 = arith.mulf %273, %274 : vector<8x4x8xf32>
    %276 = arith.addf %265, %275 : vector<8x4x8xf32>
    %c0_63 = arith.constant 0 : index
    %c0_64 = arith.constant 0 : index
    %277 = vector.load %arg10[%c0_63, %c0_64] : memref<4x8xf32, #tpu.memory_space<vmem>>, vector<4x8xf32>
    %cst_65 = arith.constant dense<0.000000e+00> : vector<4x8xf32>
    %278 = vector.multi_reduction <add>, %276, %cst_65 [0] : vector<8x4x8xf32> to vector<4x8xf32>
    %279 = arith.addf %277, %278 : vector<4x8xf32>
    %c0_66 = arith.constant 0 : index
    %c0_67 = arith.constant 0 : index
    %280 = vector.load %arg10[%c0_66, %c0_67] : memref<4x8xf32, #tpu.memory_space<vmem>>, vector<4x8xf32>
    tpu.vector_store %arg10[%c0_66, %c0_67], %279 {strides = array<i32>} : memref<4x8xf32, #tpu.memory_space<vmem>>, vector<4x8xf32>,
    %c0_68 = arith.constant 0 : index
    %c0_69 = arith.constant 0 : index
    %281 = vector.load %arg11[%c0_68, %c0_69] : memref<4x8xf32, #tpu.memory_space<vmem>>, vector<4x8xf32>
    %cst_70 = arith.constant dense<0.000000e+00> : vector<4x8xf32>
    %282 = vector.multi_reduction <add>, %265, %cst_70 [0] : vector<8x4x8xf32> to vector<4x8xf32>
    %283 = arith.addf %281, %282 : vector<4x8xf32>
    %c0_71 = arith.constant 0 : index
    %c0_72 = arith.constant 0 : index
    %284 = vector.load %arg11[%c0_71, %c0_72] : memref<4x8xf32, #tpu.memory_space<vmem>>, vector<4x8xf32>
    tpu.vector_store %arg11[%c0_71, %c0_72], %283 {strides = array<i32>} : memref<4x8xf32, #tpu.memory_space<vmem>>, vector<4x8xf32>,
    %c0_73 = arith.constant 0 : index
    %c0_74 = arith.constant 0 : index
    %285 = vector.load %arg12[%c0_73, %c0_74] : memref<4x8xf32, #tpu.memory_space<vmem>>, vector<4x8xf32>
    %cst_75 = arith.constant dense<0.000000e+00> : vector<4x8xf32>
    %286 = vector.multi_reduction <add>, %270, %cst_75 [0] : vector<8x4x8xf32> to vector<4x8xf32>
    %287 = arith.addf %285, %286 : vector<4x8xf32>
    %c0_76 = arith.constant 0 : index
    %c0_77 = arith.constant 0 : index
    %288 = vector.load %arg12[%c0_76, %c0_77] : memref<4x8xf32, #tpu.memory_space<vmem>>, vector<4x8xf32>
    tpu.vector_store %arg12[%c0_76, %c0_77], %287 {strides = array<i32>} : memref<4x8xf32, #tpu.memory_space<vmem>>, vector<4x8xf32>,
    %c8_i32 = arith.constant 8 : i32
    %289 = arith.cmpi eq, %arg0, %c8_i32 : i32
    %290 = arith.extui %289 : i1 to i32
    %c0_i32_78 = arith.constant 0 : i32
    %291 = arith.cmpi ne, %290, %c0_i32_78 : i32
    scf.if %291 {
      %c0_79 = arith.constant 0 : index
      %c0_80 = arith.constant 0 : index
      %292 = vector.load %arg11[%c0_79, %c0_80] : memref<4x8xf32, #tpu.memory_space<vmem>>, vector<4x8xf32>
      %c0_81 = arith.constant 0 : index
      %c0_82 = arith.constant 0 : index
      %293 = vector.load %arg12[%c0_81, %c0_82] : memref<4x8xf32, #tpu.memory_space<vmem>>, vector<4x8xf32>
      %cst_83 = arith.constant 1.000000e+00 : f32
      %294 = vector.broadcast %cst_83 : f32 to vector<4x8xf32>
      %295 = arith.addf %294, %293 : vector<4x8xf32>
      %296 = arith.mulf %292, %292 : vector<4x8xf32>
      %297 = arith.subf %295, %296 : vector<4x8xf32>
      %298 = math.exp %293 : vector<4x8xf32>
      %299 = arith.subf %297, %298 : vector<4x8xf32>
      %cst_84 = arith.constant dense<0.000000e+00> : vector<4xf32>
      %300 = vector.multi_reduction <add>, %299, %cst_84 [1] : vector<4x8xf32> to vector<4xf32>
      %301 = vector.shape_cast %300 : vector<4xf32> to vector<4x1xf32>
      %cst_85 = arith.constant -5.000000e-01 : f32
      %302 = vector.broadcast %cst_85 : f32 to vector<4x1xf32>
      %303 = arith.mulf %302, %301 : vector<4x1xf32>
      %cst_86 = arith.constant dense<0.000000e+00> : vector<1xf32>
      %304 = vector.multi_reduction <add>, %303, %cst_86 [0] : vector<4x1xf32> to vector<1xf32>
      %305 = vector.shape_cast %304 : vector<1xf32> to vector<1x1xf32>
      %cst_87 = arith.constant 4.000000e+00 : f32
      %306 = vector.broadcast %cst_87 : f32 to vector<1x1xf32>
      %307 = arith.divf %305, %306 : vector<1x1xf32>
      %c0_88 = arith.constant 0 : index
      %c0_89 = arith.constant 0 : index
      %308 = vector.load %arg13[%c0_88, %c0_89] : memref<1x1xf32, #tpu.memory_space<vmem>>, vector<1x1xf32>
      tpu.vector_store %arg13[%c0_88, %c0_89], %307 {strides = array<i32>} : memref<1x1xf32, #tpu.memory_space<vmem>>, vector<1x1xf32>,
    } else {
    }
    return
  }
  func.func @transform_0(%arg0: i32) -> (i32, i32, i32) {
    %c0_i32 = arith.constant 0 : i32
    %c0_i32_0 = arith.constant 0 : i32
    %c0_i32_1 = arith.constant 0 : i32
    return %arg0, %c0_i32, %c0_i32_0 : i32, i32, i32
  }
  func.func @transform_1(%arg0: i32) -> (i32, i32, i32) {
    %c0_i32 = arith.constant 0 : i32
    %c0_i32_0 = arith.constant 0 : i32
    %c0_i32_1 = arith.constant 0 : i32
    return %arg0, %c0_i32, %c0_i32_0 : i32, i32, i32
  }
  func.func @transform_2(%arg0: i32) -> (i32, i32, i32) {
    %c0_i32 = arith.constant 0 : i32
    %c0_i32_0 = arith.constant 0 : i32
    %c0_i32_1 = arith.constant 0 : i32
    return %arg0, %c0_i32, %c0_i32_0 : i32, i32, i32
  }
  func.func @transform_3(%arg0: i32) -> (i32, i32, i32) {
    %c0_i32 = arith.constant 0 : i32
    %c0_i32_0 = arith.constant 0 : i32
    %c0_i32_1 = arith.constant 0 : i32
    return %arg0, %c0_i32, %c0_i32_0 : i32, i32, i32
  }
  func.func @transform_4(%arg0: i32) -> (i32, i32, i32) {
    %c0_i32 = arith.constant 0 : i32
    %c0_i32_0 = arith.constant 0 : i32
    %c0_i32_1 = arith.constant 0 : i32
    return %arg0, %c0_i32, %c0_i32_0 : i32, i32, i32
  }
  func.func @transform_5(%arg0: i32) -> (i32, i32, i32) {
    %c0_i32 = arith.constant 0 : i32
    %c0_i32_0 = arith.constant 0 : i32
    %c0_i32_1 = arith.constant 0 : i32
    return %arg0, %c0_i32, %c0_i32_0 : i32, i32, i32
  }
  func.func @transform_6(%arg0: i32) -> (i32, i32, i32) {
    %c0_i32 = arith.constant 0 : i32
    %c0_i32_0 = arith.constant 0 : i32
    %c0_i32_1 = arith.constant 0 : i32
    return %arg0, %c0_i32, %c0_i32_0 : i32, i32, i32
  }
  func.func @transform_7(%arg0: i32) -> (i32, i32, i32) {
    %c0_i32 = arith.constant 0 : i32
    %c0_i32_0 = arith.constant 0 : i32
    %c0_i32_1 = arith.constant 0 : i32
    return %arg0, %c0_i32, %c0_i32_0 : i32, i32, i32
  }
  func.func @transform_8(%arg0: i32) -> (i32, i32, i32) {
    %c0_i32 = arith.constant 0 : i32
    %c0_i32_0 = arith.constant 0 : i32
    %c0_i32_1 = arith.constant 0 : i32
    return %arg0, %c0_i32, %c0_i32_0 : i32, i32, i32
  }
  func.func @transform_9(%arg0: i32) -> (i32, i32) {
    %c0_i32 = arith.constant 0 : i32
    %c0_i32_0 = arith.constant 0 : i32
    %c0_i32_1 = arith.constant 0 : i32
    return %c0_i32, %c0_i32_0 : i32, i32
  }
  func.func @transform_10(%arg0: i32) -> (i32, i32) {
    %c0_i32 = arith.constant 0 : i32
    %c0_i32_0 = arith.constant 0 : i32
    %c0_i32_1 = arith.constant 0 : i32
    return %c0_i32, %c0_i32_0 : i32, i32
  }
  func.func @transform_11(%arg0: i32) -> (i32, i32) {
    %c0_i32 = arith.constant 0 : i32
    %c0_i32_0 = arith.constant 0 : i32
    %c0_i32_1 = arith.constant 0 : i32
    return %c0_i32, %c0_i32_0 : i32, i32
  }
  func.func @transform_12(%arg0: i32) -> (i32, i32) {
    %c0_i32 = arith.constant 0 : i32
    %c0_i32_0 = arith.constant 0 : i32
    %c0_i32_1 = arith.constant 0 : i32
    return %c0_i32, %c0_i32_0 : i32, i32
  }
}

</mosaic_0001>

<llo_original>
// kernel: tpu_custom_call.1
$region0: #{tpu_custom_call.1}
  #allocation0 [shape = 'u32[]', space=smem, size = 0x4, offset = 0x4, fixed_abs, tag = 'smem constant byte address 0x4 - core index']
  #allocation1 [shape = 'u32[72,128]{1,0:T(1,128)}', space=vmem, size = 0x9000, scoped, tag = 'internal scratch']
  %s0 = inlined_call_operand.vmem [shape: f32[72,4,8], index: 0, kind: input, shape index: {}]
  %s1 = inlined_call_operand.vmem [shape: f32[72,1,64], index: 1, kind: input, shape index: {}]
  %s2 = inlined_call_operand.vmem [shape: f32[72,16,64], index: 2, kind: input, shape index: {}]
  %s3 = inlined_call_operand.vmem [shape: f32[72,1,64], index: 3, kind: input, shape index: {}]
  %s4 = inlined_call_operand.vmem [shape: f32[72,16,8], index: 4, kind: input, shape index: {}]
  %s5 = inlined_call_operand.vmem [shape: f32[72,1,8], index: 5, kind: input, shape index: {}]
  %s6 = inlined_call_operand.vmem [shape: f32[72,16,8], index: 6, kind: input, shape index: {}]
  %s7 = inlined_call_operand.vmem [shape: f32[72,1,8], index: 7, kind: input, shape index: {}]
  %s8 = inlined_call_operand.vmem [shape: f32[72,4,8], index: 8, kind: input, shape index: {}]
  %s9 = inlined_call_operand.hbm [shape: f32[4,8], index: 9, kind: output, shape index: {0}]
  %s10 = inlined_call_operand.hbm [shape: f32[4,8], index: 10, kind: output, shape index: {1}]
  %s11 = inlined_call_operand.hbm [shape: f32[4,8], index: 11, kind: output, shape index: {2}]
  %s12 = inlined_call_operand.hbm [shape: f32[1,1], index: 12, kind: output, shape index: {3}]
  %13 = xla_tuple %s9, %s10, %s11, %s12
  %s14 = sld [smem:[#allocation0]]
  $region101: #{tpu_custom_call.1} parent=0
    _
  %s16 = ssub.s32 1, %s14
  %s17 = scalar_select 0, %s16, %s14
  $region1: #{tpu_custom_call.1} parent=0
    #allocation2 [shape = 'u8[2048]{0}', space=vmem, size = 0x800, scoped, tag = 'output window, operand 0, single buffered']
    #allocation3 [shape = 's32[2]{0}', space=sflag, size = 0x8, scoped, tag = 'scoped memory for tpu_custom_call.1']
    #allocation4 [shape = 'u8[2048]{0}', space=vmem, size = 0x800, scoped, tag = 'output window, operand 1, single buffered']
    #allocation5 [shape = 's32[1]{0}', space=sflag, size = 0x4, scoped, tag = 'scoped memory for tpu_custom_call.1']
    #allocation6 [shape = 'u8[2048]{0}', space=vmem, size = 0x800, scoped, tag = 'output window, operand 2, single buffered']
    #allocation7 [shape = 'u8[512]{0}', space=vmem, size = 0x400, scoped, tag = 'output window, operand 3, single buffered']
    #allocation8 [shape = 's32[1]{0}', space=sflag, size = 0x4, scoped, tag = 'scoped memory for tpu_custom_call.1']
    %18 = vsyncpa [#allocation3], 0
    %19 = vsyncpa [#allocation5], 0
    %20 = vsyncpa [#allocation8], 0
    loop: start=0, step=1, limit=11
    $region2: #{tpu_custom_call.1} parent=1 // loop_pre_header
      _
    $region3: #{tpu_custom_call.1} parent=1 // loop_header
      %s22 = sphi 0, %s26
      %p23 = scmp.ge.s32.totalorder %s22, 11
      %s32 = sphi 0, %s34
      %s35 = sphi 0, %s32
      %s36 = sphi 0, %s35
      %s52 = sphi 0, %s36
      %s58 = sphi 0, %s60
      %s61 = sphi 0, %s58
      %s62 = sphi 0, %s61
      %s78 = sphi 0, %s62
      %s84 = sphi 0, %s86
      %s87 = sphi 0, %s84
      %s88 = sphi 0, %s87
      %s104 = sphi 0, %s88
      %s110 = sphi 0, %s112
      %s113 = sphi 0, %s110
      %s114 = sphi 0, %s113
      %s130 = sphi 0, %s114
      %s136 = sphi 0, %s138
      %s139 = sphi 0, %s136
      %s140 = sphi 0, %s139
      %s156 = sphi 0, %s140
      %s162 = sphi 0, %s164
      %s165 = sphi 0, %s162
      %s166 = sphi 0, %s165
      %s182 = sphi 0, %s166
      %s188 = sphi 0, %s190
      %s191 = sphi 0, %s188
      %s192 = sphi 0, %s191
      %s208 = sphi 0, %s192
      %s214 = sphi 0, %s216
      %s217 = sphi 0, %s214
      %s218 = sphi 0, %s217
      %s234 = sphi 0, %s218
      %s240 = sphi 0, %s242
      %s243 = sphi 0, %s240
      %s244 = sphi 0, %s243
      %s260 = sphi 0, %s244
      %s264 = sphi 0, %s264
      %s266 = sphi 0, %s264
      %s267 = sphi 0, %s266
      %s281 = sphi 0, %s267
      %s285 = sphi 0, %s285
      %s287 = sphi 0, %s285
      %s288 = sphi 0, %s287
      %s302 = sphi 0, %s288
      %s306 = sphi 0, %s306
      %s308 = sphi 0, %s306
      %s309 = sphi 0, %s308
      %s323 = sphi 0, %s309
      %s327 = sphi 0, %s327
      %s329 = sphi 0, %s327
      %s330 = sphi 0, %s329
      %s344 = sphi 0, %s330
    $region4: #{tpu_custom_call.1} parent=1 // loop_header_branch
      %25 = sbr.rel (%p23) target = $region8
    $region5: #{tpu_custom_call.1} parent=1 // loop_body
      %s27 = ssub.s32 %s22, 1
      %s28 = ssub.s32 %s22, 2
      %s29 = sadd.s32 %s22, 1
      %s30 = ssub.s32 %s22, %s29
      %p31 = scmp.eq.s32.totalorder %s30, 0
      %s33 = sadd.s32 %s32, 1
      %s34 = scalar_select %p31, %s32, %s33
      %p37 = pneg %p31
      %p38 = scmp.eq.s32.totalorder %s22, 8
      %p39 = por %p37, %p38
      %p40 = scmp.ne.s32.totalorder %s32, %s35
      %p41 = scmp.eq.s32.totalorder %s22, 0
      %p42 = por %p40, %p41
      %p43 = scmp.ne.s32.totalorder %s32, %s35
      %p44 = scmp.eq.s32.totalorder %s27, 8
      %p45 = por %p43, %p44
      %p46 = scmp.ne.s32.totalorder %s35, %s36
      %p47 = scmp.eq.s32.totalorder %s27, 0
      %p48 = por %p46, %p47
      %p49 = scmp.ne.s32.totalorder %s35, %s36
      %p50 = scmp.eq.s32.totalorder %s28, 8
      %p51 = por %p49, %p50
      %p53 = scmp.ne.s32.totalorder %s36, %s52
      %p54 = scmp.eq.s32.totalorder %s28, 0
      %p55 = por %p53, %p54
      %s56 = ssub.s32 %s22, %s29
      %p57 = scmp.eq.s32.totalorder %s56, 0
      %s59 = sadd.s32 %s58, 1
      %s60 = scalar_select %p57, %s58, %s59
      %p63 = pneg %p57
      %p64 = scmp.eq.s32.totalorder %s22, 8
      %p65 = por %p63, %p64
      %p66 = scmp.ne.s32.totalorder %s58, %s61
      %p67 = scmp.eq.s32.totalorder %s22, 0
      %p68 = por %p66, %p67
      %p69 = scmp.ne.s32.totalorder %s58, %s61
      %p70 = scmp.eq.s32.totalorder %s27, 8
      %p71 = por %p69, %p70
      %p72 = scmp.ne.s32.totalorder %s61, %s62
      %p73 = scmp.eq.s32.totalorder %s27, 0
      %p74 = por %p72, %p73
      %p75 = scmp.ne.s32.totalorder %s61, %s62
      %p76 = scmp.eq.s32.totalorder %s28, 8
      %p77 = por %p75, %p76
      %p79 = scmp.ne.s32.totalorder %s62, %s78
      %p80 = scmp.eq.s32.totalorder %s28, 0
      %p81 = por %p79, %p80
      %s82 = ssub.s32 %s22, %s29
      %p83 = scmp.eq.s32.totalorder %s82, 0
      %s85 = sadd.s32 %s84, 1
      %s86 = scalar_select %p83, %s84, %s85
      %p89 = pneg %p83
      %p90 = scmp.eq.s32.totalorder %s22, 8
      %p91 = por %p89, %p90
      %p92 = scmp.ne.s32.totalorder %s84, %s87
      %p93 = scmp.eq.s32.totalorder %s22, 0
      %p94 = por %p92, %p93
      %p95 = scmp.ne.s32.totalorder %s84, %s87
      %p96 = scmp.eq.s32.totalorder %s27, 8
      %p97 = por %p95, %p96
      %p98 = scmp.ne.s32.totalorder %s87, %s88
      %p99 = scmp.eq.s32.totalorder %s27, 0
      %p100 = por %p98, %p99
      %p101 = scmp.ne.s32.totalorder %s87, %s88
      %p102 = scmp.eq.s32.totalorder %s28, 8
      %p103 = por %p101, %p102
      %p105 = scmp.ne.s32.totalorder %s88, %s104
      %p106 = scmp.eq.s32.totalorder %s28, 0
      %p107 = por %p105, %p106
      %s108 = ssub.s32 %s22, %s29
      %p109 = scmp.eq.s32.totalorder %s108, 0
      %s111 = sadd.s32 %s110, 1
      %s112 = scalar_select %p109, %s110, %s111
      %p115 = pneg %p109
      %p116 = scmp.eq.s32.totalorder %s22, 8
      %p117 = por %p115, %p116
      %p118 = scmp.ne.s32.totalorder %s110, %s113
      %p119 = scmp.eq.s32.totalorder %s22, 0
      %p120 = por %p118, %p119
      %p121 = scmp.ne.s32.totalorder %s110, %s113
      %p122 = scmp.eq.s32.totalorder %s27, 8
      %p123 = por %p121, %p122
      %p124 = scmp.ne.s32.totalorder %s113, %s114
      %p125 = scmp.eq.s32.totalorder %s27, 0
      %p126 = por %p124, %p125
      %p127 = scmp.ne.s32.totalorder %s113, %s114
      %p128 = scmp.eq.s32.totalorder %s28, 8
      %p129 = por %p127, %p128
      %p131 = scmp.ne.s32.totalorder %s114, %s130
      %p132 = scmp.eq.s32.totalorder %s28, 0
      %p133 = por %p131, %p132
      %s134 = ssub.s32 %s22, %s29
      %p135 = scmp.eq.s32.totalorder %s134, 0
      %s137 = sadd.s32 %s136, 1
      %s138 = scalar_select %p135, %s136, %s137
      %p141 = pneg %p135
      %p142 = scmp.eq.s32.totalorder %s22, 8
      %p143 = por %p141, %p142
      %p144 = scmp.ne.s32.totalorder %s136, %s139
      %p145 = scmp.eq.s32.totalorder %s22, 0
      %p146 = por %p144, %p145
      %p147 = scmp.ne.s32.totalorder %s136, %s139
      %p148 = scmp.eq.s32.totalorder %s27, 8
      %p149 = por %p147, %p148
      %p150 = scmp.ne.s32.totalorder %s139, %s140
      %p151 = scmp.eq.s32.totalorder %s27, 0
      %p152 = por %p150, %p151
      %p153 = scmp.ne.s32.totalorder %s139, %s140
      %p154 = scmp.eq.s32.totalorder %s28, 8
      %p155 = por %p153, %p154
      %p157 = scmp.ne.s32.totalorder %s140, %s156
      %p158 = scmp.eq.s32.totalorder %s28, 0
      %p159 = por %p157, %p158
      %s160 = ssub.s32 %s22, %s29
      %p161 = scmp.eq.s32.totalorder %s160, 0
      %s163 = sadd.s32 %s162, 1
      %s164 = scalar_select %p161, %s162, %s163
      %p167 = pneg %p161
      %p168 = scmp.eq.s32.totalorder %s22, 8
      %p169 = por %p167, %p168
      %p170 = scmp.ne.s32.totalorder %s162, %s165
      %p171 = scmp.eq.s32.totalorder %s22, 0
      %p172 = por %p170, %p171
      %p173 = scmp.ne.s32.totalorder %s162, %s165
      %p174 = scmp.eq.s32.totalorder %s27, 8
      %p175 = por %p173, %p174
      %p176 = scmp.ne.s32.totalorder %s165, %s166
      %p177 = scmp.eq.s32.totalorder %s27, 0
      %p178 = por %p176, %p177
      %p179 = scmp.ne.s32.totalorder %s165, %s166
      %p180 = scmp.eq.s32.totalorder %s28, 8
      %p181 = por %p179, %p180
      %p183 = scmp.ne.s32.totalorder %s166, %s182
      %p184 = scmp.eq.s32.totalorder %s28, 0
      %p185 = por %p183, %p184
      %s186 = ssub.s32 %s22, %s29
      %p187 = scmp.eq.s32.totalorder %s186, 0
      %s189 = sadd.s32 %s188, 1
      %s190 = scalar_select %p187, %s188, %s189
      %p193 = pneg %p187
      %p194 = scmp.eq.s32.totalorder %s22, 8
      %p195 = por %p193, %p194
      %p196 = scmp.ne.s32.totalorder %s188, %s191
      %p197 = scmp.eq.s32.totalorder %s22, 0
      %p198 = por %p196, %p197
      %p199 = scmp.ne.s32.totalorder %s188, %s191
      %p200 = scmp.eq.s32.totalorder %s27, 8
      %p201 = por %p199, %p200
      %p202 = scmp.ne.s32.totalorder %s191, %s192
      %p203 = scmp.eq.s32.totalorder %s27, 0
      %p204 = por %p202, %p203
      %p205 = scmp.ne.s32.totalorder %s191, %s192
      %p206 = scmp.eq.s32.totalorder %s28, 8
      %p207 = por %p205, %p206
      %p209 = scmp.ne.s32.totalorder %s192, %s208
      %p210 = scmp.eq.s32.totalorder %s28, 0
      %p211 = por %p209, %p210
      %s212 = ssub.s32 %s22, %s29
      %p213 = scmp.eq.s32.totalorder %s212, 0
      %s215 = sadd.s32 %s214, 1
      %s216 = scalar_select %p213, %s214, %s215
      %p219 = pneg %p213
      %p220 = scmp.eq.s32.totalorder %s22, 8
      %p221 = por %p219, %p220
      %p222 = scmp.ne.s32.totalorder %s214, %s217
      %p223 = scmp.eq.s32.totalorder %s22, 0
      %p224 = por %p222, %p223
      %p225 = scmp.ne.s32.totalorder %s214, %s217
      %p226 = scmp.eq.s32.totalorder %s27, 8
      %p227 = por %p225, %p226
      %p228 = scmp.ne.s32.totalorder %s217, %s218
      %p229 = scmp.eq.s32.totalorder %s27, 0
      %p230 = por %p228, %p229
      %p231 = scmp.ne.s32.totalorder %s217, %s218
      %p232 = scmp.eq.s32.totalorder %s28, 8
      %p233 = por %p231, %p232
      %p235 = scmp.ne.s32.totalorder %s218, %s234
      %p236 = scmp.eq.s32.totalorder %s28, 0
      %p237 = por %p235, %p236
      %s238 = ssub.s32 %s22, %s29
      %p239 = scmp.eq.s32.totalorder %s238, 0
      %s241 = sadd.s32 %s240, 1
      %s242 = scalar_select %p239, %s240, %s241
      %p245 = pneg %p239
      %p246 = scmp.eq.s32.totalorder %s22, 8
      %p247 = por %p245, %p246
      %p248 = scmp.ne.s32.totalorder %s240, %s243
      %p249 = scmp.eq.s32.totalorder %s22, 0
      %p250 = por %p248, %p249
      %p251 = scmp.ne.s32.totalorder %s240, %s243
      %p252 = scmp.eq.s32.totalorder %s27, 8
      %p253 = por %p251, %p252
      %p254 = scmp.ne.s32.totalorder %s243, %s244
      %p255 = scmp.eq.s32.totalorder %s27, 0
      %p256 = por %p254, %p255
      %p257 = scmp.ne.s32.totalorder %s243, %s244
      %p258 = scmp.eq.s32.totalorder %s28, 8
      %p259 = por %p257, %p258
      %p261 = scmp.ne.s32.totalorder %s244, %s260
      %p262 = scmp.eq.s32.totalorder %s28, 0
      %p263 = por %p261, %p262
      %s265 = sadd.s32 %s264, 1
      %p268 = scmp.eq.s32.totalorder %s22, 8
      %p269 = scmp.ne.s32.totalorder %s264, %s266
      %p270 = scmp.eq.s32.totalorder %s22, 0
      %p271 = por %p269, %p270
      %p272 = scmp.ne.s32.totalorder %s264, %s266
      %p273 = scmp.eq.s32.totalorder %s27, 8
      %p274 = por %p272, %p273
      %p275 = scmp.ne.s32.totalorder %s266, %s267
      %p276 = scmp.eq.s32.totalorder %s27, 0
      %p277 = por %p275, %p276
      %p278 = scmp.ne.s32.totalorder %s266, %s267
      %p279 = scmp.eq.s32.totalorder %s28, 8
      %p280 = por %p278, %p279
      %p282 = scmp.ne.s32.totalorder %s267, %s281
      %p283 = scmp.eq.s32.totalorder %s28, 0
      %p284 = por %p282, %p283
      %s286 = sadd.s32 %s285, 1
      %p289 = scmp.eq.s32.totalorder %s22, 8
      %p290 = scmp.ne.s32.totalorder %s285, %s287
      %p291 = scmp.eq.s32.totalorder %s22, 0
      %p292 = por %p290, %p291
      %p293 = scmp.ne.s32.totalorder %s285, %s287
      %p294 = scmp.eq.s32.totalorder %s27, 8
      %p295 = por %p293, %p294
      %p296 = scmp.ne.s32.totalorder %s287, %s288
      %p297 = scmp.eq.s32.totalorder %s27, 0
      %p298 = por %p296, %p297
      %p299 = scmp.ne.s32.totalorder %s287, %s288
      %p300 = scmp.eq.s32.totalorder %s28, 8
      %p301 = por %p299, %p300
      %p303 = scmp.ne.s32.totalorder %s288, %s302
      %p304 = scmp.eq.s32.totalorder %s28, 0
      %p305 = por %p303, %p304
      %s307 = sadd.s32 %s306, 1
      %p310 = scmp.eq.s32.totalorder %s22, 8
      %p311 = scmp.ne.s32.totalorder %s306, %s308
      %p312 = scmp.eq.s32.totalorder %s22, 0
      %p313 = por %p311, %p312
      %p314 = scmp.ne.s32.totalorder %s306, %s308
      %p315 = scmp.eq.s32.totalorder %s27, 8
      %p316 = por %p314, %p315
      %p317 = scmp.ne.s32.totalorder %s308, %s309
      %p318 = scmp.eq.s32.totalorder %s27, 0
      %p319 = por %p317, %p318
      %p320 = scmp.ne.s32.totalorder %s308, %s309
      %p321 = scmp.eq.s32.totalorder %s28, 8
      %p322 = por %p320, %p321
      %p324 = scmp.ne.s32.totalorder %s309, %s323
      %p325 = scmp.eq.s32.totalorder %s28, 0
      %p326 = por %p324, %p325
      %s328 = sadd.s32 %s327, 1
      %p331 = scmp.eq.s32.totalorder %s22, 8
      %p332 = scmp.ne.s32.totalorder %s327, %s329
      %p333 = scmp.eq.s32.totalorder %s22, 0
      %p334 = por %p332, %p333
      %p335 = scmp.ne.s32.totalorder %s327, %s329
      %p336 = scmp.eq.s32.totalorder %s27, 8
      %p337 = por %p335, %p336
      %p338 = scmp.ne.s32.totalorder %s329, %s330
      %p339 = scmp.eq.s32.totalorder %s27, 0
      %p340 = por %p338, %p339
      %p341 = scmp.ne.s32.totalorder %s329, %s330
      %p342 = scmp.eq.s32.totalorder %s28, 8
      %p343 = por %p341, %p342
      %p345 = scmp.ne.s32.totalorder %s330, %s344
      %p346 = scmp.eq.s32.totalorder %s28, 0
      %p347 = por %p345, %p346
      %p348 = scmp.le.s32.totalorder 1, %s22
      %p349 = scmp.lt.s32.totalorder %s22, 10
      %p350 = pnand %p348, %p349
      %p351 = pneg %p350
      // Predicated region
      $region9: #{tpu_custom_call.1} parent=5 // pred_check
        _
      $region10: #{tpu_custom_call.1} parent=5 // pred_check_branch
        %353 = sbr.rel (%p350) target = $region12
      $region11: #{tpu_custom_call.1} parent=5 // pred_region
        %s354 = ssub.s32 %s22, 1
      $region12: #{tpu_custom_call.1} parent=5 // pred_fallthru
        _
      %p355 = scmp.lt.s32.totalorder %s22, 9
      // Predicated region
      $region13: #{tpu_custom_call.1} parent=5 // pred_check
        %p356 = pneg %p355
      $region14: #{tpu_custom_call.1} parent=5 // pred_check_branch
        %358 = sbr.rel (%p356) target = $region16
      $region15: #{tpu_custom_call.1} parent=5 // pred_region
        // Predicated region
        $region17: #{tpu_custom_call.1} parent=15 // pred_check
          %p359 = pneg %p42
        $region18: #{tpu_custom_call.1} parent=15 // pred_check_branch
          %361 = sbr.rel (%p359) target = $region20
        $region19: #{tpu_custom_call.1} parent=15 // pred_region
          %s362 = smul.u32 8, %s22
          %p363 = scmp.lt.s32.totalorder %s362, 71
          %s364 = scalar_select %p363, %s362, 71
          %s365 = smul.addr %s364, 4
          %s366 = scalar_lea.vmem %s0, %s365
          %s367 = smul.u32 8, %s22
        $region20: #{tpu_custom_call.1} parent=15 // pred_fallthru
          _
        // Predicated region
        $region21: #{tpu_custom_call.1} parent=15 // pred_check
          %p368 = pneg %p68
        $region22: #{tpu_custom_call.1} parent=15 // pred_check_branch
          %370 = sbr.rel (%p368) target = $region24
        $region23: #{tpu_custom_call.1} parent=15 // pred_region
          %s371 = smul.u32 8, %s22
          %p372 = scmp.lt.s32.totalorder %s371, 71
          %s373 = scalar_select %p372, %s371, 71
          %s374 = scalar_lea.vmem %s1, %s373
          %s375 = smul.u32 8, %s22
        $region24: #{tpu_custom_call.1} parent=15 // pred_fallthru
          _
        // Predicated region
        $region25: #{tpu_custom_call.1} parent=15 // pred_check
          %p376 = pneg %p94
        $region26: #{tpu_custom_call.1} parent=15 // pred_check_branch
          %378 = sbr.rel (%p376) target = $region28
        $region27: #{tpu_custom_call.1} parent=15 // pred_region
          %s379 = smul.u32 8, %s22
          %p380 = scmp.lt.s32.totalorder %s379, 71
          %s381 = scalar_select %p380, %s379, 71
          %s382 = smul.addr %s381, 2
          %s383 = smul.addr %s382, 8
          %s384 = scalar_lea.vmem %s2, %s383
          %s385 = smul.u32 8, %s22
        $region28: #{tpu_custom_call.1} parent=15 // pred_fallthru
          _
        // Predicated region
        $region29: #{tpu_custom_call.1} parent=15 // pred_check
          %p386 = pneg %p120
        $region30: #{tpu_custom_call.1} parent=15 // pred_check_branch
          %388 = sbr.rel (%p386) target = $region32
        $region31: #{tpu_custom_call.1} parent=15 // pred_region
          %s389 = smul.u32 8, %s22
          %p390 = scmp.lt.s32.totalorder %s389, 71
          %s391 = scalar_select %p390, %s389, 71
          %s392 = scalar_lea.vmem %s3, %s391
          %s393 = smul.u32 8, %s22
        $region32: #{tpu_custom_call.1} parent=15 // pred_fallthru
          _
        // Predicated region
        $region33: #{tpu_custom_call.1} parent=15 // pred_check
          %p394 = pneg %p146
        $region34: #{tpu_custom_call.1} parent=15 // pred_check_branch
          %396 = sbr.rel (%p394) target = $region36
        $region35: #{tpu_custom_call.1} parent=15 // pred_region
          %s397 = smul.u32 8, %s22
          %p398 = scmp.lt.s32.totalorder %s397, 71
          %s399 = scalar_select %p398, %s397, 71
          %s400 = smul.addr %s399, 2
          %s401 = smul.addr %s400, 8
          %s402 = scalar_lea.vmem %s4, %s401
          %s403 = smul.u32 8, %s22
        $region36: #{tpu_custom_call.1} parent=15 // pred_fallthru
          _
        // Predicated region
        $region37: #{tpu_custom_call.1} parent=15 // pred_check
          %p404 = pneg %p172
        $region38: #{tpu_custom_call.1} parent=15 // pred_check_branch
          %406 = sbr.rel (%p404) target = $region40
        $region39: #{tpu_custom_call.1} parent=15 // pred_region
          %s407 = smul.u32 8, %s22
          %p408 = scmp.lt.s32.totalorder %s407, 71
          %s409 = scalar_select %p408, %s407, 71
          %s410 = scalar_lea.vmem %s5, %s409
          %s411 = smul.u32 8, %s22
        $region40: #{tpu_custom_call.1} parent=15 // pred_fallthru
          _
        // Predicated region
        $region41: #{tpu_custom_call.1} parent=15 // pred_check
          %p412 = pneg %p198
        $region42: #{tpu_custom_call.1} parent=15 // pred_check_branch
          %414 = sbr.rel (%p412) target = $region44
        $region43: #{tpu_custom_call.1} parent=15 // pred_region
          %s415 = smul.u32 8, %s22
          %p416 = scmp.lt.s32.totalorder %s415, 71
          %s417 = scalar_select %p416, %s415, 71
          %s418 = smul.addr %s417, 2
          %s419 = smul.addr %s418, 8
          %s420 = scalar_lea.vmem %s6, %s419
          %s421 = smul.u32 8, %s22
        $region44: #{tpu_custom_call.1} parent=15 // pred_fallthru
          _
        // Predicated region
        $region45: #{tpu_custom_call.1} parent=15 // pred_check
          %p422 = pneg %p224
        $region46: #{tpu_custom_call.1} parent=15 // pred_check_branch
          %424 = sbr.rel (%p422) target = $region48
        $region47: #{tpu_custom_call.1} parent=15 // pred_region
          %s425 = smul.u32 8, %s22
          %p426 = scmp.lt.s32.totalorder %s425, 71
          %s427 = scalar_select %p426, %s425, 71
          %s428 = scalar_lea.vmem %s7, %s427
          %s429 = smul.u32 8, %s22
        $region48: #{tpu_custom_call.1} parent=15 // pred_fallthru
          _
        // Predicated region
        $region49: #{tpu_custom_call.1} parent=15 // pred_check
          %p430 = pneg %p250
        $region50: #{tpu_custom_call.1} parent=15 // pred_check_branch
          %432 = sbr.rel (%p430) target = $region52
        $region51: #{tpu_custom_call.1} parent=15 // pred_region
          %s433 = smul.u32 8, %s22
          %p434 = scmp.lt.s32.totalorder %s433, 71
          %s435 = scalar_select %p434, %s433, 71
          %s436 = smul.addr %s435, 4
          %s437 = scalar_lea.vmem %s8, %s436
          %s438 = smul.u32 8, %s22
        $region52: #{tpu_custom_call.1} parent=15 // pred_fallthru
          _
      $region16: #{tpu_custom_call.1} parent=5 // pred_fallthru
        _
      %p439 = scmp.le.s32.totalorder 1, %s22
      %p440 = scmp.lt.s32.totalorder %s22, 10
      %p441 = pnand %p439, %p440
      %p442 = pneg %p441
      // Predicated region
      $region53: #{tpu_custom_call.1} parent=5 // pred_check
        _
      $region54: #{tpu_custom_call.1} parent=5 // pred_check_branch
        %444 = sbr.rel (%p441) target = $region56
      $region55: #{tpu_custom_call.1} parent=5 // pred_region
        %s445 = ssub.s32 %s22, 1
        %s446 = smul.u32 8, %s27
        %p447 = scmp.lt.s32.totalorder %s446, 71
        %s448 = scalar_select %p447, %s446, 71
        %s449 = smul.addr %s448, 4
        %s450 = scalar_lea.vmem %s0, %s449
        %p451 = pneg %p48
        %p452 = pneg %p45
        %s453 = smul.u32 8, %s27
        %p454 = scmp.lt.s32.totalorder %s453, 71
        %s455 = scalar_select %p454, %s453, 71
        %s456 = scalar_lea.vmem %s1, %s455
        %p457 = pneg %p74
        %p458 = pneg %p71
        %s459 = smul.u32 8, %s27
        %p460 = scmp.lt.s32.totalorder %s459, 71
        %s461 = scalar_select %p460, %s459, 71
        %s462 = smul.addr %s461, 2
        %s463 = smul.addr %s462, 8
        %s464 = scalar_lea.vmem %s2, %s463
        %p465 = pneg %p100
        %p466 = pneg %p97
        %s467 = smul.u32 8, %s27
        %p468 = scmp.lt.s32.totalorder %s467, 71
        %s469 = scalar_select %p468, %s467, 71
        %s470 = scalar_lea.vmem %s3, %s469
        %p471 = pneg %p126
        %p472 = pneg %p123
        %s473 = smul.u32 8, %s27
        %p474 = scmp.lt.s32.totalorder %s473, 71
        %s475 = scalar_select %p474, %s473, 71
        %s476 = smul.addr %s475, 2
        %s477 = smul.addr %s476, 8
        %s478 = scalar_lea.vmem %s4, %s477
        %p479 = pneg %p152
        %p480 = pneg %p149
        %s481 = smul.u32 8, %s27
        %p482 = scmp.lt.s32.totalorder %s481, 71
        %s483 = scalar_select %p482, %s481, 71
        %s484 = scalar_lea.vmem %s5, %s483
        %p485 = pneg %p178
        %p486 = pneg %p175
        %s487 = smul.u32 8, %s27
        %p488 = scmp.lt.s32.totalorder %s487, 71
        %s489 = scalar_select %p488, %s487, 71
        %s490 = smul.addr %s489, 2
        %s491 = smul.addr %s490, 8
        %s492 = scalar_lea.vmem %s6, %s491
        %p493 = pneg %p204
        %p494 = pneg %p201
        %s495 = smul.u32 8, %s27
        %p496 = scmp.lt.s32.totalorder %s495, 71
        %s497 = scalar_select %p496, %s495, 71
        %s498 = scalar_lea.vmem %s7, %s497
        %p499 = pneg %p230
        %p500 = pneg %p227
        %s501 = smul.u32 8, %s27
        %p502 = scmp.lt.s32.totalorder %s501, 71
        %s503 = scalar_select %p502, %s501, 71
        %s504 = smul.addr %s503, 4
        %s505 = scalar_lea.vmem %s8, %s504
        %p506 = pneg %p256
        %p507 = pneg %p253
        %p508 = pneg %p277
        %p509 = pneg %p274
        %p510 = pneg %p298
        %p511 = pneg %p295
        %p512 = pneg %p319
        %p513 = pneg %p316
        %p514 = pneg %p340
        %p515 = pneg %p337
        %s516 = smul.u32 8, %s27
        %p517 = scmp.lt.s32.totalorder %s516, 71
        %s518 = scalar_select %p517, %s516, 71
        %s519 = smul.addr %s518, 4
        %s520 = scalar_lea.vmem %s0, %s519
        %s521 = smul.u32 8, %s27
        %s522 = smul.u32 8, %s27
        %p523 = scmp.lt.s32.totalorder %s522, 71
        %s524 = scalar_select %p523, %s522, 71
        %s525 = scalar_lea.vmem %s1, %s524
        %s526 = smul.u32 8, %s27
        %s527 = smul.u32 8, %s27
        %p528 = scmp.lt.s32.totalorder %s527, 71
        %s529 = scalar_select %p528, %s527, 71
        %s530 = smul.addr %s529, 2
        %s531 = smul.addr %s530, 8
        %s532 = scalar_lea.vmem %s2, %s531
        %s533 = smul.u32 8, %s27
        %s534 = smul.u32 8, %s27
        %p535 = scmp.lt.s32.totalorder %s534, 71
        %s536 = scalar_select %p535, %s534, 71
        %s537 = scalar_lea.vmem %s3, %s536
        %s538 = smul.u32 8, %s27
        %s539 = smul.u32 8, %s27
        %p540 = scmp.lt.s32.totalorder %s539, 71
        %s541 = scalar_select %p540, %s539, 71
        %s542 = smul.addr %s541, 2
        %s543 = smul.addr %s542, 8
        %s544 = scalar_lea.vmem %s4, %s543
        %s545 = smul.u32 8, %s27
        %s546 = smul.u32 8, %s27
        %p547 = scmp.lt.s32.totalorder %s546, 71
        %s548 = scalar_select %p547, %s546, 71
        %s549 = scalar_lea.vmem %s5, %s548
        %s550 = smul.u32 8, %s27
        %s551 = smul.u32 8, %s27
        %p552 = scmp.lt.s32.totalorder %s551, 71
        %s553 = scalar_select %p552, %s551, 71
        %s554 = smul.addr %s553, 2
        %s555 = smul.addr %s554, 8
        %s556 = scalar_lea.vmem %s6, %s555
        %s557 = smul.u32 8, %s27
        %s558 = smul.u32 8, %s27
        %p559 = scmp.lt.s32.totalorder %s558, 71
        %s560 = scalar_select %p559, %s558, 71
        %s561 = scalar_lea.vmem %s7, %s560
        %s562 = smul.u32 8, %s27
        %s563 = smul.u32 8, %s27
        %p564 = scmp.lt.s32.totalorder %s563, 71
        %s565 = scalar_select %p564, %s563, 71
        %s566 = smul.addr %s565, 4
        %s567 = scalar_lea.vmem %s8, %s566
        %s568 = smul.u32 8, %s27
        %p569 = scmp.eq.s32.totalorder %s27, 0
        // Predicated region
        $region57: #{tpu_custom_call.1} parent=55 // pred_check
          %p570 = pneg %p569
        $region58: #{tpu_custom_call.1} parent=55 // pred_check_branch
          %572 = sbr.rel (%p570) target = $region60
        $region59: #{tpu_custom_call.1} parent=55 // pred_region
          %vm573 = vcmask 60416
          %574 = vst.msk [vmem:[#allocation2] sm:$0xf] %vm573, 0.0
          %575 = vst.msk [vmem:[#allocation4] sm:$0xf] %vm573, 0.0
          %576 = vst.msk [vmem:[#allocation6] sm:$0xf] %vm573, 0.0
          %vm577 = vcmask 0
          %578 = vst.msk [vmem:[#allocation7] sm:$0x1] %vm577, 0.0
        $region60: #{tpu_custom_call.1} parent=55 // pred_fallthru
          _
        %v579 = vld [vmem:[%s520] sm:$0xf]
        %v580 = vld [vmem:[%s520 + $0x4] sm:$0xf]
        %v581 = vld [vmem:[%s520 + $0x8] sm:$0xf]
        %v582 = vld [vmem:[%s520 + $0xc] sm:$0xf]
        %v583 = vld [vmem:[%s520 + $0x10] sm:$0xf]
        %v584 = vld [vmem:[%s520 + $0x14] sm:$0xf]
        %v585 = vld [vmem:[%s520 + $0x18] sm:$0xf]
        %v586 = vld [vmem:[%s520 + $0x1c] sm:$0xf]
        %v587 = vld [vmem:[%s532] sm:$0xff]
        %v588 = vld [vmem:[%s532 + $0x8] sm:$0xff]
        %v589 = vld [vmem:[%s532 + $0x10] sm:$0xff]
        %v590 = vld [vmem:[%s532 + $0x18] sm:$0xff]
        %v591 = vld [vmem:[%s532 + $0x20] sm:$0xff]
        %v592 = vld [vmem:[%s532 + $0x28] sm:$0xff]
        %v593 = vld [vmem:[%s532 + $0x30] sm:$0xff]
        %v594 = vld [vmem:[%s532 + $0x38] sm:$0xff]
        %v595 = vld [vmem:[%s532 + $0x40] sm:$0xff]
        %v596 = vld [vmem:[%s532 + $0x48] sm:$0xff]
        %v597 = vld [vmem:[%s532 + $0x50] sm:$0xff]
        %v598 = vld [vmem:[%s532 + $0x58] sm:$0xff]
        %v599 = vld [vmem:[%s532 + $0x60] sm:$0xff]
        %v600 = vld [vmem:[%s532 + $0x68] sm:$0xff]
        %v601 = vld [vmem:[%s532 + $0x70] sm:$0xff]
        %v602 = vld [vmem:[%s532 + $0x78] sm:$0xff]
        %v603 = vld [vmem:[%s525] sm:$0x1]
        %v604 = vld [vmem:[%s525 + $0x1] sm:$0x1]
        %v605 = vld [vmem:[%s525 + $0x2] sm:$0x1]
        %v606 = vld [vmem:[%s525 + $0x3] sm:$0x1]
        %v607 = vld [vmem:[%s525 + $0x4] sm:$0x1]
        %v608 = vld [vmem:[%s525 + $0x5] sm:$0x1]
        %v609 = vld [vmem:[%s525 + $0x6] sm:$0x1]
        %v610 = vld [vmem:[%s525 + $0x7] sm:$0x1]
        %v619 = vperm.slane %v603, 0
        %v620 = vperm.slane %v604, 0
        %v621 = vperm.slane %v605, 0
        %v622 = vperm.slane %v606, 0
        %v623 = vperm.slane %v607, 0
        %v624 = vperm.slane %v608, 0
        %v625 = vperm.slane %v609, 0
        %v626 = vperm.slane %v610, 0
        %v635 = vld [vmem:[%s537] sm:$0x1]
        %v636 = vld [vmem:[%s537 + $0x1] sm:$0x1]
        %v637 = vld [vmem:[%s537 + $0x2] sm:$0x1]
        %v638 = vld [vmem:[%s537 + $0x3] sm:$0x1]
        %v639 = vld [vmem:[%s537 + $0x4] sm:$0x1]
        %v640 = vld [vmem:[%s537 + $0x5] sm:$0x1]
        %v641 = vld [vmem:[%s537 + $0x6] sm:$0x1]
        %v642 = vld [vmem:[%s537 + $0x7] sm:$0x1]
        %v651 = vperm.slane %v635, 0
        %v652 = vperm.slane %v636, 0
        %v653 = vperm.slane %v637, 0
        %v654 = vperm.slane %v638, 0
        %v655 = vperm.slane %v639, 0
        %v656 = vperm.slane %v640, 0
        %v657 = vperm.slane %v641, 0
        %v658 = vperm.slane %v642, 0
        %668 = vset.pattern.permute.xlu0 0
        %669 = vperm.xlu0 %668, %v579
        %v670 = vpop.permute.xlu0 %669
        %673 = vset.pattern.permute.xlu0 0
        %674 = vperm.xlu0 %673, %v580
        %v675 = vpop.permute.xlu0 %674
        %678 = vset.pattern.permute.xlu0 0
        %679 = vperm.xlu0 %678, %v581
        %v680 = vpop.permute.xlu0 %679
        %683 = vset.pattern.permute.xlu0 0
        %684 = vperm.xlu0 %683, %v582
        %v685 = vpop.permute.xlu0 %684
        %688 = vset.pattern.permute.xlu0 0
        %689 = vperm.xlu0 %688, %v583
        %v690 = vpop.permute.xlu0 %689
        %693 = vset.pattern.permute.xlu0 0
        %694 = vperm.xlu0 %693, %v584
        %v695 = vpop.permute.xlu0 %694
        %698 = vset.pattern.permute.xlu0 0
        %699 = vperm.xlu0 %698, %v585
        %v700 = vpop.permute.xlu0 %699
        %703 = vset.pattern.permute.xlu0 0
        %704 = vperm.xlu0 %703, %v586
        %v705 = vpop.permute.xlu0 %704
        %v707 = vmul.f32 %v670, %v619
        %v708 = vmul.f32 %v675, %v620
        %v709 = vmul.f32 %v680, %v621
        %v710 = vmul.f32 %v685, %v622
        %v711 = vmul.f32 %v690, %v623
        %v712 = vmul.f32 %v695, %v624
        %v713 = vmul.f32 %v700, %v625
        %v714 = vmul.f32 %v705, %v626
        %v715 = vadd.f32 %v707, %v651
        %v716 = vadd.f32 %v708, %v652
        %v717 = vadd.f32 %v709, %v653
        %v718 = vadd.f32 %v710, %v654
        %v719 = vadd.f32 %v711, %v655
        %v720 = vadd.f32 %v712, %v656
        %v721 = vadd.f32 %v713, %v657
        %v722 = vadd.f32 %v714, %v658
        %vm723 = vcmask 130048
        %v725 = vsel %vm723, 0.0, 0
        %727 = vmatpush.msra.mxu0 0.0
        %728 = vmatpush.msra.mxu0 0.0
        %729 = vmatpush.msra.mxu0 0.0
        %730 = vmatpush.msra.mxu0 0.0
        %731 = vmatpush.msra.mxu0 0.0
        %732 = vmatpush.msra.mxu0 0.0
        %733 = vmatpush.msra.mxu0 0.0
        %734 = vmatpush.msra.mxu0 0.0
        %735 = vmatpush.msra.mxu0 0.0
        %736 = vmatpush.msra.mxu0 0.0
        %737 = vmatpush.msra.mxu0 0.0
        %738 = vmatpush.msra.mxu0 0.0
        %739 = vmatpush.msra.mxu0 0.0
        %740 = vmatpush.msra.mxu0 0.0
        %741 = vmatpush.msra.mxu0 %v588
        %742 = vmatpush.msra.mxu0 %v587
        %743 = vmatmul.f32.gmra.mxu0 %v725
        %v744 = vpop.f32.mrf.mxu0
        %v745 = vadd.f32 0.0, %v744
        %746 = vdwg.mxu0
        %747 = vmatpush.msra.mxu0 0.0
        %748 = vmatpush.msra.mxu0 0.0
        %749 = vmatpush.msra.mxu0 0.0
        %750 = vmatpush.msra.mxu0 0.0
        %751 = vmatpush.msra.mxu0 0.0
        %752 = vmatpush.msra.mxu0 0.0
        %753 = vmatpush.msra.mxu0 0.0
        %754 = vmatpush.msra.mxu0 0.0
        %755 = vmatpush.msra.mxu0 0.0
        %756 = vmatpush.msra.mxu0 0.0
        %757 = vmatpush.msra.mxu0 0.0
        %758 = vmatpush.msra.mxu0 0.0
        %759 = vmatpush.msra.mxu0 0.0
        %760 = vmatpush.msra.mxu0 0.0
        %761 = vmatpush.msra.mxu0 %v590
        %762 = vmatpush.msra.mxu0 %v589
        %763 = vmatmul.f32.gmra.mxu0 %v725
        %v764 = vpop.f32.mrf.mxu0
        %v765 = vadd.f32 0.0, %v764
        %766 = vdwg.mxu0
        %767 = vmatpush.msra.mxu0 0.0
        %768 = vmatpush.msra.mxu0 0.0
        %769 = vmatpush.msra.mxu0 0.0
        %770 = vmatpush.msra.mxu0 0.0
        %771 = vmatpush.msra.mxu0 0.0
        %772 = vmatpush.msra.mxu0 0.0
        %773 = vmatpush.msra.mxu0 0.0
        %774 = vmatpush.msra.mxu0 0.0
        %775 = vmatpush.msra.mxu0 0.0
        %776 = vmatpush.msra.mxu0 0.0
        %777 = vmatpush.msra.mxu0 0.0
        %778 = vmatpush.msra.mxu0 0.0
        %779 = vmatpush.msra.mxu0 0.0
        %780 = vmatpush.msra.mxu0 0.0
        %781 = vmatpush.msra.mxu0 %v592
        %782 = vmatpush.msra.mxu0 %v591
        %783 = vmatmul.f32.gmra.mxu0 %v725
        %v784 = vpop.f32.mrf.mxu0
        %v785 = vadd.f32 0.0, %v784
        %786 = vdwg.mxu0
        %787 = vmatpush.msra.mxu0 0.0
        %788 = vmatpush.msra.mxu0 0.0
        %789 = vmatpush.msra.mxu0 0.0
        %790 = vmatpush.msra.mxu0 0.0
        %791 = vmatpush.msra.mxu0 0.0
        %792 = vmatpush.msra.mxu0 0.0
        %793 = vmatpush.msra.mxu0 0.0
        %794 = vmatpush.msra.mxu0 0.0
        %795 = vmatpush.msra.mxu0 0.0
        %796 = vmatpush.msra.mxu0 0.0
        %797 = vmatpush.msra.mxu0 0.0
        %798 = vmatpush.msra.mxu0 0.0
        %799 = vmatpush.msra.mxu0 0.0
        %800 = vmatpush.msra.mxu0 0.0
        %801 = vmatpush.msra.mxu0 %v594
        %802 = vmatpush.msra.mxu0 %v593
        %803 = vmatmul.f32.gmra.mxu0 %v725
        %v804 = vpop.f32.mrf.mxu0
        %v805 = vadd.f32 0.0, %v804
        %806 = vdwg.mxu0
        %807 = vmatpush.msra.mxu0 0.0
        %808 = vmatpush.msra.mxu0 0.0
        %809 = vmatpush.msra.mxu0 0.0
        %810 = vmatpush.msra.mxu0 0.0
        %811 = vmatpush.msra.mxu0 0.0
        %812 = vmatpush.msra.mxu0 0.0
        %813 = vmatpush.msra.mxu0 0.0
        %814 = vmatpush.msra.mxu0 0.0
        %815 = vmatpush.msra.mxu0 0.0
        %816 = vmatpush.msra.mxu0 0.0
        %817 = vmatpush.msra.mxu0 0.0
        %818 = vmatpush.msra.mxu0 0.0
        %819 = vmatpush.msra.mxu0 0.0
        %820 = vmatpush.msra.mxu0 0.0
        %821 = vmatpush.msra.mxu0 %v596
        %822 = vmatpush.msra.mxu0 %v595
        %823 = vmatmul.f32.gmra.mxu0 %v725
        %v824 = vpop.f32.mrf.mxu0
        %v825 = vadd.f32 0.0, %v824
        %826 = vdwg.mxu0
        %827 = vmatpush.msra.mxu0 0.0
        %828 = vmatpush.msra.mxu0 0.0
        %829 = vmatpush.msra.mxu0 0.0
        %830 = vmatpush.msra.mxu0 0.0
        %831 = vmatpush.msra.mxu0 0.0
        %832 = vmatpush.msra.mxu0 0.0
        %833 = vmatpush.msra.mxu0 0.0
        %834 = vmatpush.msra.mxu0 0.0
        %835 = vmatpush.msra.mxu0 0.0
        %836 = vmatpush.msra.mxu0 0.0
        %837 = vmatpush.msra.mxu0 0.0
        %838 = vmatpush.msra.mxu0 0.0
        %839 = vmatpush.msra.mxu0 0.0
        %840 = vmatpush.msra.mxu0 0.0
        %841 = vmatpush.msra.mxu0 %v598
        %842 = vmatpush.msra.mxu0 %v597
        %843 = vmatmul.f32.gmra.mxu0 %v725
        %v844 = vpop.f32.mrf.mxu0
        %v845 = vadd.f32 0.0, %v844
        %846 = vdwg.mxu0
        %847 = vmatpush.msra.mxu0 0.0
        %848 = vmatpush.msra.mxu0 0.0
        %849 = vmatpush.msra.mxu0 0.0
        %850 = vmatpush.msra.mxu0 0.0
        %851 = vmatpush.msra.mxu0 0.0
        %852 = vmatpush.msra.mxu0 0.0
        %853 = vmatpush.msra.mxu0 0.0
        %854 = vmatpush.msra.mxu0 0.0
        %855 = vmatpush.msra.mxu0 0.0
        %856 = vmatpush.msra.mxu0 0.0
        %857 = vmatpush.msra.mxu0 0.0
        %858 = vmatpush.msra.mxu0 0.0
        %859 = vmatpush.msra.mxu0 0.0
        %860 = vmatpush.msra.mxu0 0.0
        %861 = vmatpush.msra.mxu0 %v600
        %862 = vmatpush.msra.mxu0 %v599
        %863 = vmatmul.f32.gmra.mxu0 %v725
        %v864 = vpop.f32.mrf.mxu0
        %v865 = vadd.f32 0.0, %v864
        %866 = vdwg.mxu0
        %867 = vmatpush.msra.mxu0 0.0
        %868 = vmatpush.msra.mxu0 0.0
        %869 = vmatpush.msra.mxu0 0.0
        %870 = vmatpush.msra.mxu0 0.0
        %871 = vmatpush.msra.mxu0 0.0
        %872 = vmatpush.msra.mxu0 0.0
        %873 = vmatpush.msra.mxu0 0.0
        %874 = vmatpush.msra.mxu0 0.0
        %875 = vmatpush.msra.mxu0 0.0
        %876 = vmatpush.msra.mxu0 0.0
        %877 = vmatpush.msra.mxu0 0.0
        %878 = vmatpush.msra.mxu0 0.0
        %879 = vmatpush.msra.mxu0 0.0
        %880 = vmatpush.msra.mxu0 0.0
        %881 = vmatpush.msra.mxu0 %v602
        %882 = vmatpush.msra.mxu0 %v601
        %883 = vmatmul.f32.gmra.mxu0 %v725
        %v884 = vpop.f32.mrf.mxu0
        %v885 = vadd.f32 0.0, %v884
        %886 = vdwg.mxu0
        %v887 = vadd.f32 %v715, %v745
        %v888 = vadd.f32 %v716, %v765
        %v889 = vadd.f32 %v717, %v785
        %v890 = vadd.f32 %v718, %v805
        %v891 = vadd.f32 %v719, %v825
        %v892 = vadd.f32 %v720, %v845
        %v893 = vadd.f32 %v721, %v865
        %v894 = vadd.f32 %v722, %v885
        %v895 = vxor.u32 %v887, 2147483648
        %v896 = vxor.u32 %v888, 2147483648
        %v897 = vxor.u32 %v889, 2147483648
        %v898 = vxor.u32 %v890, 2147483648
        %v899 = vxor.u32 %v891, 2147483648
        %v900 = vxor.u32 %v892, 2147483648
        %v901 = vxor.u32 %v893, 2147483648
        %v902 = vxor.u32 %v894, 2147483648
        %v903 = vmul.f32 %v895, 1.442695
        %v904 = vpow.pop %v903
        %v905 = vmul.f32 %v896, 1.442695
        %v906 = vpow.pop %v905
        %v907 = vmul.f32 %v897, 1.442695
        %v908 = vpow.pop %v907
        %v909 = vmul.f32 %v898, 1.442695
        %v910 = vpow.pop %v909
        %v911 = vmul.f32 %v899, 1.442695
        %v912 = vpow.pop %v911
        %v913 = vmul.f32 %v900, 1.442695
        %v914 = vpow.pop %v913
        %v915 = vmul.f32 %v901, 1.442695
        %v916 = vpow.pop %v915
        %v917 = vmul.f32 %v902, 1.442695
        %v918 = vpow.pop %v917
        %v919 = vadd.f32 %v904, 1.0
        %v920 = vadd.f32 %v906, 1.0
        %v921 = vadd.f32 %v908, 1.0
        %v922 = vadd.f32 %v910, 1.0
        %v923 = vadd.f32 %v912, 1.0
        %v924 = vadd.f32 %v914, 1.0
        %v925 = vadd.f32 %v916, 1.0
        %v926 = vadd.f32 %v918, 1.0
        %v927 = vrcp.pop %v919
        %v928 = vmul.f32 %v919, %v927
        %v929 = vsub.f32 1.0, %v928
        %v930 = vmul.f32 %v927, %v929
        %v931 = vadd.f32 %v927, %v930
        %vm932 = vweird.f32 %v919
        %vm933 = vweird.f32 %v927
        %vm934 = vmor %vm932, %vm933
        %v935 = vsel %vm934, %v927, %v931
        %v936 = vand.u32 2147483647, %v919
        %vm937 = vcmp.eq.f32.partialorder %v936, 8.507059e+37
        %v938 = vand.u32 %v919, 2147483648
        %v939 = vor.u32 1.1754944e-38, %v938
        %v940 = vsel %vm937, %v939, %v935
        %v941 = vmul.f32 1.0, %v940
        %v942 = vrcp.pop %v920
        %v943 = vmul.f32 %v920, %v942
        %v944 = vsub.f32 1.0, %v943
        %v945 = vmul.f32 %v942, %v944
        %v946 = vadd.f32 %v942, %v945
        %vm947 = vweird.f32 %v920
        %vm948 = vweird.f32 %v942
        %vm949 = vmor %vm947, %vm948
        %v950 = vsel %vm949, %v942, %v946
        %v951 = vand.u32 2147483647, %v920
        %vm952 = vcmp.eq.f32.partialorder %v951, 8.507059e+37
        %v953 = vand.u32 %v920, 2147483648
        %v954 = vor.u32 1.1754944e-38, %v953
        %v955 = vsel %vm952, %v954, %v950
        %v956 = vmul.f32 1.0, %v955
        %v957 = vrcp.pop %v921
        %v958 = vmul.f32 %v921, %v957
        %v959 = vsub.f32 1.0, %v958
        %v960 = vmul.f32 %v957, %v959
        %v961 = vadd.f32 %v957, %v960
        %vm962 = vweird.f32 %v921
        %vm963 = vweird.f32 %v957
        %vm964 = vmor %vm962, %vm963
        %v965 = vsel %vm964, %v957, %v961
        %v966 = vand.u32 2147483647, %v921
        %vm967 = vcmp.eq.f32.partialorder %v966, 8.507059e+37
        %v968 = vand.u32 %v921, 2147483648
        %v969 = vor.u32 1.1754944e-38, %v968
        %v970 = vsel %vm967, %v969, %v965
        %v971 = vmul.f32 1.0, %v970
        %v972 = vrcp.pop %v922
        %v973 = vmul.f32 %v922, %v972
        %v974 = vsub.f32 1.0, %v973
        %v975 = vmul.f32 %v972, %v974
        %v976 = vadd.f32 %v972, %v975
        %vm977 = vweird.f32 %v922
        %vm978 = vweird.f32 %v972
        %vm979 = vmor %vm977, %vm978
        %v980 = vsel %vm979, %v972, %v976
        %v981 = vand.u32 2147483647, %v922
        %vm982 = vcmp.eq.f32.partialorder %v981, 8.507059e+37
        %v983 = vand.u32 %v922, 2147483648
        %v984 = vor.u32 1.1754944e-38, %v983
        %v985 = vsel %vm982, %v984, %v980
        %v986 = vmul.f32 1.0, %v985
        %v987 = vrcp.pop %v923
        %v988 = vmul.f32 %v923, %v987
        %v989 = vsub.f32 1.0, %v988
        %v990 = vmul.f32 %v987, %v989
        %v991 = vadd.f32 %v987, %v990
        %vm992 = vweird.f32 %v923
        %vm993 = vweird.f32 %v987
        %vm994 = vmor %vm992, %vm993
        %v995 = vsel %vm994, %v987, %v991
        %v996 = vand.u32 2147483647, %v923
        %vm997 = vcmp.eq.f32.partialorder %v996, 8.507059e+37
        %v998 = vand.u32 %v923, 2147483648
        %v999 = vor.u32 1.1754944e-38, %v998
        %v1000 = vsel %vm997, %v999, %v995
        %v1001 = vmul.f32 1.0, %v1000
        %v1002 = vrcp.pop %v924
        %v1003 = vmul.f32 %v924, %v1002
        %v1004 = vsub.f32 1.0, %v1003
        %v1005 = vmul.f32 %v1002, %v1004
        %v1006 = vadd.f32 %v1002, %v1005
        %vm1007 = vweird.f32 %v924
        %vm1008 = vweird.f32 %v1002
        %vm1009 = vmor %vm1007, %vm1008
        %v1010 = vsel %vm1009, %v1002, %v1006
        %v1011 = vand.u32 2147483647, %v924
        %vm1012 = vcmp.eq.f32.partialorder %v1011, 8.507059e+37
        %v1013 = vand.u32 %v924, 2147483648
        %v1014 = vor.u32 1.1754944e-38, %v1013
        %v1015 = vsel %vm1012, %v1014, %v1010
        %v1016 = vmul.f32 1.0, %v1015
        %v1017 = vrcp.pop %v925
        %v1018 = vmul.f32 %v925, %v1017
        %v1019 = vsub.f32 1.0, %v1018
        %v1020 = vmul.f32 %v1017, %v1019
        %v1021 = vadd.f32 %v1017, %v1020
        %vm1022 = vweird.f32 %v925
        %vm1023 = vweird.f32 %v1017
        %vm1024 = vmor %vm1022, %vm1023
        %v1025 = vsel %vm1024, %v1017, %v1021
        %v1026 = vand.u32 2147483647, %v925
        %vm1027 = vcmp.eq.f32.partialorder %v1026, 8.507059e+37
        %v1028 = vand.u32 %v925, 2147483648
        %v1029 = vor.u32 1.1754944e-38, %v1028
        %v1030 = vsel %vm1027, %v1029, %v1025
        %v1031 = vmul.f32 1.0, %v1030
        %v1032 = vrcp.pop %v926
        %v1033 = vmul.f32 %v926, %v1032
        %v1034 = vsub.f32 1.0, %v1033
        %v1035 = vmul.f32 %v1032, %v1034
        %v1036 = vadd.f32 %v1032, %v1035
        %vm1037 = vweird.f32 %v926
        %vm1038 = vweird.f32 %v1032
        %vm1039 = vmor %vm1037, %vm1038
        %v1040 = vsel %vm1039, %v1032, %v1036
        %v1041 = vand.u32 2147483647, %v926
        %vm1042 = vcmp.eq.f32.partialorder %v1041, 8.507059e+37
        %v1043 = vand.u32 %v926, 2147483648
        %v1044 = vor.u32 1.1754944e-38, %v1043
        %v1045 = vsel %vm1042, %v1044, %v1040
        %v1046 = vmul.f32 1.0, %v1045
        %v1047 = vtanh.pop %v887
        %v1048 = vtanh.pop %v888
        %v1049 = vtanh.pop %v889
        %v1050 = vtanh.pop %v890
        %v1051 = vtanh.pop %v891
        %v1052 = vtanh.pop %v892
        %v1053 = vtanh.pop %v893
        %v1054 = vtanh.pop %v894
        %v1055 = vmul.f32 %v941, 0.0
        %v1056 = vmul.f32 %v956, 0.0
        %v1057 = vmul.f32 %v971, 0.0
        %v1058 = vmul.f32 %v986, 0.0
        %v1059 = vmul.f32 %v1001, 0.0
        %v1060 = vmul.f32 %v1016, 0.0
        %v1061 = vmul.f32 %v1031, 0.0
        %v1062 = vmul.f32 %v1046, 0.0
        %1071 = vrot.lane.b32.xlu0 %v1047, 96
        %v1072 = vpop.permute.xlu0 %1071
        %1073 = vrot.lane.b32.xlu0 %v1048, 96
        %v1074 = vpop.permute.xlu0 %1073
        %1075 = vrot.lane.b32.xlu0 %v1049, 96
        %v1076 = vpop.permute.xlu0 %1075
        %1077 = vrot.lane.b32.xlu0 %v1050, 96
        %v1078 = vpop.permute.xlu0 %1077
        %1079 = vrot.lane.b32.xlu0 %v1051, 96
        %v1080 = vpop.permute.xlu0 %1079
        %1081 = vrot.lane.b32.xlu0 %v1052, 96
        %v1082 = vpop.permute.xlu0 %1081
        %1083 = vrot.lane.b32.xlu0 %v1053, 96
        %v1084 = vpop.permute.xlu0 %1083
        %1085 = vrot.lane.b32.xlu0 %v1054, 96
        %v1086 = vpop.permute.xlu0 %1085
        %v1095 = vmul.f32 %v941, %v1072
        %v1096 = vmul.f32 %v956, %v1074
        %v1097 = vmul.f32 %v971, %v1076
        %v1098 = vmul.f32 %v986, %v1078
        %v1099 = vmul.f32 %v1001, %v1080
        %v1100 = vmul.f32 %v1016, %v1082
        %v1101 = vmul.f32 %v1031, %v1084
        %v1102 = vmul.f32 %v1046, %v1086
        %1111 = vrot.lane.b32.xlu0 %v1095, 16
        %v1112 = vpop.permute.xlu0 %1111
        %1113 = vrot.lane.b32.xlu0 %v1096, 16
        %v1114 = vpop.permute.xlu0 %1113
        %1115 = vrot.lane.b32.xlu0 %v1097, 16
        %v1116 = vpop.permute.xlu0 %1115
        %1117 = vrot.lane.b32.xlu0 %v1098, 16
        %v1118 = vpop.permute.xlu0 %1117
        %1119 = vrot.lane.b32.xlu0 %v1099, 16
        %v1120 = vpop.permute.xlu0 %1119
        %1121 = vrot.lane.b32.xlu0 %v1100, 16
        %v1122 = vpop.permute.xlu0 %1121
        %1123 = vrot.lane.b32.xlu0 %v1101, 16
        %v1124 = vpop.permute.xlu0 %1123
        %1125 = vrot.lane.b32.xlu0 %v1102, 16
        %v1126 = vpop.permute.xlu0 %1125
        %v1135 = vadd.f32 %v1055, %v1112
        %v1136 = vadd.f32 %v1056, %v1114
        %v1137 = vadd.f32 %v1057, %v1116
        %v1138 = vadd.f32 %v1058, %v1118
        %v1139 = vadd.f32 %v1059, %v1120
        %v1140 = vadd.f32 %v1060, %v1122
        %v1141 = vadd.f32 %v1061, %v1124
        %v1142 = vadd.f32 %v1062, %v1126
        %v1143 = vtanh.pop %v1135
        %v1144 = vtanh.pop %v1136
        %v1145 = vtanh.pop %v1137
        %v1146 = vtanh.pop %v1138
        %v1147 = vtanh.pop %v1139
        %v1148 = vtanh.pop %v1140
        %v1149 = vtanh.pop %v1141
        %v1150 = vtanh.pop %v1142
        %1159 = vrot.lane.b32.xlu0 %v1143, 32
        %v1160 = vpop.permute.xlu0 %1159
        %1161 = vrot.lane.b32.xlu0 %v1144, 32
        %v1162 = vpop.permute.xlu0 %1161
        %1163 = vrot.lane.b32.xlu0 %v1145, 32
        %v1164 = vpop.permute.xlu0 %1163
        %1165 = vrot.lane.b32.xlu0 %v1146, 32
        %v1166 = vpop.permute.xlu0 %1165
        %1167 = vrot.lane.b32.xlu0 %v1147, 32
        %v1168 = vpop.permute.xlu0 %1167
        %1169 = vrot.lane.b32.xlu0 %v1148, 32
        %v1170 = vpop.permute.xlu0 %1169
        %1171 = vrot.lane.b32.xlu0 %v1149, 32
        %v1172 = vpop.permute.xlu0 %1171
        %1173 = vrot.lane.b32.xlu0 %v1150, 32
        %v1174 = vpop.permute.xlu0 %1173
        %v1183 = vmul.f32 %v941, %v1160
        %v1184 = vmul.f32 %v956, %v1162
        %v1185 = vmul.f32 %v971, %v1164
        %v1186 = vmul.f32 %v986, %v1166
        %v1187 = vmul.f32 %v1001, %v1168
        %v1188 = vmul.f32 %v1016, %v1170
        %v1189 = vmul.f32 %v1031, %v1172
        %v1190 = vmul.f32 %v1046, %v1174
        %1191 = vset.pattern.permute.xlu0 1
        %1192 = vperm.xlu0 %1191, %v579
        %v1193 = vpop.permute.xlu0 %1192
        %1195 = vset.pattern.permute.xlu0 1
        %1196 = vperm.xlu0 %1195, %v580
        %v1197 = vpop.permute.xlu0 %1196
        %1199 = vset.pattern.permute.xlu0 1
        %1200 = vperm.xlu0 %1199, %v581
        %v1201 = vpop.permute.xlu0 %1200
        %1203 = vset.pattern.permute.xlu0 1
        %1204 = vperm.xlu0 %1203, %v582
        %v1205 = vpop.permute.xlu0 %1204
        %1207 = vset.pattern.permute.xlu0 1
        %1208 = vperm.xlu0 %1207, %v583
        %v1209 = vpop.permute.xlu0 %1208
        %1211 = vset.pattern.permute.xlu0 1
        %1212 = vperm.xlu0 %1211, %v584
        %v1213 = vpop.permute.xlu0 %1212
        %1215 = vset.pattern.permute.xlu0 1
        %1216 = vperm.xlu0 %1215, %v585
        %v1217 = vpop.permute.xlu0 %1216
        %1219 = vset.pattern.permute.xlu0 1
        %1220 = vperm.xlu0 %1219, %v586
        %v1221 = vpop.permute.xlu0 %1220
        %v1223 = vmul.f32 %v1193, %v619
        %v1224 = vmul.f32 %v1197, %v620
        %v1225 = vmul.f32 %v1201, %v621
        %v1226 = vmul.f32 %v1205, %v622
        %v1227 = vmul.f32 %v1209, %v623
        %v1228 = vmul.f32 %v1213, %v624
        %v1229 = vmul.f32 %v1217, %v625
        %v1230 = vmul.f32 %v1221, %v626
        %v1231 = vadd.f32 %v1223, %v651
        %v1232 = vadd.f32 %v1224, %v652
        %v1233 = vadd.f32 %v1225, %v653
        %v1234 = vadd.f32 %v1226, %v654
        %v1235 = vadd.f32 %v1227, %v655
        %v1236 = vadd.f32 %v1228, %v656
        %v1237 = vadd.f32 %v1229, %v657
        %v1238 = vadd.f32 %v1230, %v658
        %1240 = vrot.lane.b32.xlu0 %v1183, 80
        %v1241 = vpop.permute.xlu0 %1240
        %v1242 = vsel %vm723, %v1241, 0
        %1244 = vmatpush.msra.mxu0 0.0
        %1245 = vmatpush.msra.mxu0 0.0
        %1246 = vmatpush.msra.mxu0 0.0
        %1247 = vmatpush.msra.mxu0 0.0
        %1248 = vmatpush.msra.mxu0 0.0
        %1249 = vmatpush.msra.mxu0 0.0
        %1250 = vmatpush.msra.mxu0 0.0
        %1251 = vmatpush.msra.mxu0 0.0
        %1252 = vmatpush.msra.mxu0 0.0
        %1253 = vmatpush.msra.mxu0 0.0
        %1254 = vmatpush.msra.mxu0 0.0
        %1255 = vmatpush.msra.mxu0 0.0
        %1256 = vmatpush.msra.mxu0 0.0
        %1257 = vmatpush.msra.mxu0 0.0
        %1258 = vmatpush.msra.mxu0 %v588
        %1259 = vmatpush.msra.mxu0 %v587
        %1260 = vmatmul.f32.gmra.mxu0 %v1242
        %v1261 = vpop.f32.mrf.mxu0
        %v1262 = vadd.f32 0.0, %v1261
        %1263 = vdwg.mxu0
        %1265 = vrot.lane.b32.xlu0 %v1184, 80
        %v1266 = vpop.permute.xlu0 %1265
        %v1267 = vsel %vm723, %v1266, 0
        %1269 = vmatpush.msra.mxu0 0.0
        %1270 = vmatpush.msra.mxu0 0.0
        %1271 = vmatpush.msra.mxu0 0.0
        %1272 = vmatpush.msra.mxu0 0.0
        %1273 = vmatpush.msra.mxu0 0.0
        %1274 = vmatpush.msra.mxu0 0.0
        %1275 = vmatpush.msra.mxu0 0.0
        %1276 = vmatpush.msra.mxu0 0.0
        %1277 = vmatpush.msra.mxu0 0.0
        %1278 = vmatpush.msra.mxu0 0.0
        %1279 = vmatpush.msra.mxu0 0.0
        %1280 = vmatpush.msra.mxu0 0.0
        %1281 = vmatpush.msra.mxu0 0.0
        %1282 = vmatpush.msra.mxu0 0.0
        %1283 = vmatpush.msra.mxu0 %v590
        %1284 = vmatpush.msra.mxu0 %v589
        %1285 = vmatmul.f32.gmra.mxu0 %v1267
        %v1286 = vpop.f32.mrf.mxu0
        %v1287 = vadd.f32 0.0, %v1286
        %1288 = vdwg.mxu0
        %1290 = vrot.lane.b32.xlu0 %v1185, 80
        %v1291 = vpop.permute.xlu0 %1290
        %v1292 = vsel %vm723, %v1291, 0
        %1294 = vmatpush.msra.mxu0 0.0
        %1295 = vmatpush.msra.mxu0 0.0
        %1296 = vmatpush.msra.mxu0 0.0
        %1297 = vmatpush.msra.mxu0 0.0
        %1298 = vmatpush.msra.mxu0 0.0
        %1299 = vmatpush.msra.mxu0 0.0
        %1300 = vmatpush.msra.mxu0 0.0
        %1301 = vmatpush.msra.mxu0 0.0
        %1302 = vmatpush.msra.mxu0 0.0
        %1303 = vmatpush.msra.mxu0 0.0
        %1304 = vmatpush.msra.mxu0 0.0
        %1305 = vmatpush.msra.mxu0 0.0
        %1306 = vmatpush.msra.mxu0 0.0
        %1307 = vmatpush.msra.mxu0 0.0
        %1308 = vmatpush.msra.mxu0 %v592
        %1309 = vmatpush.msra.mxu0 %v591
        %1310 = vmatmul.f32.gmra.mxu0 %v1292
        %v1311 = vpop.f32.mrf.mxu0
        %v1312 = vadd.f32 0.0, %v1311
        %1313 = vdwg.mxu0
        %1315 = vrot.lane.b32.xlu0 %v1186, 80
        %v1316 = vpop.permute.xlu0 %1315
        %v1317 = vsel %vm723, %v1316, 0
        %1319 = vmatpush.msra.mxu0 0.0
        %1320 = vmatpush.msra.mxu0 0.0
        %1321 = vmatpush.msra.mxu0 0.0
        %1322 = vmatpush.msra.mxu0 0.0
        %1323 = vmatpush.msra.mxu0 0.0
        %1324 = vmatpush.msra.mxu0 0.0
        %1325 = vmatpush.msra.mxu0 0.0
        %1326 = vmatpush.msra.mxu0 0.0
        %1327 = vmatpush.msra.mxu0 0.0
        %1328 = vmatpush.msra.mxu0 0.0
        %1329 = vmatpush.msra.mxu0 0.0
        %1330 = vmatpush.msra.mxu0 0.0
        %1331 = vmatpush.msra.mxu0 0.0
        %1332 = vmatpush.msra.mxu0 0.0
        %1333 = vmatpush.msra.mxu0 %v594
        %1334 = vmatpush.msra.mxu0 %v593
        %1335 = vmatmul.f32.gmra.mxu0 %v1317
        %v1336 = vpop.f32.mrf.mxu0
        %v1337 = vadd.f32 0.0, %v1336
        %1338 = vdwg.mxu0
        %1340 = vrot.lane.b32.xlu0 %v1187, 80
        %v1341 = vpop.permute.xlu0 %1340
        %v1342 = vsel %vm723, %v1341, 0
        %1344 = vmatpush.msra.mxu0 0.0
        %1345 = vmatpush.msra.mxu0 0.0
        %1346 = vmatpush.msra.mxu0 0.0
        %1347 = vmatpush.msra.mxu0 0.0
        %1348 = vmatpush.msra.mxu0 0.0
        %1349 = vmatpush.msra.mxu0 0.0
        %1350 = vmatpush.msra.mxu0 0.0
        %1351 = vmatpush.msra.mxu0 0.0
        %1352 = vmatpush.msra.mxu0 0.0
        %1353 = vmatpush.msra.mxu0 0.0
        %1354 = vmatpush.msra.mxu0 0.0
        %1355 = vmatpush.msra.mxu0 0.0
        %1356 = vmatpush.msra.mxu0 0.0
        %1357 = vmatpush.msra.mxu0 0.0
        %1358 = vmatpush.msra.mxu0 %v596
        %1359 = vmatpush.msra.mxu0 %v595
        %1360 = vmatmul.f32.gmra.mxu0 %v1342
        %v1361 = vpop.f32.mrf.mxu0
        %v1362 = vadd.f32 0.0, %v1361
        %1363 = vdwg.mxu0
        %1365 = vrot.lane.b32.xlu0 %v1188, 80
        %v1366 = vpop.permute.xlu0 %1365
        %v1367 = vsel %vm723, %v1366, 0
        %1369 = vmatpush.msra.mxu0 0.0
        %1370 = vmatpush.msra.mxu0 0.0
        %1371 = vmatpush.msra.mxu0 0.0
        %1372 = vmatpush.msra.mxu0 0.0
        %1373 = vmatpush.msra.mxu0 0.0
        %1374 = vmatpush.msra.mxu0 0.0
        %1375 = vmatpush.msra.mxu0 0.0
        %1376 = vmatpush.msra.mxu0 0.0
        %1377 = vmatpush.msra.mxu0 0.0
        %1378 = vmatpush.msra.mxu0 0.0
        %1379 = vmatpush.msra.mxu0 0.0
        %1380 = vmatpush.msra.mxu0 0.0
        %1381 = vmatpush.msra.mxu0 0.0
        %1382 = vmatpush.msra.mxu0 0.0
        %1383 = vmatpush.msra.mxu0 %v598
        %1384 = vmatpush.msra.mxu0 %v597
        %1385 = vmatmul.f32.gmra.mxu0 %v1367
        %v1386 = vpop.f32.mrf.mxu0
        %v1387 = vadd.f32 0.0, %v1386
        %1388 = vdwg.mxu0
        %1390 = vrot.lane.b32.xlu0 %v1189, 80
        %v1391 = vpop.permute.xlu0 %1390
        %v1392 = vsel %vm723, %v1391, 0
        %1394 = vmatpush.msra.mxu0 0.0
        %1395 = vmatpush.msra.mxu0 0.0
        %1396 = vmatpush.msra.mxu0 0.0
        %1397 = vmatpush.msra.mxu0 0.0
        %1398 = vmatpush.msra.mxu0 0.0
        %1399 = vmatpush.msra.mxu0 0.0
        %1400 = vmatpush.msra.mxu0 0.0
        %1401 = vmatpush.msra.mxu0 0.0
        %1402 = vmatpush.msra.mxu0 0.0
        %1403 = vmatpush.msra.mxu0 0.0
        %1404 = vmatpush.msra.mxu0 0.0
        %1405 = vmatpush.msra.mxu0 0.0
        %1406 = vmatpush.msra.mxu0 0.0
        %1407 = vmatpush.msra.mxu0 0.0
        %1408 = vmatpush.msra.mxu0 %v600
        %1409 = vmatpush.msra.mxu0 %v599
        %1410 = vmatmul.f32.gmra.mxu0 %v1392
        %v1411 = vpop.f32.mrf.mxu0
        %v1412 = vadd.f32 0.0, %v1411
        %1413 = vdwg.mxu0
        %1415 = vrot.lane.b32.xlu0 %v1190, 80
        %v1416 = vpop.permute.xlu0 %1415
        %v1417 = vsel %vm723, %v1416, 0
        %1419 = vmatpush.msra.mxu0 0.0
        %1420 = vmatpush.msra.mxu0 0.0
        %1421 = vmatpush.msra.mxu0 0.0
        %1422 = vmatpush.msra.mxu0 0.0
        %1423 = vmatpush.msra.mxu0 0.0
        %1424 = vmatpush.msra.mxu0 0.0
        %1425 = vmatpush.msra.mxu0 0.0
        %1426 = vmatpush.msra.mxu0 0.0
        %1427 = vmatpush.msra.mxu0 0.0
        %1428 = vmatpush.msra.mxu0 0.0
        %1429 = vmatpush.msra.mxu0 0.0
        %1430 = vmatpush.msra.mxu0 0.0
        %1431 = vmatpush.msra.mxu0 0.0
        %1432 = vmatpush.msra.mxu0 0.0
        %1433 = vmatpush.msra.mxu0 %v602
        %1434 = vmatpush.msra.mxu0 %v601
        %1435 = vmatmul.f32.gmra.mxu0 %v1417
        %v1436 = vpop.f32.mrf.mxu0
        %v1437 = vadd.f32 0.0, %v1436
        %1438 = vdwg.mxu0
        %v1439 = vadd.f32 %v1231, %v1262
        %v1440 = vadd.f32 %v1232, %v1287
        %v1441 = vadd.f32 %v1233, %v1312
        %v1442 = vadd.f32 %v1234, %v1337
        %v1443 = vadd.f32 %v1235, %v1362
        %v1444 = vadd.f32 %v1236, %v1387
        %v1445 = vadd.f32 %v1237, %v1412
        %v1446 = vadd.f32 %v1238, %v1437
        %v1447 = vxor.u32 %v1439, 2147483648
        %v1448 = vxor.u32 %v1440, 2147483648
        %v1449 = vxor.u32 %v1441, 2147483648
        %v1450 = vxor.u32 %v1442, 2147483648
        %v1451 = vxor.u32 %v1443, 2147483648
        %v1452 = vxor.u32 %v1444, 2147483648
        %v1453 = vxor.u32 %v1445, 2147483648
        %v1454 = vxor.u32 %v1446, 2147483648
        %v1455 = vmul.f32 %v1447, 1.442695
        %v1456 = vpow.pop %v1455
        %v1457 = vmul.f32 %v1448, 1.442695
        %v1458 = vpow.pop %v1457
        %v1459 = vmul.f32 %v1449, 1.442695
        %v1460 = vpow.pop %v1459
        %v1461 = vmul.f32 %v1450, 1.442695
        %v1462 = vpow.pop %v1461
        %v1463 = vmul.f32 %v1451, 1.442695
        %v1464 = vpow.pop %v1463
        %v1465 = vmul.f32 %v1452, 1.442695
        %v1466 = vpow.pop %v1465
        %v1467 = vmul.f32 %v1453, 1.442695
        %v1468 = vpow.pop %v1467
        %v1469 = vmul.f32 %v1454, 1.442695
        %v1470 = vpow.pop %v1469
        %v1471 = vadd.f32 %v1456, 1.0
        %v1472 = vadd.f32 %v1458, 1.0
        %v1473 = vadd.f32 %v1460, 1.0
        %v1474 = vadd.f32 %v1462, 1.0
        %v1475 = vadd.f32 %v1464, 1.0
        %v1476 = vadd.f32 %v1466, 1.0
        %v1477 = vadd.f32 %v1468, 1.0
        %v1478 = vadd.f32 %v1470, 1.0
        %v1479 = vrcp.pop %v1471
        %v1480 = vmul.f32 %v1471, %v1479
        %v1481 = vsub.f32 1.0, %v1480
        %v1482 = vmul.f32 %v1479, %v1481
        %v1483 = vadd.f32 %v1479, %v1482
        %vm1484 = vweird.f32 %v1471
        %vm1485 = vweird.f32 %v1479
        %vm1486 = vmor %vm1484, %vm1485
        %v1487 = vsel %vm1486, %v1479, %v1483
        %v1488 = vand.u32 2147483647, %v1471
        %vm1489 = vcmp.eq.f32.partialorder %v1488, 8.507059e+37
        %v1490 = vand.u32 %v1471, 2147483648
        %v1491 = vor.u32 1.1754944e-38, %v1490
        %v1492 = vsel %vm1489, %v1491, %v1487
        %v1493 = vmul.f32 1.0, %v1492
        %v1494 = vrcp.pop %v1472
        %v1495 = vmul.f32 %v1472, %v1494
        %v1496 = vsub.f32 1.0, %v1495
        %v1497 = vmul.f32 %v1494, %v1496
        %v1498 = vadd.f32 %v1494, %v1497
        %vm1499 = vweird.f32 %v1472
        %vm1500 = vweird.f32 %v1494
        %vm1501 = vmor %vm1499, %vm1500
        %v1502 = vsel %vm1501, %v1494, %v1498
        %v1503 = vand.u32 2147483647, %v1472
        %vm1504 = vcmp.eq.f32.partialorder %v1503, 8.507059e+37
        %v1505 = vand.u32 %v1472, 2147483648
        %v1506 = vor.u32 1.1754944e-38, %v1505
        %v1507 = vsel %vm1504, %v1506, %v1502
        %v1508 = vmul.f32 1.0, %v1507
        %v1509 = vrcp.pop %v1473
        %v1510 = vmul.f32 %v1473, %v1509
        %v1511 = vsub.f32 1.0, %v1510
        %v1512 = vmul.f32 %v1509, %v1511
        %v1513 = vadd.f32 %v1509, %v1512
        %vm1514 = vweird.f32 %v1473
        %vm1515 = vweird.f32 %v1509
        %vm1516 = vmor %vm1514, %vm1515
        %v1517 = vsel %vm1516, %v1509, %v1513
        %v1518 = vand.u32 2147483647, %v1473
        %vm1519 = vcmp.eq.f32.partialorder %v1518, 8.507059e+37
        %v1520 = vand.u32 %v1473, 2147483648
        %v1521 = vor.u32 1.1754944e-38, %v1520
        %v1522 = vsel %vm1519, %v1521, %v1517
        %v1523 = vmul.f32 1.0, %v1522
        %v1524 = vrcp.pop %v1474
        %v1525 = vmul.f32 %v1474, %v1524
        %v1526 = vsub.f32 1.0, %v1525
        %v1527 = vmul.f32 %v1524, %v1526
        %v1528 = vadd.f32 %v1524, %v1527
        %vm1529 = vweird.f32 %v1474
        %vm1530 = vweird.f32 %v1524
        %vm1531 = vmor %vm1529, %vm1530
        %v1532 = vsel %vm1531, %v1524, %v1528
        %v1533 = vand.u32 2147483647, %v1474
        %vm1534 = vcmp.eq.f32.partialorder %v1533, 8.507059e+37
        %v1535 = vand.u32 %v1474, 2147483648
        %v1536 = vor.u32 1.1754944e-38, %v1535
        %v1537 = vsel %vm1534, %v1536, %v1532
        %v1538 = vmul.f32 1.0, %v1537
        %v1539 = vrcp.pop %v1475
        %v1540 = vmul.f32 %v1475, %v1539
        %v1541 = vsub.f32 1.0, %v1540
        %v1542 = vmul.f32 %v1539, %v1541
        %v1543 = vadd.f32 %v1539, %v1542
        %vm1544 = vweird.f32 %v1475
        %vm1545 = vweird.f32 %v1539
        %vm1546 = vmor %vm1544, %vm1545
        %v1547 = vsel %vm1546, %v1539, %v1543
        %v1548 = vand.u32 2147483647, %v1475
        %vm1549 = vcmp.eq.f32.partialorder %v1548, 8.507059e+37
        %v1550 = vand.u32 %v1475, 2147483648
        %v1551 = vor.u32 1.1754944e-38, %v1550
        %v1552 = vsel %vm1549, %v1551, %v1547
        %v1553 = vmul.f32 1.0, %v1552
        %v1554 = vrcp.pop %v1476
        %v1555 = vmul.f32 %v1476, %v1554
        %v1556 = vsub.f32 1.0, %v1555
        %v1557 = vmul.f32 %v1554, %v1556
        %v1558 = vadd.f32 %v1554, %v1557
        %vm1559 = vweird.f32 %v1476
        %vm1560 = vweird.f32 %v1554
        %vm1561 = vmor %vm1559, %vm1560
        %v1562 = vsel %vm1561, %v1554, %v1558
        %v1563 = vand.u32 2147483647, %v1476
        %vm1564 = vcmp.eq.f32.partialorder %v1563, 8.507059e+37
        %v1565 = vand.u32 %v1476, 2147483648
        %v1566 = vor.u32 1.1754944e-38, %v1565
        %v1567 = vsel %vm1564, %v1566, %v1562
        %v1568 = vmul.f32 1.0, %v1567
        %v1569 = vrcp.pop %v1477
        %v1570 = vmul.f32 %v1477, %v1569
        %v1571 = vsub.f32 1.0, %v1570
        %v1572 = vmul.f32 %v1569, %v1571
        %v1573 = vadd.f32 %v1569, %v1572
        %vm1574 = vweird.f32 %v1477
        %vm1575 = vweird.f32 %v1569
        %vm1576 = vmor %vm1574, %vm1575
        %v1577 = vsel %vm1576, %v1569, %v1573
        %v1578 = vand.u32 2147483647, %v1477
        %vm1579 = vcmp.eq.f32.partialorder %v1578, 8.507059e+37
        %v1580 = vand.u32 %v1477, 2147483648
        %v1581 = vor.u32 1.1754944e-38, %v1580
        %v1582 = vsel %vm1579, %v1581, %v1577
        %v1583 = vmul.f32 1.0, %v1582
        %v1584 = vrcp.pop %v1478
        %v1585 = vmul.f32 %v1478, %v1584
        %v1586 = vsub.f32 1.0, %v1585
        %v1587 = vmul.f32 %v1584, %v1586
        %v1588 = vadd.f32 %v1584, %v1587
        %vm1589 = vweird.f32 %v1478
        %vm1590 = vweird.f32 %v1584
        %vm1591 = vmor %vm1589, %vm1590
        %v1592 = vsel %vm1591, %v1584, %v1588
        %v1593 = vand.u32 2147483647, %v1478
        %vm1594 = vcmp.eq.f32.partialorder %v1593, 8.507059e+37
        %v1595 = vand.u32 %v1478, 2147483648
        %v1596 = vor.u32 1.1754944e-38, %v1595
        %v1597 = vsel %vm1594, %v1596, %v1592
        %v1598 = vmul.f32 1.0, %v1597
        %v1599 = vtanh.pop %v1439
        %v1600 = vtanh.pop %v1440
        %v1601 = vtanh.pop %v1441
        %v1602 = vtanh.pop %v1442
        %v1603 = vtanh.pop %v1443
        %v1604 = vtanh.pop %v1444
        %v1605 = vtanh.pop %v1445
        %v1606 = vtanh.pop %v1446
        %v1607 = vmul.f32 %v1493, %v1135
        %v1608 = vmul.f32 %v1508, %v1136
        %v1609 = vmul.f32 %v1523, %v1137
        %v1610 = vmul.f32 %v1538, %v1138
        %v1611 = vmul.f32 %v1553, %v1139
        %v1612 = vmul.f32 %v1568, %v1140
        %v1613 = vmul.f32 %v1583, %v1141
        %v1614 = vmul.f32 %v1598, %v1142
        %1623 = vrot.lane.b32.xlu0 %v1599, 96
        %v1624 = vpop.permute.xlu0 %1623
        %1625 = vrot.lane.b32.xlu0 %v1600, 96
        %v1626 = vpop.permute.xlu0 %1625
        %1627 = vrot.lane.b32.xlu0 %v1601, 96
        %v1628 = vpop.permute.xlu0 %1627
        %1629 = vrot.lane.b32.xlu0 %v1602, 96
        %v1630 = vpop.permute.xlu0 %1629
        %1631 = vrot.lane.b32.xlu0 %v1603, 96
        %v1632 = vpop.permute.xlu0 %1631
        %1633 = vrot.lane.b32.xlu0 %v1604, 96
        %v1634 = vpop.permute.xlu0 %1633
        %1635 = vrot.lane.b32.xlu0 %v1605, 96
        %v1636 = vpop.permute.xlu0 %1635
        %1637 = vrot.lane.b32.xlu0 %v1606, 96
        %v1638 = vpop.permute.xlu0 %1637
        %v1647 = vmul.f32 %v1493, %v1624
        %v1648 = vmul.f32 %v1508, %v1626
        %v1649 = vmul.f32 %v1523, %v1628
        %v1650 = vmul.f32 %v1538, %v1630
        %v1651 = vmul.f32 %v1553, %v1632
        %v1652 = vmul.f32 %v1568, %v1634
        %v1653 = vmul.f32 %v1583, %v1636
        %v1654 = vmul.f32 %v1598, %v1638
        %1663 = vrot.lane.b32.xlu0 %v1647, 16
        %v1664 = vpop.permute.xlu0 %1663
        %1665 = vrot.lane.b32.xlu0 %v1648, 16
        %v1666 = vpop.permute.xlu0 %1665
        %1667 = vrot.lane.b32.xlu0 %v1649, 16
        %v1668 = vpop.permute.xlu0 %1667
        %1669 = vrot.lane.b32.xlu0 %v1650, 16
        %v1670 = vpop.permute.xlu0 %1669
        %1671 = vrot.lane.b32.xlu0 %v1651, 16
        %v1672 = vpop.permute.xlu0 %1671
        %1673 = vrot.lane.b32.xlu0 %v1652, 16
        %v1674 = vpop.permute.xlu0 %1673
        %1675 = vrot.lane.b32.xlu0 %v1653, 16
        %v1676 = vpop.permute.xlu0 %1675
        %1677 = vrot.lane.b32.xlu0 %v1654, 16
        %v1678 = vpop.permute.xlu0 %1677
        %v1687 = vadd.f32 %v1607, %v1664
        %v1688 = vadd.f32 %v1608, %v1666
        %v1689 = vadd.f32 %v1609, %v1668
        %v1690 = vadd.f32 %v1610, %v1670
        %v1691 = vadd.f32 %v1611, %v1672
        %v1692 = vadd.f32 %v1612, %v1674
        %v1693 = vadd.f32 %v1613, %v1676
        %v1694 = vadd.f32 %v1614, %v1678
        %v1695 = vtanh.pop %v1687
        %v1696 = vtanh.pop %v1688
        %v1697 = vtanh.pop %v1689
        %v1698 = vtanh.pop %v1690
        %v1699 = vtanh.pop %v1691
        %v1700 = vtanh.pop %v1692
        %v1701 = vtanh.pop %v1693
        %v1702 = vtanh.pop %v1694
        %1711 = vrot.lane.b32.xlu0 %v1695, 32
        %v1712 = vpop.permute.xlu0 %1711
        %1713 = vrot.lane.b32.xlu0 %v1696, 32
        %v1714 = vpop.permute.xlu0 %1713
        %1715 = vrot.lane.b32.xlu0 %v1697, 32
        %v1716 = vpop.permute.xlu0 %1715
        %1717 = vrot.lane.b32.xlu0 %v1698, 32
        %v1718 = vpop.permute.xlu0 %1717
        %1719 = vrot.lane.b32.xlu0 %v1699, 32
        %v1720 = vpop.permute.xlu0 %1719
        %1721 = vrot.lane.b32.xlu0 %v1700, 32
        %v1722 = vpop.permute.xlu0 %1721
        %1723 = vrot.lane.b32.xlu0 %v1701, 32
        %v1724 = vpop.permute.xlu0 %1723
        %1725 = vrot.lane.b32.xlu0 %v1702, 32
        %v1726 = vpop.permute.xlu0 %1725
        %v1735 = vmul.f32 %v1493, %v1712
        %v1736 = vmul.f32 %v1508, %v1714
        %v1737 = vmul.f32 %v1523, %v1716
        %v1738 = vmul.f32 %v1538, %v1718
        %v1739 = vmul.f32 %v1553, %v1720
        %v1740 = vmul.f32 %v1568, %v1722
        %v1741 = vmul.f32 %v1583, %v1724
        %v1742 = vmul.f32 %v1598, %v1726
        %1743 = vset.pattern.permute.xlu0 2
        %1744 = vperm.xlu0 %1743, %v579
        %v1745 = vpop.permute.xlu0 %1744
        %1747 = vset.pattern.permute.xlu0 2
        %1748 = vperm.xlu0 %1747, %v580
        %v1749 = vpop.permute.xlu0 %1748
        %1751 = vset.pattern.permute.xlu0 2
        %1752 = vperm.xlu0 %1751, %v581
        %v1753 = vpop.permute.xlu0 %1752
        %1755 = vset.pattern.permute.xlu0 2
        %1756 = vperm.xlu0 %1755, %v582
        %v1757 = vpop.permute.xlu0 %1756
        %1759 = vset.pattern.permute.xlu0 2
        %1760 = vperm.xlu0 %1759, %v583
        %v1761 = vpop.permute.xlu0 %1760
        %1763 = vset.pattern.permute.xlu0 2
        %1764 = vperm.xlu0 %1763, %v584
        %v1765 = vpop.permute.xlu0 %1764
        %1767 = vset.pattern.permute.xlu0 2
        %1768 = vperm.xlu0 %1767, %v585
        %v1769 = vpop.permute.xlu0 %1768
        %1771 = vset.pattern.permute.xlu0 2
        %1772 = vperm.xlu0 %1771, %v586
        %v1773 = vpop.permute.xlu0 %1772
        %v1775 = vmul.f32 %v1745, %v619
        %v1776 = vmul.f32 %v1749, %v620
        %v1777 = vmul.f32 %v1753, %v621
        %v1778 = vmul.f32 %v1757, %v622
        %v1779 = vmul.f32 %v1761, %v623
        %v1780 = vmul.f32 %v1765, %v624
        %v1781 = vmul.f32 %v1769, %v625
        %v1782 = vmul.f32 %v1773, %v626
        %v1783 = vadd.f32 %v1775, %v651
        %v1784 = vadd.f32 %v1776, %v652
        %v1785 = vadd.f32 %v1777, %v653
        %v1786 = vadd.f32 %v1778, %v654
        %v1787 = vadd.f32 %v1779, %v655
        %v1788 = vadd.f32 %v1780, %v656
        %v1789 = vadd.f32 %v1781, %v657
        %v1790 = vadd.f32 %v1782, %v658
        %1792 = vrot.lane.b32.xlu0 %v1735, 80
        %v1793 = vpop.permute.xlu0 %1792
        %v1794 = vsel %vm723, %v1793, 0
        %1796 = vmatpush.msra.mxu0 0.0
        %1797 = vmatpush.msra.mxu0 0.0
        %1798 = vmatpush.msra.mxu0 0.0
        %1799 = vmatpush.msra.mxu0 0.0
        %1800 = vmatpush.msra.mxu0 0.0
        %1801 = vmatpush.msra.mxu0 0.0
        %1802 = vmatpush.msra.mxu0 0.0
        %1803 = vmatpush.msra.mxu0 0.0
        %1804 = vmatpush.msra.mxu0 0.0
        %1805 = vmatpush.msra.mxu0 0.0
        %1806 = vmatpush.msra.mxu0 0.0
        %1807 = vmatpush.msra.mxu0 0.0
        %1808 = vmatpush.msra.mxu0 0.0
        %1809 = vmatpush.msra.mxu0 0.0
        %1810 = vmatpush.msra.mxu0 %v588
        %1811 = vmatpush.msra.mxu0 %v587
        %1812 = vmatmul.f32.gmra.mxu0 %v1794
        %v1813 = vpop.f32.mrf.mxu0
        %v1814 = vadd.f32 0.0, %v1813
        %1815 = vdwg.mxu0
        %1817 = vrot.lane.b32.xlu0 %v1736, 80
        %v1818 = vpop.permute.xlu0 %1817
        %v1819 = vsel %vm723, %v1818, 0
        %1821 = vmatpush.msra.mxu0 0.0
        %1822 = vmatpush.msra.mxu0 0.0
        %1823 = vmatpush.msra.mxu0 0.0
        %1824 = vmatpush.msra.mxu0 0.0
        %1825 = vmatpush.msra.mxu0 0.0
        %1826 = vmatpush.msra.mxu0 0.0
        %1827 = vmatpush.msra.mxu0 0.0
        %1828 = vmatpush.msra.mxu0 0.0
        %1829 = vmatpush.msra.mxu0 0.0
        %1830 = vmatpush.msra.mxu0 0.0
        %1831 = vmatpush.msra.mxu0 0.0
        %1832 = vmatpush.msra.mxu0 0.0
        %1833 = vmatpush.msra.mxu0 0.0
        %1834 = vmatpush.msra.mxu0 0.0
        %1835 = vmatpush.msra.mxu0 %v590
        %1836 = vmatpush.msra.mxu0 %v589
        %1837 = vmatmul.f32.gmra.mxu0 %v1819
        %v1838 = vpop.f32.mrf.mxu0
        %v1839 = vadd.f32 0.0, %v1838
        %1840 = vdwg.mxu0
        %1842 = vrot.lane.b32.xlu0 %v1737, 80
        %v1843 = vpop.permute.xlu0 %1842
        %v1844 = vsel %vm723, %v1843, 0
        %1846 = vmatpush.msra.mxu0 0.0
        %1847 = vmatpush.msra.mxu0 0.0
        %1848 = vmatpush.msra.mxu0 0.0
        %1849 = vmatpush.msra.mxu0 0.0
        %1850 = vmatpush.msra.mxu0 0.0
        %1851 = vmatpush.msra.mxu0 0.0
        %1852 = vmatpush.msra.mxu0 0.0
        %1853 = vmatpush.msra.mxu0 0.0
        %1854 = vmatpush.msra.mxu0 0.0
        %1855 = vmatpush.msra.mxu0 0.0
        %1856 = vmatpush.msra.mxu0 0.0
        %1857 = vmatpush.msra.mxu0 0.0
        %1858 = vmatpush.msra.mxu0 0.0
        %1859 = vmatpush.msra.mxu0 0.0
        %1860 = vmatpush.msra.mxu0 %v592
        %1861 = vmatpush.msra.mxu0 %v591
        %1862 = vmatmul.f32.gmra.mxu0 %v1844
        %v1863 = vpop.f32.mrf.mxu0
        %v1864 = vadd.f32 0.0, %v1863
        %1865 = vdwg.mxu0
        %1867 = vrot.lane.b32.xlu0 %v1738, 80
        %v1868 = vpop.permute.xlu0 %1867
        %v1869 = vsel %vm723, %v1868, 0
        %1871 = vmatpush.msra.mxu0 0.0
        %1872 = vmatpush.msra.mxu0 0.0
        %1873 = vmatpush.msra.mxu0 0.0
        %1874 = vmatpush.msra.mxu0 0.0
        %1875 = vmatpush.msra.mxu0 0.0
        %1876 = vmatpush.msra.mxu0 0.0
        %1877 = vmatpush.msra.mxu0 0.0
        %1878 = vmatpush.msra.mxu0 0.0
        %1879 = vmatpush.msra.mxu0 0.0
        %1880 = vmatpush.msra.mxu0 0.0
        %1881 = vmatpush.msra.mxu0 0.0
        %1882 = vmatpush.msra.mxu0 0.0
        %1883 = vmatpush.msra.mxu0 0.0
        %1884 = vmatpush.msra.mxu0 0.0
        %1885 = vmatpush.msra.mxu0 %v594
        %1886 = vmatpush.msra.mxu0 %v593
        %1887 = vmatmul.f32.gmra.mxu0 %v1869
        %v1888 = vpop.f32.mrf.mxu0
        %v1889 = vadd.f32 0.0, %v1888
        %1890 = vdwg.mxu0
        %1892 = vrot.lane.b32.xlu0 %v1739, 80
        %v1893 = vpop.permute.xlu0 %1892
        %v1894 = vsel %vm723, %v1893, 0
        %1896 = vmatpush.msra.mxu0 0.0
        %1897 = vmatpush.msra.mxu0 0.0
        %1898 = vmatpush.msra.mxu0 0.0
        %1899 = vmatpush.msra.mxu0 0.0
        %1900 = vmatpush.msra.mxu0 0.0
        %1901 = vmatpush.msra.mxu0 0.0
        %1902 = vmatpush.msra.mxu0 0.0
        %1903 = vmatpush.msra.mxu0 0.0
        %1904 = vmatpush.msra.mxu0 0.0
        %1905 = vmatpush.msra.mxu0 0.0
        %1906 = vmatpush.msra.mxu0 0.0
        %1907 = vmatpush.msra.mxu0 0.0
        %1908 = vmatpush.msra.mxu0 0.0
        %1909 = vmatpush.msra.mxu0 0.0
        %1910 = vmatpush.msra.mxu0 %v596
        %1911 = vmatpush.msra.mxu0 %v595
        %1912 = vmatmul.f32.gmra.mxu0 %v1894
        %v1913 = vpop.f32.mrf.mxu0
        %v1914 = vadd.f32 0.0, %v1913
        %1915 = vdwg.mxu0
        %1917 = vrot.lane.b32.xlu0 %v1740, 80
        %v1918 = vpop.permute.xlu0 %1917
        %v1919 = vsel %vm723, %v1918, 0
        %1921 = vmatpush.msra.mxu0 0.0
        %1922 = vmatpush.msra.mxu0 0.0
        %1923 = vmatpush.msra.mxu0 0.0
        %1924 = vmatpush.msra.mxu0 0.0
        %1925 = vmatpush.msra.mxu0 0.0
        %1926 = vmatpush.msra.mxu0 0.0
        %1927 = vmatpush.msra.mxu0 0.0
        %1928 = vmatpush.msra.mxu0 0.0
        %1929 = vmatpush.msra.mxu0 0.0
        %1930 = vmatpush.msra.mxu0 0.0
        %1931 = vmatpush.msra.mxu0 0.0
        %1932 = vmatpush.msra.mxu0 0.0
        %1933 = vmatpush.msra.mxu0 0.0
        %1934 = vmatpush.msra.mxu0 0.0
        %1935 = vmatpush.msra.mxu0 %v598
        %1936 = vmatpush.msra.mxu0 %v597
        %1937 = vmatmul.f32.gmra.mxu0 %v1919
        %v1938 = vpop.f32.mrf.mxu0
        %v1939 = vadd.f32 0.0, %v1938
        %1940 = vdwg.mxu0
        %1942 = vrot.lane.b32.xlu0 %v1741, 80
        %v1943 = vpop.permute.xlu0 %1942
        %v1944 = vsel %vm723, %v1943, 0
        %1946 = vmatpush.msra.mxu0 0.0
        %1947 = vmatpush.msra.mxu0 0.0
        %1948 = vmatpush.msra.mxu0 0.0
        %1949 = vmatpush.msra.mxu0 0.0
        %1950 = vmatpush.msra.mxu0 0.0
        %1951 = vmatpush.msra.mxu0 0.0
        %1952 = vmatpush.msra.mxu0 0.0
        %1953 = vmatpush.msra.mxu0 0.0
        %1954 = vmatpush.msra.mxu0 0.0
        %1955 = vmatpush.msra.mxu0 0.0
        %1956 = vmatpush.msra.mxu0 0.0
        %1957 = vmatpush.msra.mxu0 0.0
        %1958 = vmatpush.msra.mxu0 0.0
        %1959 = vmatpush.msra.mxu0 0.0
        %1960 = vmatpush.msra.mxu0 %v600
        %1961 = vmatpush.msra.mxu0 %v599
        %1962 = vmatmul.f32.gmra.mxu0 %v1944
        %v1963 = vpop.f32.mrf.mxu0
        %v1964 = vadd.f32 0.0, %v1963
        %1965 = vdwg.mxu0
        %1967 = vrot.lane.b32.xlu0 %v1742, 80
        %v1968 = vpop.permute.xlu0 %1967
        %v1969 = vsel %vm723, %v1968, 0
        %1971 = vmatpush.msra.mxu0 0.0
        %1972 = vmatpush.msra.mxu0 0.0
        %1973 = vmatpush.msra.mxu0 0.0
        %1974 = vmatpush.msra.mxu0 0.0
        %1975 = vmatpush.msra.mxu0 0.0
        %1976 = vmatpush.msra.mxu0 0.0
        %1977 = vmatpush.msra.mxu0 0.0
        %1978 = vmatpush.msra.mxu0 0.0
        %1979 = vmatpush.msra.mxu0 0.0
        %1980 = vmatpush.msra.mxu0 0.0
        %1981 = vmatpush.msra.mxu0 0.0
        %1982 = vmatpush.msra.mxu0 0.0
        %1983 = vmatpush.msra.mxu0 0.0
        %1984 = vmatpush.msra.mxu0 0.0
        %1985 = vmatpush.msra.mxu0 %v602
        %1986 = vmatpush.msra.mxu0 %v601
        %1987 = vmatmul.f32.gmra.mxu0 %v1969
        %v1988 = vpop.f32.mrf.mxu0
        %v1989 = vadd.f32 0.0, %v1988
        %1990 = vdwg.mxu0
        %v1991 = vadd.f32 %v1783, %v1814
        %v1992 = vadd.f32 %v1784, %v1839
        %v1993 = vadd.f32 %v1785, %v1864
        %v1994 = vadd.f32 %v1786, %v1889
        %v1995 = vadd.f32 %v1787, %v1914
        %v1996 = vadd.f32 %v1788, %v1939
        %v1997 = vadd.f32 %v1789, %v1964
        %v1998 = vadd.f32 %v1790, %v1989
        %v1999 = vxor.u32 %v1991, 2147483648
        %v2000 = vxor.u32 %v1992, 2147483648
        %v2001 = vxor.u32 %v1993, 2147483648
        %v2002 = vxor.u32 %v1994, 2147483648
        %v2003 = vxor.u32 %v1995, 2147483648
        %v2004 = vxor.u32 %v1996, 2147483648
        %v2005 = vxor.u32 %v1997, 2147483648
        %v2006 = vxor.u32 %v1998, 2147483648
        %v2007 = vmul.f32 %v1999, 1.442695
        %v2008 = vpow.pop %v2007
        %v2009 = vmul.f32 %v2000, 1.442695
        %v2010 = vpow.pop %v2009
        %v2011 = vmul.f32 %v2001, 1.442695
        %v2012 = vpow.pop %v2011
        %v2013 = vmul.f32 %v2002, 1.442695
        %v2014 = vpow.pop %v2013
        %v2015 = vmul.f32 %v2003, 1.442695
        %v2016 = vpow.pop %v2015
        %v2017 = vmul.f32 %v2004, 1.442695
        %v2018 = vpow.pop %v2017
        %v2019 = vmul.f32 %v2005, 1.442695
        %v2020 = vpow.pop %v2019
        %v2021 = vmul.f32 %v2006, 1.442695
        %v2022 = vpow.pop %v2021
        %v2023 = vadd.f32 %v2008, 1.0
        %v2024 = vadd.f32 %v2010, 1.0
        %v2025 = vadd.f32 %v2012, 1.0
        %v2026 = vadd.f32 %v2014, 1.0
        %v2027 = vadd.f32 %v2016, 1.0
        %v2028 = vadd.f32 %v2018, 1.0
        %v2029 = vadd.f32 %v2020, 1.0
        %v2030 = vadd.f32 %v2022, 1.0
        %v2031 = vrcp.pop %v2023
        %v2032 = vmul.f32 %v2023, %v2031
        %v2033 = vsub.f32 1.0, %v2032
        %v2034 = vmul.f32 %v2031, %v2033
        %v2035 = vadd.f32 %v2031, %v2034
        %vm2036 = vweird.f32 %v2023
        %vm2037 = vweird.f32 %v2031
        %vm2038 = vmor %vm2036, %vm2037
        %v2039 = vsel %vm2038, %v2031, %v2035
        %v2040 = vand.u32 2147483647, %v2023
        %vm2041 = vcmp.eq.f32.partialorder %v2040, 8.507059e+37
        %v2042 = vand.u32 %v2023, 2147483648
        %v2043 = vor.u32 1.1754944e-38, %v2042
        %v2044 = vsel %vm2041, %v2043, %v2039
        %v2045 = vmul.f32 1.0, %v2044
        %v2046 = vrcp.pop %v2024
        %v2047 = vmul.f32 %v2024, %v2046
        %v2048 = vsub.f32 1.0, %v2047
        %v2049 = vmul.f32 %v2046, %v2048
        %v2050 = vadd.f32 %v2046, %v2049
        %vm2051 = vweird.f32 %v2024
        %vm2052 = vweird.f32 %v2046
        %vm2053 = vmor %vm2051, %vm2052
        %v2054 = vsel %vm2053, %v2046, %v2050
        %v2055 = vand.u32 2147483647, %v2024
        %vm2056 = vcmp.eq.f32.partialorder %v2055, 8.507059e+37
        %v2057 = vand.u32 %v2024, 2147483648
        %v2058 = vor.u32 1.1754944e-38, %v2057
        %v2059 = vsel %vm2056, %v2058, %v2054
        %v2060 = vmul.f32 1.0, %v2059
        %v2061 = vrcp.pop %v2025
        %v2062 = vmul.f32 %v2025, %v2061
        %v2063 = vsub.f32 1.0, %v2062
        %v2064 = vmul.f32 %v2061, %v2063
        %v2065 = vadd.f32 %v2061, %v2064
        %vm2066 = vweird.f32 %v2025
        %vm2067 = vweird.f32 %v2061
        %vm2068 = vmor %vm2066, %vm2067
        %v2069 = vsel %vm2068, %v2061, %v2065
        %v2070 = vand.u32 2147483647, %v2025
        %vm2071 = vcmp.eq.f32.partialorder %v2070, 8.507059e+37
        %v2072 = vand.u32 %v2025, 2147483648
        %v2073 = vor.u32 1.1754944e-38, %v2072
        %v2074 = vsel %vm2071, %v2073, %v2069
        %v2075 = vmul.f32 1.0, %v2074
        %v2076 = vrcp.pop %v2026
        %v2077 = vmul.f32 %v2026, %v2076
        %v2078 = vsub.f32 1.0, %v2077
        %v2079 = vmul.f32 %v2076, %v2078
        %v2080 = vadd.f32 %v2076, %v2079
        %vm2081 = vweird.f32 %v2026
        %vm2082 = vweird.f32 %v2076
        %vm2083 = vmor %vm2081, %vm2082
        %v2084 = vsel %vm2083, %v2076, %v2080
        %v2085 = vand.u32 2147483647, %v2026
        %vm2086 = vcmp.eq.f32.partialorder %v2085, 8.507059e+37
        %v2087 = vand.u32 %v2026, 2147483648
        %v2088 = vor.u32 1.1754944e-38, %v2087
        %v2089 = vsel %vm2086, %v2088, %v2084
        %v2090 = vmul.f32 1.0, %v2089
        %v2091 = vrcp.pop %v2027
        %v2092 = vmul.f32 %v2027, %v2091
        %v2093 = vsub.f32 1.0, %v2092
        %v2094 = vmul.f32 %v2091, %v2093
        %v2095 = vadd.f32 %v2091, %v2094
        %vm2096 = vweird.f32 %v2027
        %vm2097 = vweird.f32 %v2091
        %vm2098 = vmor %vm2096, %vm2097
        %v2099 = vsel %vm2098, %v2091, %v2095
        %v2100 = vand.u32 2147483647, %v2027
        %vm2101 = vcmp.eq.f32.partialorder %v2100, 8.507059e+37
        %v2102 = vand.u32 %v2027, 2147483648
        %v2103 = vor.u32 1.1754944e-38, %v2102
        %v2104 = vsel %vm2101, %v2103, %v2099
        %v2105 = vmul.f32 1.0, %v2104
        %v2106 = vrcp.pop %v2028
        %v2107 = vmul.f32 %v2028, %v2106
        %v2108 = vsub.f32 1.0, %v2107
        %v2109 = vmul.f32 %v2106, %v2108
        %v2110 = vadd.f32 %v2106, %v2109
        %vm2111 = vweird.f32 %v2028
        %vm2112 = vweird.f32 %v2106
        %vm2113 = vmor %vm2111, %vm2112
        %v2114 = vsel %vm2113, %v2106, %v2110
        %v2115 = vand.u32 2147483647, %v2028
        %vm2116 = vcmp.eq.f32.partialorder %v2115, 8.507059e+37
        %v2117 = vand.u32 %v2028, 2147483648
        %v2118 = vor.u32 1.1754944e-38, %v2117
        %v2119 = vsel %vm2116, %v2118, %v2114
        %v2120 = vmul.f32 1.0, %v2119
        %v2121 = vrcp.pop %v2029
        %v2122 = vmul.f32 %v2029, %v2121
        %v2123 = vsub.f32 1.0, %v2122
        %v2124 = vmul.f32 %v2121, %v2123
        %v2125 = vadd.f32 %v2121, %v2124
        %vm2126 = vweird.f32 %v2029
        %vm2127 = vweird.f32 %v2121
        %vm2128 = vmor %vm2126, %vm2127
        %v2129 = vsel %vm2128, %v2121, %v2125
        %v2130 = vand.u32 2147483647, %v2029
        %vm2131 = vcmp.eq.f32.partialorder %v2130, 8.507059e+37
        %v2132 = vand.u32 %v2029, 2147483648
        %v2133 = vor.u32 1.1754944e-38, %v2132
        %v2134 = vsel %vm2131, %v2133, %v2129
        %v2135 = vmul.f32 1.0, %v2134
        %v2136 = vrcp.pop %v2030
        %v2137 = vmul.f32 %v2030, %v2136
        %v2138 = vsub.f32 1.0, %v2137
        %v2139 = vmul.f32 %v2136, %v2138
        %v2140 = vadd.f32 %v2136, %v2139
        %vm2141 = vweird.f32 %v2030
        %vm2142 = vweird.f32 %v2136
        %vm2143 = vmor %vm2141, %vm2142
        %v2144 = vsel %vm2143, %v2136, %v2140
        %v2145 = vand.u32 2147483647, %v2030
        %vm2146 = vcmp.eq.f32.partialorder %v2145, 8.507059e+37
        %v2147 = vand.u32 %v2030, 2147483648
        %v2148 = vor.u32 1.1754944e-38, %v2147
        %v2149 = vsel %vm2146, %v2148, %v2144
        %v2150 = vmul.f32 1.0, %v2149
        %v2151 = vtanh.pop %v1991
        %v2152 = vtanh.pop %v1992
        %v2153 = vtanh.pop %v1993
        %v2154 = vtanh.pop %v1994
        %v2155 = vtanh.pop %v1995
        %v2156 = vtanh.pop %v1996
        %v2157 = vtanh.pop %v1997
        %v2158 = vtanh.pop %v1998
        %v2159 = vmul.f32 %v2045, %v1687
        %v2160 = vmul.f32 %v2060, %v1688
        %v2161 = vmul.f32 %v2075, %v1689
        %v2162 = vmul.f32 %v2090, %v1690
        %v2163 = vmul.f32 %v2105, %v1691
        %v2164 = vmul.f32 %v2120, %v1692
        %v2165 = vmul.f32 %v2135, %v1693
        %v2166 = vmul.f32 %v2150, %v1694
        %2175 = vrot.lane.b32.xlu0 %v2151, 96
        %v2176 = vpop.permute.xlu0 %2175
        %2177 = vrot.lane.b32.xlu0 %v2152, 96
        %v2178 = vpop.permute.xlu0 %2177
        %2179 = vrot.lane.b32.xlu0 %v2153, 96
        %v2180 = vpop.permute.xlu0 %2179
        %2181 = vrot.lane.b32.xlu0 %v2154, 96
        %v2182 = vpop.permute.xlu0 %2181
        %2183 = vrot.lane.b32.xlu0 %v2155, 96
        %v2184 = vpop.permute.xlu0 %2183
        %2185 = vrot.lane.b32.xlu0 %v2156, 96
        %v2186 = vpop.permute.xlu0 %2185
        %2187 = vrot.lane.b32.xlu0 %v2157, 96
        %v2188 = vpop.permute.xlu0 %2187
        %2189 = vrot.lane.b32.xlu0 %v2158, 96
        %v2190 = vpop.permute.xlu0 %2189
        %v2199 = vmul.f32 %v2045, %v2176
        %v2200 = vmul.f32 %v2060, %v2178
        %v2201 = vmul.f32 %v2075, %v2180
        %v2202 = vmul.f32 %v2090, %v2182
        %v2203 = vmul.f32 %v2105, %v2184
        %v2204 = vmul.f32 %v2120, %v2186
        %v2205 = vmul.f32 %v2135, %v2188
        %v2206 = vmul.f32 %v2150, %v2190
        %2215 = vrot.lane.b32.xlu0 %v2199, 16
        %v2216 = vpop.permute.xlu0 %2215
        %2217 = vrot.lane.b32.xlu0 %v2200, 16
        %v2218 = vpop.permute.xlu0 %2217
        %2219 = vrot.lane.b32.xlu0 %v2201, 16
        %v2220 = vpop.permute.xlu0 %2219
        %2221 = vrot.lane.b32.xlu0 %v2202, 16
        %v2222 = vpop.permute.xlu0 %2221
        %2223 = vrot.lane.b32.xlu0 %v2203, 16
        %v2224 = vpop.permute.xlu0 %2223
        %2225 = vrot.lane.b32.xlu0 %v2204, 16
        %v2226 = vpop.permute.xlu0 %2225
        %2227 = vrot.lane.b32.xlu0 %v2205, 16
        %v2228 = vpop.permute.xlu0 %2227
        %2229 = vrot.lane.b32.xlu0 %v2206, 16
        %v2230 = vpop.permute.xlu0 %2229
        %v2239 = vadd.f32 %v2159, %v2216
        %v2240 = vadd.f32 %v2160, %v2218
        %v2241 = vadd.f32 %v2161, %v2220
        %v2242 = vadd.f32 %v2162, %v2222
        %v2243 = vadd.f32 %v2163, %v2224
        %v2244 = vadd.f32 %v2164, %v2226
        %v2245 = vadd.f32 %v2165, %v2228
        %v2246 = vadd.f32 %v2166, %v2230
        %v2247 = vtanh.pop %v2239
        %v2248 = vtanh.pop %v2240
        %v2249 = vtanh.pop %v2241
        %v2250 = vtanh.pop %v2242
        %v2251 = vtanh.pop %v2243
        %v2252 = vtanh.pop %v2244
        %v2253 = vtanh.pop %v2245
        %v2254 = vtanh.pop %v2246
        %2263 = vrot.lane.b32.xlu0 %v2247, 32
        %v2264 = vpop.permute.xlu0 %2263
        %2265 = vrot.lane.b32.xlu0 %v2248, 32
        %v2266 = vpop.permute.xlu0 %2265
        %2267 = vrot.lane.b32.xlu0 %v2249, 32
        %v2268 = vpop.permute.xlu0 %2267
        %2269 = vrot.lane.b32.xlu0 %v2250, 32
        %v2270 = vpop.permute.xlu0 %2269
        %2271 = vrot.lane.b32.xlu0 %v2251, 32
        %v2272 = vpop.permute.xlu0 %2271
        %2273 = vrot.lane.b32.xlu0 %v2252, 32
        %v2274 = vpop.permute.xlu0 %2273
        %2275 = vrot.lane.b32.xlu0 %v2253, 32
        %v2276 = vpop.permute.xlu0 %2275
        %2277 = vrot.lane.b32.xlu0 %v2254, 32
        %v2278 = vpop.permute.xlu0 %2277
        %v2287 = vmul.f32 %v2045, %v2264
        %v2288 = vmul.f32 %v2060, %v2266
        %v2289 = vmul.f32 %v2075, %v2268
        %v2290 = vmul.f32 %v2090, %v2270
        %v2291 = vmul.f32 %v2105, %v2272
        %v2292 = vmul.f32 %v2120, %v2274
        %v2293 = vmul.f32 %v2135, %v2276
        %v2294 = vmul.f32 %v2150, %v2278
        %2295 = vset.pattern.permute.xlu0 3
        %2296 = vperm.xlu0 %2295, %v579
        %v2297 = vpop.permute.xlu0 %2296
        %2299 = vset.pattern.permute.xlu0 3
        %2300 = vperm.xlu0 %2299, %v580
        %v2301 = vpop.permute.xlu0 %2300
        %2303 = vset.pattern.permute.xlu0 3
        %2304 = vperm.xlu0 %2303, %v581
        %v2305 = vpop.permute.xlu0 %2304
        %2307 = vset.pattern.permute.xlu0 3
        %2308 = vperm.xlu0 %2307, %v582
        %v2309 = vpop.permute.xlu0 %2308
        %2311 = vset.pattern.permute.xlu0 3
        %2312 = vperm.xlu0 %2311, %v583
        %v2313 = vpop.permute.xlu0 %2312
        %2315 = vset.pattern.permute.xlu0 3
        %2316 = vperm.xlu0 %2315, %v584
        %v2317 = vpop.permute.xlu0 %2316
        %2319 = vset.pattern.permute.xlu0 3
        %2320 = vperm.xlu0 %2319, %v585
        %v2321 = vpop.permute.xlu0 %2320
        %2323 = vset.pattern.permute.xlu0 3
        %2324 = vperm.xlu0 %2323, %v586
        %v2325 = vpop.permute.xlu0 %2324
        %v2327 = vmul.f32 %v2297, %v619
        %v2328 = vmul.f32 %v2301, %v620
        %v2329 = vmul.f32 %v2305, %v621
        %v2330 = vmul.f32 %v2309, %v622
        %v2331 = vmul.f32 %v2313, %v623
        %v2332 = vmul.f32 %v2317, %v624
        %v2333 = vmul.f32 %v2321, %v625
        %v2334 = vmul.f32 %v2325, %v626
        %v2335 = vadd.f32 %v2327, %v651
        %v2336 = vadd.f32 %v2328, %v652
        %v2337 = vadd.f32 %v2329, %v653
        %v2338 = vadd.f32 %v2330, %v654
        %v2339 = vadd.f32 %v2331, %v655
        %v2340 = vadd.f32 %v2332, %v656
        %v2341 = vadd.f32 %v2333, %v657
        %v2342 = vadd.f32 %v2334, %v658
        %2344 = vrot.lane.b32.xlu0 %v2287, 80
        %v2345 = vpop.permute.xlu0 %2344
        %v2346 = vsel %vm723, %v2345, 0
        %2348 = vmatpush.msra.mxu0 0.0
        %2349 = vmatpush.msra.mxu0 0.0
        %2350 = vmatpush.msra.mxu0 0.0
        %2351 = vmatpush.msra.mxu0 0.0
        %2352 = vmatpush.msra.mxu0 0.0
        %2353 = vmatpush.msra.mxu0 0.0
        %2354 = vmatpush.msra.mxu0 0.0
        %2355 = vmatpush.msra.mxu0 0.0
        %2356 = vmatpush.msra.mxu0 0.0
        %2357 = vmatpush.msra.mxu0 0.0
        %2358 = vmatpush.msra.mxu0 0.0
        %2359 = vmatpush.msra.mxu0 0.0
        %2360 = vmatpush.msra.mxu0 0.0
        %2361 = vmatpush.msra.mxu0 0.0
        %2362 = vmatpush.msra.mxu0 %v588
        %2363 = vmatpush.msra.mxu0 %v587
        %2364 = vmatmul.f32.gmra.mxu0 %v2346
        %v2365 = vpop.f32.mrf.mxu0
        %v2366 = vadd.f32 0.0, %v2365
        %2367 = vdwg.mxu0
        %2369 = vrot.lane.b32.xlu0 %v2288, 80
        %v2370 = vpop.permute.xlu0 %2369
        %v2371 = vsel %vm723, %v2370, 0
        %2373 = vmatpush.msra.mxu0 0.0
        %2374 = vmatpush.msra.mxu0 0.0
        %2375 = vmatpush.msra.mxu0 0.0
        %2376 = vmatpush.msra.mxu0 0.0
        %2377 = vmatpush.msra.mxu0 0.0
        %2378 = vmatpush.msra.mxu0 0.0
        %2379 = vmatpush.msra.mxu0 0.0
        %2380 = vmatpush.msra.mxu0 0.0
        %2381 = vmatpush.msra.mxu0 0.0
        %2382 = vmatpush.msra.mxu0 0.0
        %2383 = vmatpush.msra.mxu0 0.0
        %2384 = vmatpush.msra.mxu0 0.0
        %2385 = vmatpush.msra.mxu0 0.0
        %2386 = vmatpush.msra.mxu0 0.0
        %2387 = vmatpush.msra.mxu0 %v590
        %2388 = vmatpush.msra.mxu0 %v589
        %2389 = vmatmul.f32.gmra.mxu0 %v2371
        %v2390 = vpop.f32.mrf.mxu0
        %v2391 = vadd.f32 0.0, %v2390
        %2392 = vdwg.mxu0
        %2394 = vrot.lane.b32.xlu0 %v2289, 80
        %v2395 = vpop.permute.xlu0 %2394
        %v2396 = vsel %vm723, %v2395, 0
        %2398 = vmatpush.msra.mxu0 0.0
        %2399 = vmatpush.msra.mxu0 0.0
        %2400 = vmatpush.msra.mxu0 0.0
        %2401 = vmatpush.msra.mxu0 0.0
        %2402 = vmatpush.msra.mxu0 0.0
        %2403 = vmatpush.msra.mxu0 0.0
        %2404 = vmatpush.msra.mxu0 0.0
        %2405 = vmatpush.msra.mxu0 0.0
        %2406 = vmatpush.msra.mxu0 0.0
        %2407 = vmatpush.msra.mxu0 0.0
        %2408 = vmatpush.msra.mxu0 0.0
        %2409 = vmatpush.msra.mxu0 0.0
        %2410 = vmatpush.msra.mxu0 0.0
        %2411 = vmatpush.msra.mxu0 0.0
        %2412 = vmatpush.msra.mxu0 %v592
        %2413 = vmatpush.msra.mxu0 %v591
        %2414 = vmatmul.f32.gmra.mxu0 %v2396
        %v2415 = vpop.f32.mrf.mxu0
        %v2416 = vadd.f32 0.0, %v2415
        %2417 = vdwg.mxu0
        %2419 = vrot.lane.b32.xlu0 %v2290, 80
        %v2420 = vpop.permute.xlu0 %2419
        %v2421 = vsel %vm723, %v2420, 0
        %2423 = vmatpush.msra.mxu0 0.0
        %2424 = vmatpush.msra.mxu0 0.0
        %2425 = vmatpush.msra.mxu0 0.0
        %2426 = vmatpush.msra.mxu0 0.0
        %2427 = vmatpush.msra.mxu0 0.0
        %2428 = vmatpush.msra.mxu0 0.0
        %2429 = vmatpush.msra.mxu0 0.0
        %2430 = vmatpush.msra.mxu0 0.0
        %2431 = vmatpush.msra.mxu0 0.0
        %2432 = vmatpush.msra.mxu0 0.0
        %2433 = vmatpush.msra.mxu0 0.0
        %2434 = vmatpush.msra.mxu0 0.0
        %2435 = vmatpush.msra.mxu0 0.0
        %2436 = vmatpush.msra.mxu0 0.0
        %2437 = vmatpush.msra.mxu0 %v594
        %2438 = vmatpush.msra.mxu0 %v593
        %2439 = vmatmul.f32.gmra.mxu0 %v2421
        %v2440 = vpop.f32.mrf.mxu0
        %v2441 = vadd.f32 0.0, %v2440
        %2442 = vdwg.mxu0
        %2444 = vrot.lane.b32.xlu0 %v2291, 80
        %v2445 = vpop.permute.xlu0 %2444
        %v2446 = vsel %vm723, %v2445, 0
        %2448 = vmatpush.msra.mxu0 0.0
        %2449 = vmatpush.msra.mxu0 0.0
        %2450 = vmatpush.msra.mxu0 0.0
        %2451 = vmatpush.msra.mxu0 0.0
        %2452 = vmatpush.msra.mxu0 0.0
        %2453 = vmatpush.msra.mxu0 0.0
        %2454 = vmatpush.msra.mxu0 0.0
        %2455 = vmatpush.msra.mxu0 0.0
        %2456 = vmatpush.msra.mxu0 0.0
        %2457 = vmatpush.msra.mxu0 0.0
        %2458 = vmatpush.msra.mxu0 0.0
        %2459 = vmatpush.msra.mxu0 0.0
        %2460 = vmatpush.msra.mxu0 0.0
        %2461 = vmatpush.msra.mxu0 0.0
        %2462 = vmatpush.msra.mxu0 %v596
        %2463 = vmatpush.msra.mxu0 %v595
        %2464 = vmatmul.f32.gmra.mxu0 %v2446
        %v2465 = vpop.f32.mrf.mxu0
        %v2466 = vadd.f32 0.0, %v2465
        %2467 = vdwg.mxu0
        %2469 = vrot.lane.b32.xlu0 %v2292, 80
        %v2470 = vpop.permute.xlu0 %2469
        %v2471 = vsel %vm723, %v2470, 0
        %2473 = vmatpush.msra.mxu0 0.0
        %2474 = vmatpush.msra.mxu0 0.0
        %2475 = vmatpush.msra.mxu0 0.0
        %2476 = vmatpush.msra.mxu0 0.0
        %2477 = vmatpush.msra.mxu0 0.0
        %2478 = vmatpush.msra.mxu0 0.0
        %2479 = vmatpush.msra.mxu0 0.0
        %2480 = vmatpush.msra.mxu0 0.0
        %2481 = vmatpush.msra.mxu0 0.0
        %2482 = vmatpush.msra.mxu0 0.0
        %2483 = vmatpush.msra.mxu0 0.0
        %2484 = vmatpush.msra.mxu0 0.0
        %2485 = vmatpush.msra.mxu0 0.0
        %2486 = vmatpush.msra.mxu0 0.0
        %2487 = vmatpush.msra.mxu0 %v598
        %2488 = vmatpush.msra.mxu0 %v597
        %2489 = vmatmul.f32.gmra.mxu0 %v2471
        %v2490 = vpop.f32.mrf.mxu0
        %v2491 = vadd.f32 0.0, %v2490
        %2492 = vdwg.mxu0
        %2494 = vrot.lane.b32.xlu0 %v2293, 80
        %v2495 = vpop.permute.xlu0 %2494
        %v2496 = vsel %vm723, %v2495, 0
        %2498 = vmatpush.msra.mxu0 0.0
        %2499 = vmatpush.msra.mxu0 0.0
        %2500 = vmatpush.msra.mxu0 0.0
        %2501 = vmatpush.msra.mxu0 0.0
        %2502 = vmatpush.msra.mxu0 0.0
        %2503 = vmatpush.msra.mxu0 0.0
        %2504 = vmatpush.msra.mxu0 0.0
        %2505 = vmatpush.msra.mxu0 0.0
        %2506 = vmatpush.msra.mxu0 0.0
        %2507 = vmatpush.msra.mxu0 0.0
        %2508 = vmatpush.msra.mxu0 0.0
        %2509 = vmatpush.msra.mxu0 0.0
        %2510 = vmatpush.msra.mxu0 0.0
        %2511 = vmatpush.msra.mxu0 0.0
        %2512 = vmatpush.msra.mxu0 %v600
        %2513 = vmatpush.msra.mxu0 %v599
        %2514 = vmatmul.f32.gmra.mxu0 %v2496
        %v2515 = vpop.f32.mrf.mxu0
        %v2516 = vadd.f32 0.0, %v2515
        %2517 = vdwg.mxu0
        %2519 = vrot.lane.b32.xlu0 %v2294, 80
        %v2520 = vpop.permute.xlu0 %2519
        %v2521 = vsel %vm723, %v2520, 0
        %2523 = vmatpush.msra.mxu0 0.0
        %2524 = vmatpush.msra.mxu0 0.0
        %2525 = vmatpush.msra.mxu0 0.0
        %2526 = vmatpush.msra.mxu0 0.0
        %2527 = vmatpush.msra.mxu0 0.0
        %2528 = vmatpush.msra.mxu0 0.0
        %2529 = vmatpush.msra.mxu0 0.0
        %2530 = vmatpush.msra.mxu0 0.0
        %2531 = vmatpush.msra.mxu0 0.0
        %2532 = vmatpush.msra.mxu0 0.0
        %2533 = vmatpush.msra.mxu0 0.0
        %2534 = vmatpush.msra.mxu0 0.0
        %2535 = vmatpush.msra.mxu0 0.0
        %2536 = vmatpush.msra.mxu0 0.0
        %2537 = vmatpush.msra.mxu0 %v602
        %2538 = vmatpush.msra.mxu0 %v601
        %2539 = vmatmul.f32.gmra.mxu0 %v2521
        %v2540 = vpop.f32.mrf.mxu0
        %v2541 = vadd.f32 0.0, %v2540
        %2542 = vdwg.mxu0
        %v2543 = vadd.f32 %v2335, %v2366
        %v2544 = vadd.f32 %v2336, %v2391
        %v2545 = vadd.f32 %v2337, %v2416
        %v2546 = vadd.f32 %v2338, %v2441
        %v2547 = vadd.f32 %v2339, %v2466
        %v2548 = vadd.f32 %v2340, %v2491
        %v2549 = vadd.f32 %v2341, %v2516
        %v2550 = vadd.f32 %v2342, %v2541
        %v2551 = vxor.u32 %v2543, 2147483648
        %v2552 = vxor.u32 %v2544, 2147483648
        %v2553 = vxor.u32 %v2545, 2147483648
        %v2554 = vxor.u32 %v2546, 2147483648
        %v2555 = vxor.u32 %v2547, 2147483648
        %v2556 = vxor.u32 %v2548, 2147483648
        %v2557 = vxor.u32 %v2549, 2147483648
        %v2558 = vxor.u32 %v2550, 2147483648
        %v2559 = vmul.f32 %v2551, 1.442695
        %v2560 = vpow.pop %v2559
        %v2561 = vmul.f32 %v2552, 1.442695
        %v2562 = vpow.pop %v2561
        %v2563 = vmul.f32 %v2553, 1.442695
        %v2564 = vpow.pop %v2563
        %v2565 = vmul.f32 %v2554, 1.442695
        %v2566 = vpow.pop %v2565
        %v2567 = vmul.f32 %v2555, 1.442695
        %v2568 = vpow.pop %v2567
        %v2569 = vmul.f32 %v2556, 1.442695
        %v2570 = vpow.pop %v2569
        %v2571 = vmul.f32 %v2557, 1.442695
        %v2572 = vpow.pop %v2571
        %v2573 = vmul.f32 %v2558, 1.442695
        %v2574 = vpow.pop %v2573
        %v2575 = vadd.f32 %v2560, 1.0
        %v2576 = vadd.f32 %v2562, 1.0
        %v2577 = vadd.f32 %v2564, 1.0
        %v2578 = vadd.f32 %v2566, 1.0
        %v2579 = vadd.f32 %v2568, 1.0
        %v2580 = vadd.f32 %v2570, 1.0
        %v2581 = vadd.f32 %v2572, 1.0
        %v2582 = vadd.f32 %v2574, 1.0
        %v2583 = vrcp.pop %v2575
        %v2584 = vmul.f32 %v2575, %v2583
        %v2585 = vsub.f32 1.0, %v2584
        %v2586 = vmul.f32 %v2583, %v2585
        %v2587 = vadd.f32 %v2583, %v2586
        %vm2588 = vweird.f32 %v2575
        %vm2589 = vweird.f32 %v2583
        %vm2590 = vmor %vm2588, %vm2589
        %v2591 = vsel %vm2590, %v2583, %v2587
        %v2592 = vand.u32 2147483647, %v2575
        %vm2593 = vcmp.eq.f32.partialorder %v2592, 8.507059e+37
        %v2594 = vand.u32 %v2575, 2147483648
        %v2595 = vor.u32 1.1754944e-38, %v2594
        %v2596 = vsel %vm2593, %v2595, %v2591
        %v2597 = vmul.f32 1.0, %v2596
        %v2598 = vrcp.pop %v2576
        %v2599 = vmul.f32 %v2576, %v2598
        %v2600 = vsub.f32 1.0, %v2599
        %v2601 = vmul.f32 %v2598, %v2600
        %v2602 = vadd.f32 %v2598, %v2601
        %vm2603 = vweird.f32 %v2576
        %vm2604 = vweird.f32 %v2598
        %vm2605 = vmor %vm2603, %vm2604
        %v2606 = vsel %vm2605, %v2598, %v2602
        %v2607 = vand.u32 2147483647, %v2576
        %vm2608 = vcmp.eq.f32.partialorder %v2607, 8.507059e+37
        %v2609 = vand.u32 %v2576, 2147483648
        %v2610 = vor.u32 1.1754944e-38, %v2609
        %v2611 = vsel %vm2608, %v2610, %v2606
        %v2612 = vmul.f32 1.0, %v2611
        %v2613 = vrcp.pop %v2577
        %v2614 = vmul.f32 %v2577, %v2613
        %v2615 = vsub.f32 1.0, %v2614
        %v2616 = vmul.f32 %v2613, %v2615
        %v2617 = vadd.f32 %v2613, %v2616
        %vm2618 = vweird.f32 %v2577
        %vm2619 = vweird.f32 %v2613
        %vm2620 = vmor %vm2618, %vm2619
        %v2621 = vsel %vm2620, %v2613, %v2617
        %v2622 = vand.u32 2147483647, %v2577
        %vm2623 = vcmp.eq.f32.partialorder %v2622, 8.507059e+37
        %v2624 = vand.u32 %v2577, 2147483648
        %v2625 = vor.u32 1.1754944e-38, %v2624
        %v2626 = vsel %vm2623, %v2625, %v2621
        %v2627 = vmul.f32 1.0, %v2626
        %v2628 = vrcp.pop %v2578
        %v2629 = vmul.f32 %v2578, %v2628
        %v2630 = vsub.f32 1.0, %v2629
        %v2631 = vmul.f32 %v2628, %v2630
        %v2632 = vadd.f32 %v2628, %v2631
        %vm2633 = vweird.f32 %v2578
        %vm2634 = vweird.f32 %v2628
        %vm2635 = vmor %vm2633, %vm2634
        %v2636 = vsel %vm2635, %v2628, %v2632
        %v2637 = vand.u32 2147483647, %v2578
        %vm2638 = vcmp.eq.f32.partialorder %v2637, 8.507059e+37
        %v2639 = vand.u32 %v2578, 2147483648
        %v2640 = vor.u32 1.1754944e-38, %v2639
        %v2641 = vsel %vm2638, %v2640, %v2636
        %v2642 = vmul.f32 1.0, %v2641
        %v2643 = vrcp.pop %v2579
        %v2644 = vmul.f32 %v2579, %v2643
        %v2645 = vsub.f32 1.0, %v2644
        %v2646 = vmul.f32 %v2643, %v2645
        %v2647 = vadd.f32 %v2643, %v2646
        %vm2648 = vweird.f32 %v2579
        %vm2649 = vweird.f32 %v2643
        %vm2650 = vmor %vm2648, %vm2649
        %v2651 = vsel %vm2650, %v2643, %v2647
        %v2652 = vand.u32 2147483647, %v2579
        %vm2653 = vcmp.eq.f32.partialorder %v2652, 8.507059e+37
        %v2654 = vand.u32 %v2579, 2147483648
        %v2655 = vor.u32 1.1754944e-38, %v2654
        %v2656 = vsel %vm2653, %v2655, %v2651
        %v2657 = vmul.f32 1.0, %v2656
        %v2658 = vrcp.pop %v2580
        %v2659 = vmul.f32 %v2580, %v2658
        %v2660 = vsub.f32 1.0, %v2659
        %v2661 = vmul.f32 %v2658, %v2660
        %v2662 = vadd.f32 %v2658, %v2661
        %vm2663 = vweird.f32 %v2580
        %vm2664 = vweird.f32 %v2658
        %vm2665 = vmor %vm2663, %vm2664
        %v2666 = vsel %vm2665, %v2658, %v2662
        %v2667 = vand.u32 2147483647, %v2580
        %vm2668 = vcmp.eq.f32.partialorder %v2667, 8.507059e+37
        %v2669 = vand.u32 %v2580, 2147483648
        %v2670 = vor.u32 1.1754944e-38, %v2669
        %v2671 = vsel %vm2668, %v2670, %v2666
        %v2672 = vmul.f32 1.0, %v2671
        %v2673 = vrcp.pop %v2581
        %v2674 = vmul.f32 %v2581, %v2673
        %v2675 = vsub.f32 1.0, %v2674
        %v2676 = vmul.f32 %v2673, %v2675
        %v2677 = vadd.f32 %v2673, %v2676
        %vm2678 = vweird.f32 %v2581
        %vm2679 = vweird.f32 %v2673
        %vm2680 = vmor %vm2678, %vm2679
        %v2681 = vsel %vm2680, %v2673, %v2677
        %v2682 = vand.u32 2147483647, %v2581
        %vm2683 = vcmp.eq.f32.partialorder %v2682, 8.507059e+37
        %v2684 = vand.u32 %v2581, 2147483648
        %v2685 = vor.u32 1.1754944e-38, %v2684
        %v2686 = vsel %vm2683, %v2685, %v2681
        %v2687 = vmul.f32 1.0, %v2686
        %v2688 = vrcp.pop %v2582
        %v2689 = vmul.f32 %v2582, %v2688
        %v2690 = vsub.f32 1.0, %v2689
        %v2691 = vmul.f32 %v2688, %v2690
        %v2692 = vadd.f32 %v2688, %v2691
        %vm2693 = vweird.f32 %v2582
        %vm2694 = vweird.f32 %v2688
        %vm2695 = vmor %vm2693, %vm2694
        %v2696 = vsel %vm2695, %v2688, %v2692
        %v2697 = vand.u32 2147483647, %v2582
        %vm2698 = vcmp.eq.f32.partialorder %v2697, 8.507059e+37
        %v2699 = vand.u32 %v2582, 2147483648
        %v2700 = vor.u32 1.1754944e-38, %v2699
        %v2701 = vsel %vm2698, %v2700, %v2696
        %v2702 = vmul.f32 1.0, %v2701
        %v2703 = vtanh.pop %v2543
        %v2704 = vtanh.pop %v2544
        %v2705 = vtanh.pop %v2545
        %v2706 = vtanh.pop %v2546
        %v2707 = vtanh.pop %v2547
        %v2708 = vtanh.pop %v2548
        %v2709 = vtanh.pop %v2549
        %v2710 = vtanh.pop %v2550
        %v2711 = vmul.f32 %v2597, %v2239
        %v2712 = vmul.f32 %v2612, %v2240
        %v2713 = vmul.f32 %v2627, %v2241
        %v2714 = vmul.f32 %v2642, %v2242
        %v2715 = vmul.f32 %v2657, %v2243
        %v2716 = vmul.f32 %v2672, %v2244
        %v2717 = vmul.f32 %v2687, %v2245
        %v2718 = vmul.f32 %v2702, %v2246
        %2727 = vrot.lane.b32.xlu0 %v2703, 96
        %v2728 = vpop.permute.xlu0 %2727
        %2729 = vrot.lane.b32.xlu0 %v2704, 96
        %v2730 = vpop.permute.xlu0 %2729
        %2731 = vrot.lane.b32.xlu0 %v2705, 96
        %v2732 = vpop.permute.xlu0 %2731
        %2733 = vrot.lane.b32.xlu0 %v2706, 96
        %v2734 = vpop.permute.xlu0 %2733
        %2735 = vrot.lane.b32.xlu0 %v2707, 96
        %v2736 = vpop.permute.xlu0 %2735
        %2737 = vrot.lane.b32.xlu0 %v2708, 96
        %v2738 = vpop.permute.xlu0 %2737
        %2739 = vrot.lane.b32.xlu0 %v2709, 96
        %v2740 = vpop.permute.xlu0 %2739
        %2741 = vrot.lane.b32.xlu0 %v2710, 96
        %v2742 = vpop.permute.xlu0 %2741
        %v2751 = vmul.f32 %v2597, %v2728
        %v2752 = vmul.f32 %v2612, %v2730
        %v2753 = vmul.f32 %v2627, %v2732
        %v2754 = vmul.f32 %v2642, %v2734
        %v2755 = vmul.f32 %v2657, %v2736
        %v2756 = vmul.f32 %v2672, %v2738
        %v2757 = vmul.f32 %v2687, %v2740
        %v2758 = vmul.f32 %v2702, %v2742
        %2767 = vrot.lane.b32.xlu0 %v2751, 16
        %v2768 = vpop.permute.xlu0 %2767
        %2769 = vrot.lane.b32.xlu0 %v2752, 16
        %v2770 = vpop.permute.xlu0 %2769
        %2771 = vrot.lane.b32.xlu0 %v2753, 16
        %v2772 = vpop.permute.xlu0 %2771
        %2773 = vrot.lane.b32.xlu0 %v2754, 16
        %v2774 = vpop.permute.xlu0 %2773
        %2775 = vrot.lane.b32.xlu0 %v2755, 16
        %v2776 = vpop.permute.xlu0 %2775
        %2777 = vrot.lane.b32.xlu0 %v2756, 16
        %v2778 = vpop.permute.xlu0 %2777
        %2779 = vrot.lane.b32.xlu0 %v2757, 16
        %v2780 = vpop.permute.xlu0 %2779
        %2781 = vrot.lane.b32.xlu0 %v2758, 16
        %v2782 = vpop.permute.xlu0 %2781
        %v2791 = vadd.f32 %v2711, %v2768
        %v2792 = vadd.f32 %v2712, %v2770
        %v2793 = vadd.f32 %v2713, %v2772
        %v2794 = vadd.f32 %v2714, %v2774
        %v2795 = vadd.f32 %v2715, %v2776
        %v2796 = vadd.f32 %v2716, %v2778
        %v2797 = vadd.f32 %v2717, %v2780
        %v2798 = vadd.f32 %v2718, %v2782
        %v2799 = vtanh.pop %v2791
        %v2800 = vtanh.pop %v2792
        %v2801 = vtanh.pop %v2793
        %v2802 = vtanh.pop %v2794
        %v2803 = vtanh.pop %v2795
        %v2804 = vtanh.pop %v2796
        %v2805 = vtanh.pop %v2797
        %v2806 = vtanh.pop %v2798
        %2815 = vrot.lane.b32.xlu0 %v2799, 32
        %v2816 = vpop.permute.xlu0 %2815
        %2817 = vrot.lane.b32.xlu0 %v2800, 32
        %v2818 = vpop.permute.xlu0 %2817
        %2819 = vrot.lane.b32.xlu0 %v2801, 32
        %v2820 = vpop.permute.xlu0 %2819
        %2821 = vrot.lane.b32.xlu0 %v2802, 32
        %v2822 = vpop.permute.xlu0 %2821
        %2823 = vrot.lane.b32.xlu0 %v2803, 32
        %v2824 = vpop.permute.xlu0 %2823
        %2825 = vrot.lane.b32.xlu0 %v2804, 32
        %v2826 = vpop.permute.xlu0 %2825
        %2827 = vrot.lane.b32.xlu0 %v2805, 32
        %v2828 = vpop.permute.xlu0 %2827
        %2829 = vrot.lane.b32.xlu0 %v2806, 32
        %v2830 = vpop.permute.xlu0 %2829
        %v2839 = vmul.f32 %v2597, %v2816
        %v2840 = vmul.f32 %v2612, %v2818
        %v2841 = vmul.f32 %v2627, %v2820
        %v2842 = vmul.f32 %v2642, %v2822
        %v2843 = vmul.f32 %v2657, %v2824
        %v2844 = vmul.f32 %v2672, %v2826
        %v2845 = vmul.f32 %v2687, %v2828
        %v2846 = vmul.f32 %v2702, %v2830
        %2847 = vset.pattern.permute.xlu0 4
        %2848 = vperm.xlu0 %2847, %v579
        %v2849 = vpop.permute.xlu0 %2848
        %2851 = vset.pattern.permute.xlu0 4
        %2852 = vperm.xlu0 %2851, %v580
        %v2853 = vpop.permute.xlu0 %2852
        %2855 = vset.pattern.permute.xlu0 4
        %2856 = vperm.xlu0 %2855, %v581
        %v2857 = vpop.permute.xlu0 %2856
        %2859 = vset.pattern.permute.xlu0 4
        %2860 = vperm.xlu0 %2859, %v582
        %v2861 = vpop.permute.xlu0 %2860
        %2863 = vset.pattern.permute.xlu0 4
        %2864 = vperm.xlu0 %2863, %v583
        %v2865 = vpop.permute.xlu0 %2864
        %2867 = vset.pattern.permute.xlu0 4
        %2868 = vperm.xlu0 %2867, %v584
        %v2869 = vpop.permute.xlu0 %2868
        %2871 = vset.pattern.permute.xlu0 4
        %2872 = vperm.xlu0 %2871, %v585
        %v2873 = vpop.permute.xlu0 %2872
        %2875 = vset.pattern.permute.xlu0 4
        %2876 = vperm.xlu0 %2875, %v586
        %v2877 = vpop.permute.xlu0 %2876
        %v2879 = vmul.f32 %v2849, %v619
        %v2880 = vmul.f32 %v2853, %v620
        %v2881 = vmul.f32 %v2857, %v621
        %v2882 = vmul.f32 %v2861, %v622
        %v2883 = vmul.f32 %v2865, %v623
        %v2884 = vmul.f32 %v2869, %v624
        %v2885 = vmul.f32 %v2873, %v625
        %v2886 = vmul.f32 %v2877, %v626
        %v2887 = vadd.f32 %v2879, %v651
        %v2888 = vadd.f32 %v2880, %v652
        %v2889 = vadd.f32 %v2881, %v653
        %v2890 = vadd.f32 %v2882, %v654
        %v2891 = vadd.f32 %v2883, %v655
        %v2892 = vadd.f32 %v2884, %v656
        %v2893 = vadd.f32 %v2885, %v657
        %v2894 = vadd.f32 %v2886, %v658
        %2896 = vrot.lane.b32.xlu0 %v2839, 80
        %v2897 = vpop.permute.xlu0 %2896
        %v2898 = vsel %vm723, %v2897, 0
        %2900 = vmatpush.msra.mxu0 0.0
        %2901 = vmatpush.msra.mxu0 0.0
        %2902 = vmatpush.msra.mxu0 0.0
        %2903 = vmatpush.msra.mxu0 0.0
        %2904 = vmatpush.msra.mxu0 0.0
        %2905 = vmatpush.msra.mxu0 0.0
        %2906 = vmatpush.msra.mxu0 0.0
        %2907 = vmatpush.msra.mxu0 0.0
        %2908 = vmatpush.msra.mxu0 0.0
        %2909 = vmatpush.msra.mxu0 0.0
        %2910 = vmatpush.msra.mxu0 0.0
        %2911 = vmatpush.msra.mxu0 0.0
        %2912 = vmatpush.msra.mxu0 0.0
        %2913 = vmatpush.msra.mxu0 0.0
        %2914 = vmatpush.msra.mxu0 %v588
        %2915 = vmatpush.msra.mxu0 %v587
        %2916 = vmatmul.f32.gmra.mxu0 %v2898
        %v2917 = vpop.f32.mrf.mxu0
        %v2918 = vadd.f32 0.0, %v2917
        %2919 = vdwg.mxu0
        %2921 = vrot.lane.b32.xlu0 %v2840, 80
        %v2922 = vpop.permute.xlu0 %2921
        %v2923 = vsel %vm723, %v2922, 0
        %2925 = vmatpush.msra.mxu0 0.0
        %2926 = vmatpush.msra.mxu0 0.0
        %2927 = vmatpush.msra.mxu0 0.0
        %2928 = vmatpush.msra.mxu0 0.0
        %2929 = vmatpush.msra.mxu0 0.0
        %2930 = vmatpush.msra.mxu0 0.0
        %2931 = vmatpush.msra.mxu0 0.0
        %2932 = vmatpush.msra.mxu0 0.0
        %2933 = vmatpush.msra.mxu0 0.0
        %2934 = vmatpush.msra.mxu0 0.0
        %2935 = vmatpush.msra.mxu0 0.0
        %2936 = vmatpush.msra.mxu0 0.0
        %2937 = vmatpush.msra.mxu0 0.0
        %2938 = vmatpush.msra.mxu0 0.0
        %2939 = vmatpush.msra.mxu0 %v590
        %2940 = vmatpush.msra.mxu0 %v589
        %2941 = vmatmul.f32.gmra.mxu0 %v2923
        %v2942 = vpop.f32.mrf.mxu0
        %v2943 = vadd.f32 0.0, %v2942
        %2944 = vdwg.mxu0
        %2946 = vrot.lane.b32.xlu0 %v2841, 80
        %v2947 = vpop.permute.xlu0 %2946
        %v2948 = vsel %vm723, %v2947, 0
        %2950 = vmatpush.msra.mxu0 0.0
        %2951 = vmatpush.msra.mxu0 0.0
        %2952 = vmatpush.msra.mxu0 0.0
        %2953 = vmatpush.msra.mxu0 0.0
        %2954 = vmatpush.msra.mxu0 0.0
        %2955 = vmatpush.msra.mxu0 0.0
        %2956 = vmatpush.msra.mxu0 0.0
        %2957 = vmatpush.msra.mxu0 0.0
        %2958 = vmatpush.msra.mxu0 0.0
        %2959 = vmatpush.msra.mxu0 0.0
        %2960 = vmatpush.msra.mxu0 0.0
        %2961 = vmatpush.msra.mxu0 0.0
        %2962 = vmatpush.msra.mxu0 0.0
        %2963 = vmatpush.msra.mxu0 0.0
        %2964 = vmatpush.msra.mxu0 %v592
        %2965 = vmatpush.msra.mxu0 %v591
        %2966 = vmatmul.f32.gmra.mxu0 %v2948
        %v2967 = vpop.f32.mrf.mxu0
        %v2968 = vadd.f32 0.0, %v2967
        %2969 = vdwg.mxu0
        %2971 = vrot.lane.b32.xlu0 %v2842, 80
        %v2972 = vpop.permute.xlu0 %2971
        %v2973 = vsel %vm723, %v2972, 0
        %2975 = vmatpush.msra.mxu0 0.0
        %2976 = vmatpush.msra.mxu0 0.0
        %2977 = vmatpush.msra.mxu0 0.0
        %2978 = vmatpush.msra.mxu0 0.0
        %2979 = vmatpush.msra.mxu0 0.0
        %2980 = vmatpush.msra.mxu0 0.0
        %2981 = vmatpush.msra.mxu0 0.0
        %2982 = vmatpush.msra.mxu0 0.0
        %2983 = vmatpush.msra.mxu0 0.0
        %2984 = vmatpush.msra.mxu0 0.0
        %2985 = vmatpush.msra.mxu0 0.0
        %2986 = vmatpush.msra.mxu0 0.0
        %2987 = vmatpush.msra.mxu0 0.0
        %2988 = vmatpush.msra.mxu0 0.0
        %2989 = vmatpush.msra.mxu0 %v594
        %2990 = vmatpush.msra.mxu0 %v593
        %2991 = vmatmul.f32.gmra.mxu0 %v2973
        %v2992 = vpop.f32.mrf.mxu0
        %v2993 = vadd.f32 0.0, %v2992
        %2994 = vdwg.mxu0
        %2996 = vrot.lane.b32.xlu0 %v2843, 80
        %v2997 = vpop.permute.xlu0 %2996
        %v2998 = vsel %vm723, %v2997, 0
        %3000 = vmatpush.msra.mxu0 0.0
        %3001 = vmatpush.msra.mxu0 0.0
        %3002 = vmatpush.msra.mxu0 0.0
        %3003 = vmatpush.msra.mxu0 0.0
        %3004 = vmatpush.msra.mxu0 0.0
        %3005 = vmatpush.msra.mxu0 0.0
        %3006 = vmatpush.msra.mxu0 0.0
        %3007 = vmatpush.msra.mxu0 0.0
        %3008 = vmatpush.msra.mxu0 0.0
        %3009 = vmatpush.msra.mxu0 0.0
        %3010 = vmatpush.msra.mxu0 0.0
        %3011 = vmatpush.msra.mxu0 0.0
        %3012 = vmatpush.msra.mxu0 0.0
        %3013 = vmatpush.msra.mxu0 0.0
        %3014 = vmatpush.msra.mxu0 %v596
        %3015 = vmatpush.msra.mxu0 %v595
        %3016 = vmatmul.f32.gmra.mxu0 %v2998
        %v3017 = vpop.f32.mrf.mxu0
        %v3018 = vadd.f32 0.0, %v3017
        %3019 = vdwg.mxu0
        %3021 = vrot.lane.b32.xlu0 %v2844, 80
        %v3022 = vpop.permute.xlu0 %3021
        %v3023 = vsel %vm723, %v3022, 0
        %3025 = vmatpush.msra.mxu0 0.0
        %3026 = vmatpush.msra.mxu0 0.0
        %3027 = vmatpush.msra.mxu0 0.0
        %3028 = vmatpush.msra.mxu0 0.0
        %3029 = vmatpush.msra.mxu0 0.0
        %3030 = vmatpush.msra.mxu0 0.0
        %3031 = vmatpush.msra.mxu0 0.0
        %3032 = vmatpush.msra.mxu0 0.0
        %3033 = vmatpush.msra.mxu0 0.0
        %3034 = vmatpush.msra.mxu0 0.0
        %3035 = vmatpush.msra.mxu0 0.0
        %3036 = vmatpush.msra.mxu0 0.0
        %3037 = vmatpush.msra.mxu0 0.0
        %3038 = vmatpush.msra.mxu0 0.0
        %3039 = vmatpush.msra.mxu0 %v598
        %3040 = vmatpush.msra.mxu0 %v597
        %3041 = vmatmul.f32.gmra.mxu0 %v3023
        %v3042 = vpop.f32.mrf.mxu0
        %v3043 = vadd.f32 0.0, %v3042
        %3044 = vdwg.mxu0
        %3046 = vrot.lane.b32.xlu0 %v2845, 80
        %v3047 = vpop.permute.xlu0 %3046
        %v3048 = vsel %vm723, %v3047, 0
        %3050 = vmatpush.msra.mxu0 0.0
        %3051 = vmatpush.msra.mxu0 0.0
        %3052 = vmatpush.msra.mxu0 0.0
        %3053 = vmatpush.msra.mxu0 0.0
        %3054 = vmatpush.msra.mxu0 0.0
        %3055 = vmatpush.msra.mxu0 0.0
        %3056 = vmatpush.msra.mxu0 0.0
        %3057 = vmatpush.msra.mxu0 0.0
        %3058 = vmatpush.msra.mxu0 0.0
        %3059 = vmatpush.msra.mxu0 0.0
        %3060 = vmatpush.msra.mxu0 0.0
        %3061 = vmatpush.msra.mxu0 0.0
        %3062 = vmatpush.msra.mxu0 0.0
        %3063 = vmatpush.msra.mxu0 0.0
        %3064 = vmatpush.msra.mxu0 %v600
        %3065 = vmatpush.msra.mxu0 %v599
        %3066 = vmatmul.f32.gmra.mxu0 %v3048
        %v3067 = vpop.f32.mrf.mxu0
        %v3068 = vadd.f32 0.0, %v3067
        %3069 = vdwg.mxu0
        %3071 = vrot.lane.b32.xlu0 %v2846, 80
        %v3072 = vpop.permute.xlu0 %3071
        %v3073 = vsel %vm723, %v3072, 0
        %3075 = vmatpush.msra.mxu0 0.0
        %3076 = vmatpush.msra.mxu0 0.0
        %3077 = vmatpush.msra.mxu0 0.0
        %3078 = vmatpush.msra.mxu0 0.0
        %3079 = vmatpush.msra.mxu0 0.0
        %3080 = vmatpush.msra.mxu0 0.0
        %3081 = vmatpush.msra.mxu0 0.0
        %3082 = vmatpush.msra.mxu0 0.0
        %3083 = vmatpush.msra.mxu0 0.0
        %3084 = vmatpush.msra.mxu0 0.0
        %3085 = vmatpush.msra.mxu0 0.0
        %3086 = vmatpush.msra.mxu0 0.0
        %3087 = vmatpush.msra.mxu0 0.0
        %3088 = vmatpush.msra.mxu0 0.0
        %3089 = vmatpush.msra.mxu0 %v602
        %3090 = vmatpush.msra.mxu0 %v601
        %3091 = vmatmul.f32.gmra.mxu0 %v3073
        %v3092 = vpop.f32.mrf.mxu0
        %v3093 = vadd.f32 0.0, %v3092
        %3094 = vdwg.mxu0
        %v3095 = vadd.f32 %v2887, %v2918
        %v3096 = vadd.f32 %v2888, %v2943
        %v3097 = vadd.f32 %v2889, %v2968
        %v3098 = vadd.f32 %v2890, %v2993
        %v3099 = vadd.f32 %v2891, %v3018
        %v3100 = vadd.f32 %v2892, %v3043
        %v3101 = vadd.f32 %v2893, %v3068
        %v3102 = vadd.f32 %v2894, %v3093
        %v3103 = vxor.u32 %v3095, 2147483648
        %v3104 = vxor.u32 %v3096, 2147483648
        %v3105 = vxor.u32 %v3097, 2147483648
        %v3106 = vxor.u32 %v3098, 2147483648
        %v3107 = vxor.u32 %v3099, 2147483648
        %v3108 = vxor.u32 %v3100, 2147483648
        %v3109 = vxor.u32 %v3101, 2147483648
        %v3110 = vxor.u32 %v3102, 2147483648
        %v3111 = vmul.f32 %v3103, 1.442695
        %v3112 = vpow.pop %v3111
        %v3113 = vmul.f32 %v3104, 1.442695
        %v3114 = vpow.pop %v3113
        %v3115 = vmul.f32 %v3105, 1.442695
        %v3116 = vpow.pop %v3115
        %v3117 = vmul.f32 %v3106, 1.442695
        %v3118 = vpow.pop %v3117
        %v3119 = vmul.f32 %v3107, 1.442695
        %v3120 = vpow.pop %v3119
        %v3121 = vmul.f32 %v3108, 1.442695
        %v3122 = vpow.pop %v3121
        %v3123 = vmul.f32 %v3109, 1.442695
        %v3124 = vpow.pop %v3123
        %v3125 = vmul.f32 %v3110, 1.442695
        %v3126 = vpow.pop %v3125
        %v3127 = vadd.f32 %v3112, 1.0
        %v3128 = vadd.f32 %v3114, 1.0
        %v3129 = vadd.f32 %v3116, 1.0
        %v3130 = vadd.f32 %v3118, 1.0
        %v3131 = vadd.f32 %v3120, 1.0
        %v3132 = vadd.f32 %v3122, 1.0
        %v3133 = vadd.f32 %v3124, 1.0
        %v3134 = vadd.f32 %v3126, 1.0
        %v3135 = vrcp.pop %v3127
        %v3136 = vmul.f32 %v3127, %v3135
        %v3137 = vsub.f32 1.0, %v3136
        %v3138 = vmul.f32 %v3135, %v3137
        %v3139 = vadd.f32 %v3135, %v3138
        %vm3140 = vweird.f32 %v3127
        %vm3141 = vweird.f32 %v3135
        %vm3142 = vmor %vm3140, %vm3141
        %v3143 = vsel %vm3142, %v3135, %v3139
        %v3144 = vand.u32 2147483647, %v3127
        %vm3145 = vcmp.eq.f32.partialorder %v3144, 8.507059e+37
        %v3146 = vand.u32 %v3127, 2147483648
        %v3147 = vor.u32 1.1754944e-38, %v3146
        %v3148 = vsel %vm3145, %v3147, %v3143
        %v3149 = vmul.f32 1.0, %v3148
        %v3150 = vrcp.pop %v3128
        %v3151 = vmul.f32 %v3128, %v3150
        %v3152 = vsub.f32 1.0, %v3151
        %v3153 = vmul.f32 %v3150, %v3152
        %v3154 = vadd.f32 %v3150, %v3153
        %vm3155 = vweird.f32 %v3128
        %vm3156 = vweird.f32 %v3150
        %vm3157 = vmor %vm3155, %vm3156
        %v3158 = vsel %vm3157, %v3150, %v3154
        %v3159 = vand.u32 2147483647, %v3128
        %vm3160 = vcmp.eq.f32.partialorder %v3159, 8.507059e+37
        %v3161 = vand.u32 %v3128, 2147483648
        %v3162 = vor.u32 1.1754944e-38, %v3161
        %v3163 = vsel %vm3160, %v3162, %v3158
        %v3164 = vmul.f32 1.0, %v3163
        %v3165 = vrcp.pop %v3129
        %v3166 = vmul.f32 %v3129, %v3165
        %v3167 = vsub.f32 1.0, %v3166
        %v3168 = vmul.f32 %v3165, %v3167
        %v3169 = vadd.f32 %v3165, %v3168
        %vm3170 = vweird.f32 %v3129
        %vm3171 = vweird.f32 %v3165
        %vm3172 = vmor %vm3170, %vm3171
        %v3173 = vsel %vm3172, %v3165, %v3169
        %v3174 = vand.u32 2147483647, %v3129
        %vm3175 = vcmp.eq.f32.partialorder %v3174, 8.507059e+37
        %v3176 = vand.u32 %v3129, 2147483648
        %v3177 = vor.u32 1.1754944e-38, %v3176
        %v3178 = vsel %vm3175, %v3177, %v3173
        %v3179 = vmul.f32 1.0, %v3178
        %v3180 = vrcp.pop %v3130
        %v3181 = vmul.f32 %v3130, %v3180
        %v3182 = vsub.f32 1.0, %v3181
        %v3183 = vmul.f32 %v3180, %v3182
        %v3184 = vadd.f32 %v3180, %v3183
        %vm3185 = vweird.f32 %v3130
        %vm3186 = vweird.f32 %v3180
        %vm3187 = vmor %vm3185, %vm3186
        %v3188 = vsel %vm3187, %v3180, %v3184
        %v3189 = vand.u32 2147483647, %v3130
        %vm3190 = vcmp.eq.f32.partialorder %v3189, 8.507059e+37
        %v3191 = vand.u32 %v3130, 2147483648
        %v3192 = vor.u32 1.1754944e-38, %v3191
        %v3193 = vsel %vm3190, %v3192, %v3188
        %v3194 = vmul.f32 1.0, %v3193
        %v3195 = vrcp.pop %v3131
        %v3196 = vmul.f32 %v3131, %v3195
        %v3197 = vsub.f32 1.0, %v3196
        %v3198 = vmul.f32 %v3195, %v3197
        %v3199 = vadd.f32 %v3195, %v3198
        %vm3200 = vweird.f32 %v3131
        %vm3201 = vweird.f32 %v3195
        %vm3202 = vmor %vm3200, %vm3201
        %v3203 = vsel %vm3202, %v3195, %v3199
        %v3204 = vand.u32 2147483647, %v3131
        %vm3205 = vcmp.eq.f32.partialorder %v3204, 8.507059e+37
        %v3206 = vand.u32 %v3131, 2147483648
        %v3207 = vor.u32 1.1754944e-38, %v3206
        %v3208 = vsel %vm3205, %v3207, %v3203
        %v3209 = vmul.f32 1.0, %v3208
        %v3210 = vrcp.pop %v3132
        %v3211 = vmul.f32 %v3132, %v3210
        %v3212 = vsub.f32 1.0, %v3211
        %v3213 = vmul.f32 %v3210, %v3212
        %v3214 = vadd.f32 %v3210, %v3213
        %vm3215 = vweird.f32 %v3132
        %vm3216 = vweird.f32 %v3210
        %vm3217 = vmor %vm3215, %vm3216
        %v3218 = vsel %vm3217, %v3210, %v3214
        %v3219 = vand.u32 2147483647, %v3132
        %vm3220 = vcmp.eq.f32.partialorder %v3219, 8.507059e+37
        %v3221 = vand.u32 %v3132, 2147483648
        %v3222 = vor.u32 1.1754944e-38, %v3221
        %v3223 = vsel %vm3220, %v3222, %v3218
        %v3224 = vmul.f32 1.0, %v3223
        %v3225 = vrcp.pop %v3133
        %v3226 = vmul.f32 %v3133, %v3225
        %v3227 = vsub.f32 1.0, %v3226
        %v3228 = vmul.f32 %v3225, %v3227
        %v3229 = vadd.f32 %v3225, %v3228
        %vm3230 = vweird.f32 %v3133
        %vm3231 = vweird.f32 %v3225
        %vm3232 = vmor %vm3230, %vm3231
        %v3233 = vsel %vm3232, %v3225, %v3229
        %v3234 = vand.u32 2147483647, %v3133
        %vm3235 = vcmp.eq.f32.partialorder %v3234, 8.507059e+37
        %v3236 = vand.u32 %v3133, 2147483648
        %v3237 = vor.u32 1.1754944e-38, %v3236
        %v3238 = vsel %vm3235, %v3237, %v3233
        %v3239 = vmul.f32 1.0, %v3238
        %v3240 = vrcp.pop %v3134
        %v3241 = vmul.f32 %v3134, %v3240
        %v3242 = vsub.f32 1.0, %v3241
        %v3243 = vmul.f32 %v3240, %v3242
        %v3244 = vadd.f32 %v3240, %v3243
        %vm3245 = vweird.f32 %v3134
        %vm3246 = vweird.f32 %v3240
        %vm3247 = vmor %vm3245, %vm3246
        %v3248 = vsel %vm3247, %v3240, %v3244
        %v3249 = vand.u32 2147483647, %v3134
        %vm3250 = vcmp.eq.f32.partialorder %v3249, 8.507059e+37
        %v3251 = vand.u32 %v3134, 2147483648
        %v3252 = vor.u32 1.1754944e-38, %v3251
        %v3253 = vsel %vm3250, %v3252, %v3248
        %v3254 = vmul.f32 1.0, %v3253
        %v3255 = vtanh.pop %v3095
        %v3256 = vtanh.pop %v3096
        %v3257 = vtanh.pop %v3097
        %v3258 = vtanh.pop %v3098
        %v3259 = vtanh.pop %v3099
        %v3260 = vtanh.pop %v3100
        %v3261 = vtanh.pop %v3101
        %v3262 = vtanh.pop %v3102
        %v3263 = vmul.f32 %v3149, %v2791
        %v3264 = vmul.f32 %v3164, %v2792
        %v3265 = vmul.f32 %v3179, %v2793
        %v3266 = vmul.f32 %v3194, %v2794
        %v3267 = vmul.f32 %v3209, %v2795
        %v3268 = vmul.f32 %v3224, %v2796
        %v3269 = vmul.f32 %v3239, %v2797
        %v3270 = vmul.f32 %v3254, %v2798
        %3279 = vrot.lane.b32.xlu0 %v3255, 96
        %v3280 = vpop.permute.xlu0 %3279
        %3281 = vrot.lane.b32.xlu0 %v3256, 96
        %v3282 = vpop.permute.xlu0 %3281
        %3283 = vrot.lane.b32.xlu0 %v3257, 96
        %v3284 = vpop.permute.xlu0 %3283
        %3285 = vrot.lane.b32.xlu0 %v3258, 96
        %v3286 = vpop.permute.xlu0 %3285
        %3287 = vrot.lane.b32.xlu0 %v3259, 96
        %v3288 = vpop.permute.xlu0 %3287
        %3289 = vrot.lane.b32.xlu0 %v3260, 96
        %v3290 = vpop.permute.xlu0 %3289
        %3291 = vrot.lane.b32.xlu0 %v3261, 96
        %v3292 = vpop.permute.xlu0 %3291
        %3293 = vrot.lane.b32.xlu0 %v3262, 96
        %v3294 = vpop.permute.xlu0 %3293
        %v3303 = vmul.f32 %v3149, %v3280
        %v3304 = vmul.f32 %v3164, %v3282
        %v3305 = vmul.f32 %v3179, %v3284
        %v3306 = vmul.f32 %v3194, %v3286
        %v3307 = vmul.f32 %v3209, %v3288
        %v3308 = vmul.f32 %v3224, %v3290
        %v3309 = vmul.f32 %v3239, %v3292
        %v3310 = vmul.f32 %v3254, %v3294
        %3319 = vrot.lane.b32.xlu0 %v3303, 16
        %v3320 = vpop.permute.xlu0 %3319
        %3321 = vrot.lane.b32.xlu0 %v3304, 16
        %v3322 = vpop.permute.xlu0 %3321
        %3323 = vrot.lane.b32.xlu0 %v3305, 16
        %v3324 = vpop.permute.xlu0 %3323
        %3325 = vrot.lane.b32.xlu0 %v3306, 16
        %v3326 = vpop.permute.xlu0 %3325
        %3327 = vrot.lane.b32.xlu0 %v3307, 16
        %v3328 = vpop.permute.xlu0 %3327
        %3329 = vrot.lane.b32.xlu0 %v3308, 16
        %v3330 = vpop.permute.xlu0 %3329
        %3331 = vrot.lane.b32.xlu0 %v3309, 16
        %v3332 = vpop.permute.xlu0 %3331
        %3333 = vrot.lane.b32.xlu0 %v3310, 16
        %v3334 = vpop.permute.xlu0 %3333
        %v3343 = vadd.f32 %v3263, %v3320
        %v3344 = vadd.f32 %v3264, %v3322
        %v3345 = vadd.f32 %v3265, %v3324
        %v3346 = vadd.f32 %v3266, %v3326
        %v3347 = vadd.f32 %v3267, %v3328
        %v3348 = vadd.f32 %v3268, %v3330
        %v3349 = vadd.f32 %v3269, %v3332
        %v3350 = vadd.f32 %v3270, %v3334
        %v3351 = vtanh.pop %v3343
        %v3352 = vtanh.pop %v3344
        %v3353 = vtanh.pop %v3345
        %v3354 = vtanh.pop %v3346
        %v3355 = vtanh.pop %v3347
        %v3356 = vtanh.pop %v3348
        %v3357 = vtanh.pop %v3349
        %v3358 = vtanh.pop %v3350
        %3367 = vrot.lane.b32.xlu0 %v3351, 32
        %v3368 = vpop.permute.xlu0 %3367
        %3369 = vrot.lane.b32.xlu0 %v3352, 32
        %v3370 = vpop.permute.xlu0 %3369
        %3371 = vrot.lane.b32.xlu0 %v3353, 32
        %v3372 = vpop.permute.xlu0 %3371
        %3373 = vrot.lane.b32.xlu0 %v3354, 32
        %v3374 = vpop.permute.xlu0 %3373
        %3375 = vrot.lane.b32.xlu0 %v3355, 32
        %v3376 = vpop.permute.xlu0 %3375
        %3377 = vrot.lane.b32.xlu0 %v3356, 32
        %v3378 = vpop.permute.xlu0 %3377
        %3379 = vrot.lane.b32.xlu0 %v3357, 32
        %v3380 = vpop.permute.xlu0 %3379
        %3381 = vrot.lane.b32.xlu0 %v3358, 32
        %v3382 = vpop.permute.xlu0 %3381
        %v3391 = vmul.f32 %v3149, %v3368
        %v3392 = vmul.f32 %v3164, %v3370
        %v3393 = vmul.f32 %v3179, %v3372
        %v3394 = vmul.f32 %v3194, %v3374
        %v3395 = vmul.f32 %v3209, %v3376
        %v3396 = vmul.f32 %v3224, %v3378
        %v3397 = vmul.f32 %v3239, %v3380
        %v3398 = vmul.f32 %v3254, %v3382
        %3399 = vset.pattern.permute.xlu0 5
        %3400 = vperm.xlu0 %3399, %v579
        %v3401 = vpop.permute.xlu0 %3400
        %3403 = vset.pattern.permute.xlu0 5
        %3404 = vperm.xlu0 %3403, %v580
        %v3405 = vpop.permute.xlu0 %3404
        %3407 = vset.pattern.permute.xlu0 5
        %3408 = vperm.xlu0 %3407, %v581
        %v3409 = vpop.permute.xlu0 %3408
        %3411 = vset.pattern.permute.xlu0 5
        %3412 = vperm.xlu0 %3411, %v582
        %v3413 = vpop.permute.xlu0 %3412
        %3415 = vset.pattern.permute.xlu0 5
        %3416 = vperm.xlu0 %3415, %v583
        %v3417 = vpop.permute.xlu0 %3416
        %3419 = vset.pattern.permute.xlu0 5
        %3420 = vperm.xlu0 %3419, %v584
        %v3421 = vpop.permute.xlu0 %3420
        %3423 = vset.pattern.permute.xlu0 5
        %3424 = vperm.xlu0 %3423, %v585
        %v3425 = vpop.permute.xlu0 %3424
        %3427 = vset.pattern.permute.xlu0 5
        %3428 = vperm.xlu0 %3427, %v586
        %v3429 = vpop.permute.xlu0 %3428
        %v3431 = vmul.f32 %v3401, %v619
        %v3432 = vmul.f32 %v3405, %v620
        %v3433 = vmul.f32 %v3409, %v621
        %v3434 = vmul.f32 %v3413, %v622
        %v3435 = vmul.f32 %v3417, %v623
        %v3436 = vmul.f32 %v3421, %v624
        %v3437 = vmul.f32 %v3425, %v625
        %v3438 = vmul.f32 %v3429, %v626
        %v3439 = vadd.f32 %v3431, %v651
        %v3440 = vadd.f32 %v3432, %v652
        %v3441 = vadd.f32 %v3433, %v653
        %v3442 = vadd.f32 %v3434, %v654
        %v3443 = vadd.f32 %v3435, %v655
        %v3444 = vadd.f32 %v3436, %v656
        %v3445 = vadd.f32 %v3437, %v657
        %v3446 = vadd.f32 %v3438, %v658
        %3448 = vrot.lane.b32.xlu0 %v3391, 80
        %v3449 = vpop.permute.xlu0 %3448
        %v3450 = vsel %vm723, %v3449, 0
        %3452 = vmatpush.msra.mxu0 0.0
        %3453 = vmatpush.msra.mxu0 0.0
        %3454 = vmatpush.msra.mxu0 0.0
        %3455 = vmatpush.msra.mxu0 0.0
        %3456 = vmatpush.msra.mxu0 0.0
        %3457 = vmatpush.msra.mxu0 0.0
        %3458 = vmatpush.msra.mxu0 0.0
        %3459 = vmatpush.msra.mxu0 0.0
        %3460 = vmatpush.msra.mxu0 0.0
        %3461 = vmatpush.msra.mxu0 0.0
        %3462 = vmatpush.msra.mxu0 0.0
        %3463 = vmatpush.msra.mxu0 0.0
        %3464 = vmatpush.msra.mxu0 0.0
        %3465 = vmatpush.msra.mxu0 0.0
        %3466 = vmatpush.msra.mxu0 %v588
        %3467 = vmatpush.msra.mxu0 %v587
        %3468 = vmatmul.f32.gmra.mxu0 %v3450
        %v3469 = vpop.f32.mrf.mxu0
        %v3470 = vadd.f32 0.0, %v3469
        %3471 = vdwg.mxu0
        %3473 = vrot.lane.b32.xlu0 %v3392, 80
        %v3474 = vpop.permute.xlu0 %3473
        %v3475 = vsel %vm723, %v3474, 0
        %3477 = vmatpush.msra.mxu0 0.0
        %3478 = vmatpush.msra.mxu0 0.0
        %3479 = vmatpush.msra.mxu0 0.0
        %3480 = vmatpush.msra.mxu0 0.0
        %3481 = vmatpush.msra.mxu0 0.0
        %3482 = vmatpush.msra.mxu0 0.0
        %3483 = vmatpush.msra.mxu0 0.0
        %3484 = vmatpush.msra.mxu0 0.0
        %3485 = vmatpush.msra.mxu0 0.0
        %3486 = vmatpush.msra.mxu0 0.0
        %3487 = vmatpush.msra.mxu0 0.0
        %3488 = vmatpush.msra.mxu0 0.0
        %3489 = vmatpush.msra.mxu0 0.0
        %3490 = vmatpush.msra.mxu0 0.0
        %3491 = vmatpush.msra.mxu0 %v590
        %3492 = vmatpush.msra.mxu0 %v589
        %3493 = vmatmul.f32.gmra.mxu0 %v3475
        %v3494 = vpop.f32.mrf.mxu0
        %v3495 = vadd.f32 0.0, %v3494
        %3496 = vdwg.mxu0
        %3498 = vrot.lane.b32.xlu0 %v3393, 80
        %v3499 = vpop.permute.xlu0 %3498
        %v3500 = vsel %vm723, %v3499, 0
        %3502 = vmatpush.msra.mxu0 0.0
        %3503 = vmatpush.msra.mxu0 0.0
        %3504 = vmatpush.msra.mxu0 0.0
        %3505 = vmatpush.msra.mxu0 0.0
        %3506 = vmatpush.msra.mxu0 0.0
        %3507 = vmatpush.msra.mxu0 0.0
        %3508 = vmatpush.msra.mxu0 0.0
        %3509 = vmatpush.msra.mxu0 0.0
        %3510 = vmatpush.msra.mxu0 0.0
        %3511 = vmatpush.msra.mxu0 0.0
        %3512 = vmatpush.msra.mxu0 0.0
        %3513 = vmatpush.msra.mxu0 0.0
        %3514 = vmatpush.msra.mxu0 0.0
        %3515 = vmatpush.msra.mxu0 0.0
        %3516 = vmatpush.msra.mxu0 %v592
        %3517 = vmatpush.msra.mxu0 %v591
        %3518 = vmatmul.f32.gmra.mxu0 %v3500
        %v3519 = vpop.f32.mrf.mxu0
        %v3520 = vadd.f32 0.0, %v3519
        %3521 = vdwg.mxu0
        %3523 = vrot.lane.b32.xlu0 %v3394, 80
        %v3524 = vpop.permute.xlu0 %3523
        %v3525 = vsel %vm723, %v3524, 0
        %3527 = vmatpush.msra.mxu0 0.0
        %3528 = vmatpush.msra.mxu0 0.0
        %3529 = vmatpush.msra.mxu0 0.0
        %3530 = vmatpush.msra.mxu0 0.0
        %3531 = vmatpush.msra.mxu0 0.0
        %3532 = vmatpush.msra.mxu0 0.0
        %3533 = vmatpush.msra.mxu0 0.0
        %3534 = vmatpush.msra.mxu0 0.0
        %3535 = vmatpush.msra.mxu0 0.0
        %3536 = vmatpush.msra.mxu0 0.0
        %3537 = vmatpush.msra.mxu0 0.0
        %3538 = vmatpush.msra.mxu0 0.0
        %3539 = vmatpush.msra.mxu0 0.0
        %3540 = vmatpush.msra.mxu0 0.0
        %3541 = vmatpush.msra.mxu0 %v594
        %3542 = vmatpush.msra.mxu0 %v593
        %3543 = vmatmul.f32.gmra.mxu0 %v3525
        %v3544 = vpop.f32.mrf.mxu0
        %v3545 = vadd.f32 0.0, %v3544
        %3546 = vdwg.mxu0
        %3548 = vrot.lane.b32.xlu0 %v3395, 80
        %v3549 = vpop.permute.xlu0 %3548
        %v3550 = vsel %vm723, %v3549, 0
        %3552 = vmatpush.msra.mxu0 0.0
        %3553 = vmatpush.msra.mxu0 0.0
        %3554 = vmatpush.msra.mxu0 0.0
        %3555 = vmatpush.msra.mxu0 0.0
        %3556 = vmatpush.msra.mxu0 0.0
        %3557 = vmatpush.msra.mxu0 0.0
        %3558 = vmatpush.msra.mxu0 0.0
        %3559 = vmatpush.msra.mxu0 0.0
        %3560 = vmatpush.msra.mxu0 0.0
        %3561 = vmatpush.msra.mxu0 0.0
        %3562 = vmatpush.msra.mxu0 0.0
        %3563 = vmatpush.msra.mxu0 0.0
        %3564 = vmatpush.msra.mxu0 0.0
        %3565 = vmatpush.msra.mxu0 0.0
        %3566 = vmatpush.msra.mxu0 %v596
        %3567 = vmatpush.msra.mxu0 %v595
        %3568 = vmatmul.f32.gmra.mxu0 %v3550
        %v3569 = vpop.f32.mrf.mxu0
        %v3570 = vadd.f32 0.0, %v3569
        %3571 = vdwg.mxu0
        %3573 = vrot.lane.b32.xlu0 %v3396, 80
        %v3574 = vpop.permute.xlu0 %3573
        %v3575 = vsel %vm723, %v3574, 0
        %3577 = vmatpush.msra.mxu0 0.0
        %3578 = vmatpush.msra.mxu0 0.0
        %3579 = vmatpush.msra.mxu0 0.0
        %3580 = vmatpush.msra.mxu0 0.0
        %3581 = vmatpush.msra.mxu0 0.0
        %3582 = vmatpush.msra.mxu0 0.0
        %3583 = vmatpush.msra.mxu0 0.0
        %3584 = vmatpush.msra.mxu0 0.0
        %3585 = vmatpush.msra.mxu0 0.0
        %3586 = vmatpush.msra.mxu0 0.0
        %3587 = vmatpush.msra.mxu0 0.0
        %3588 = vmatpush.msra.mxu0 0.0
        %3589 = vmatpush.msra.mxu0 0.0
        %3590 = vmatpush.msra.mxu0 0.0
        %3591 = vmatpush.msra.mxu0 %v598
        %3592 = vmatpush.msra.mxu0 %v597
        %3593 = vmatmul.f32.gmra.mxu0 %v3575
        %v3594 = vpop.f32.mrf.mxu0
        %v3595 = vadd.f32 0.0, %v3594
        %3596 = vdwg.mxu0
        %3598 = vrot.lane.b32.xlu0 %v3397, 80
        %v3599 = vpop.permute.xlu0 %3598
        %v3600 = vsel %vm723, %v3599, 0
        %3602 = vmatpush.msra.mxu0 0.0
        %3603 = vmatpush.msra.mxu0 0.0
        %3604 = vmatpush.msra.mxu0 0.0
        %3605 = vmatpush.msra.mxu0 0.0
        %3606 = vmatpush.msra.mxu0 0.0
        %3607 = vmatpush.msra.mxu0 0.0
        %3608 = vmatpush.msra.mxu0 0.0
        %3609 = vmatpush.msra.mxu0 0.0
        %3610 = vmatpush.msra.mxu0 0.0
        %3611 = vmatpush.msra.mxu0 0.0
        %3612 = vmatpush.msra.mxu0 0.0
        %3613 = vmatpush.msra.mxu0 0.0
        %3614 = vmatpush.msra.mxu0 0.0
        %3615 = vmatpush.msra.mxu0 0.0
        %3616 = vmatpush.msra.mxu0 %v600
        %3617 = vmatpush.msra.mxu0 %v599
        %3618 = vmatmul.f32.gmra.mxu0 %v3600
        %v3619 = vpop.f32.mrf.mxu0
        %v3620 = vadd.f32 0.0, %v3619
        %3621 = vdwg.mxu0
        %3623 = vrot.lane.b32.xlu0 %v3398, 80
        %v3624 = vpop.permute.xlu0 %3623
        %v3625 = vsel %vm723, %v3624, 0
        %3627 = vmatpush.msra.mxu0 0.0
        %3628 = vmatpush.msra.mxu0 0.0
        %3629 = vmatpush.msra.mxu0 0.0
        %3630 = vmatpush.msra.mxu0 0.0
        %3631 = vmatpush.msra.mxu0 0.0
        %3632 = vmatpush.msra.mxu0 0.0
        %3633 = vmatpush.msra.mxu0 0.0
        %3634 = vmatpush.msra.mxu0 0.0
        %3635 = vmatpush.msra.mxu0 0.0
        %3636 = vmatpush.msra.mxu0 0.0
        %3637 = vmatpush.msra.mxu0 0.0
        %3638 = vmatpush.msra.mxu0 0.0
        %3639 = vmatpush.msra.mxu0 0.0
        %3640 = vmatpush.msra.mxu0 0.0
        %3641 = vmatpush.msra.mxu0 %v602
        %3642 = vmatpush.msra.mxu0 %v601
        %3643 = vmatmul.f32.gmra.mxu0 %v3625
        %v3644 = vpop.f32.mrf.mxu0
        %v3645 = vadd.f32 0.0, %v3644
        %3646 = vdwg.mxu0
        %v3647 = vadd.f32 %v3439, %v3470
        %v3648 = vadd.f32 %v3440, %v3495
        %v3649 = vadd.f32 %v3441, %v3520
        %v3650 = vadd.f32 %v3442, %v3545
        %v3651 = vadd.f32 %v3443, %v3570
        %v3652 = vadd.f32 %v3444, %v3595
        %v3653 = vadd.f32 %v3445, %v3620
        %v3654 = vadd.f32 %v3446, %v3645
        %v3655 = vxor.u32 %v3647, 2147483648
        %v3656 = vxor.u32 %v3648, 2147483648
        %v3657 = vxor.u32 %v3649, 2147483648
        %v3658 = vxor.u32 %v3650, 2147483648
        %v3659 = vxor.u32 %v3651, 2147483648
        %v3660 = vxor.u32 %v3652, 2147483648
        %v3661 = vxor.u32 %v3653, 2147483648
        %v3662 = vxor.u32 %v3654, 2147483648
        %v3663 = vmul.f32 %v3655, 1.442695
        %v3664 = vpow.pop %v3663
        %v3665 = vmul.f32 %v3656, 1.442695
        %v3666 = vpow.pop %v3665
        %v3667 = vmul.f32 %v3657, 1.442695
        %v3668 = vpow.pop %v3667
        %v3669 = vmul.f32 %v3658, 1.442695
        %v3670 = vpow.pop %v3669
        %v3671 = vmul.f32 %v3659, 1.442695
        %v3672 = vpow.pop %v3671
        %v3673 = vmul.f32 %v3660, 1.442695
        %v3674 = vpow.pop %v3673
        %v3675 = vmul.f32 %v3661, 1.442695
        %v3676 = vpow.pop %v3675
        %v3677 = vmul.f32 %v3662, 1.442695
        %v3678 = vpow.pop %v3677
        %v3679 = vadd.f32 %v3664, 1.0
        %v3680 = vadd.f32 %v3666, 1.0
        %v3681 = vadd.f32 %v3668, 1.0
        %v3682 = vadd.f32 %v3670, 1.0
        %v3683 = vadd.f32 %v3672, 1.0
        %v3684 = vadd.f32 %v3674, 1.0
        %v3685 = vadd.f32 %v3676, 1.0
        %v3686 = vadd.f32 %v3678, 1.0
        %v3687 = vrcp.pop %v3679
        %v3688 = vmul.f32 %v3679, %v3687
        %v3689 = vsub.f32 1.0, %v3688
        %v3690 = vmul.f32 %v3687, %v3689
        %v3691 = vadd.f32 %v3687, %v3690
        %vm3692 = vweird.f32 %v3679
        %vm3693 = vweird.f32 %v3687
        %vm3694 = vmor %vm3692, %vm3693
        %v3695 = vsel %vm3694, %v3687, %v3691
        %v3696 = vand.u32 2147483647, %v3679
        %vm3697 = vcmp.eq.f32.partialorder %v3696, 8.507059e+37
        %v3698 = vand.u32 %v3679, 2147483648
        %v3699 = vor.u32 1.1754944e-38, %v3698
        %v3700 = vsel %vm3697, %v3699, %v3695
        %v3701 = vmul.f32 1.0, %v3700
        %v3702 = vrcp.pop %v3680
        %v3703 = vmul.f32 %v3680, %v3702
        %v3704 = vsub.f32 1.0, %v3703
        %v3705 = vmul.f32 %v3702, %v3704
        %v3706 = vadd.f32 %v3702, %v3705
        %vm3707 = vweird.f32 %v3680
        %vm3708 = vweird.f32 %v3702
        %vm3709 = vmor %vm3707, %vm3708
        %v3710 = vsel %vm3709, %v3702, %v3706
        %v3711 = vand.u32 2147483647, %v3680
        %vm3712 = vcmp.eq.f32.partialorder %v3711, 8.507059e+37
        %v3713 = vand.u32 %v3680, 2147483648
        %v3714 = vor.u32 1.1754944e-38, %v3713
        %v3715 = vsel %vm3712, %v3714, %v3710
        %v3716 = vmul.f32 1.0, %v3715
        %v3717 = vrcp.pop %v3681
        %v3718 = vmul.f32 %v3681, %v3717
        %v3719 = vsub.f32 1.0, %v3718
        %v3720 = vmul.f32 %v3717, %v3719
        %v3721 = vadd.f32 %v3717, %v3720
        %vm3722 = vweird.f32 %v3681
        %vm3723 = vweird.f32 %v3717
        %vm3724 = vmor %vm3722, %vm3723
        %v3725 = vsel %vm3724, %v3717, %v3721
        %v3726 = vand.u32 2147483647, %v3681
        %vm3727 = vcmp.eq.f32.partialorder %v3726, 8.507059e+37
        %v3728 = vand.u32 %v3681, 2147483648
        %v3729 = vor.u32 1.1754944e-38, %v3728
        %v3730 = vsel %vm3727, %v3729, %v3725
        %v3731 = vmul.f32 1.0, %v3730
        %v3732 = vrcp.pop %v3682
        %v3733 = vmul.f32 %v3682, %v3732
        %v3734 = vsub.f32 1.0, %v3733
        %v3735 = vmul.f32 %v3732, %v3734
        %v3736 = vadd.f32 %v3732, %v3735
        %vm3737 = vweird.f32 %v3682
        %vm3738 = vweird.f32 %v3732
        %vm3739 = vmor %vm3737, %vm3738
        %v3740 = vsel %vm3739, %v3732, %v3736
        %v3741 = vand.u32 2147483647, %v3682
        %vm3742 = vcmp.eq.f32.partialorder %v3741, 8.507059e+37
        %v3743 = vand.u32 %v3682, 2147483648
        %v3744 = vor.u32 1.1754944e-38, %v3743
        %v3745 = vsel %vm3742, %v3744, %v3740
        %v3746 = vmul.f32 1.0, %v3745
        %v3747 = vrcp.pop %v3683
        %v3748 = vmul.f32 %v3683, %v3747
        %v3749 = vsub.f32 1.0, %v3748
        %v3750 = vmul.f32 %v3747, %v3749
        %v3751 = vadd.f32 %v3747, %v3750
        %vm3752 = vweird.f32 %v3683
        %vm3753 = vweird.f32 %v3747
        %vm3754 = vmor %vm3752, %vm3753
        %v3755 = vsel %vm3754, %v3747, %v3751
        %v3756 = vand.u32 2147483647, %v3683
        %vm3757 = vcmp.eq.f32.partialorder %v3756, 8.507059e+37
        %v3758 = vand.u32 %v3683, 2147483648
        %v3759 = vor.u32 1.1754944e-38, %v3758
        %v3760 = vsel %vm3757, %v3759, %v3755
        %v3761 = vmul.f32 1.0, %v3760
        %v3762 = vrcp.pop %v3684
        %v3763 = vmul.f32 %v3684, %v3762
        %v3764 = vsub.f32 1.0, %v3763
        %v3765 = vmul.f32 %v3762, %v3764
        %v3766 = vadd.f32 %v3762, %v3765
        %vm3767 = vweird.f32 %v3684
        %vm3768 = vweird.f32 %v3762
        %vm3769 = vmor %vm3767, %vm3768
        %v3770 = vsel %vm3769, %v3762, %v3766
        %v3771 = vand.u32 2147483647, %v3684
        %vm3772 = vcmp.eq.f32.partialorder %v3771, 8.507059e+37
        %v3773 = vand.u32 %v3684, 2147483648
        %v3774 = vor.u32 1.1754944e-38, %v3773
        %v3775 = vsel %vm3772, %v3774, %v3770
        %v3776 = vmul.f32 1.0, %v3775
        %v3777 = vrcp.pop %v3685
        %v3778 = vmul.f32 %v3685, %v3777
        %v3779 = vsub.f32 1.0, %v3778
        %v3780 = vmul.f32 %v3777, %v3779
        %v3781 = vadd.f32 %v3777, %v3780
        %vm3782 = vweird.f32 %v3685
        %vm3783 = vweird.f32 %v3777
        %vm3784 = vmor %vm3782, %vm3783
        %v3785 = vsel %vm3784, %v3777, %v3781
        %v3786 = vand.u32 2147483647, %v3685
        %vm3787 = vcmp.eq.f32.partialorder %v3786, 8.507059e+37
        %v3788 = vand.u32 %v3685, 2147483648
        %v3789 = vor.u32 1.1754944e-38, %v3788
        %v3790 = vsel %vm3787, %v3789, %v3785
        %v3791 = vmul.f32 1.0, %v3790
        %v3792 = vrcp.pop %v3686
        %v3793 = vmul.f32 %v3686, %v3792
        %v3794 = vsub.f32 1.0, %v3793
        %v3795 = vmul.f32 %v3792, %v3794
        %v3796 = vadd.f32 %v3792, %v3795
        %vm3797 = vweird.f32 %v3686
        %vm3798 = vweird.f32 %v3792
        %vm3799 = vmor %vm3797, %vm3798
        %v3800 = vsel %vm3799, %v3792, %v3796
        %v3801 = vand.u32 2147483647, %v3686
        %vm3802 = vcmp.eq.f32.partialorder %v3801, 8.507059e+37
        %v3803 = vand.u32 %v3686, 2147483648
        %v3804 = vor.u32 1.1754944e-38, %v3803
        %v3805 = vsel %vm3802, %v3804, %v3800
        %v3806 = vmul.f32 1.0, %v3805
        %v3807 = vtanh.pop %v3647
        %v3808 = vtanh.pop %v3648
        %v3809 = vtanh.pop %v3649
        %v3810 = vtanh.pop %v3650
        %v3811 = vtanh.pop %v3651
        %v3812 = vtanh.pop %v3652
        %v3813 = vtanh.pop %v3653
        %v3814 = vtanh.pop %v3654
        %v3815 = vmul.f32 %v3701, %v3343
        %v3816 = vmul.f32 %v3716, %v3344
        %v3817 = vmul.f32 %v3731, %v3345
        %v3818 = vmul.f32 %v3746, %v3346
        %v3819 = vmul.f32 %v3761, %v3347
        %v3820 = vmul.f32 %v3776, %v3348
        %v3821 = vmul.f32 %v3791, %v3349
        %v3822 = vmul.f32 %v3806, %v3350
        %3831 = vrot.lane.b32.xlu0 %v3807, 96
        %v3832 = vpop.permute.xlu0 %3831
        %3833 = vrot.lane.b32.xlu0 %v3808, 96
        %v3834 = vpop.permute.xlu0 %3833
        %3835 = vrot.lane.b32.xlu0 %v3809, 96
        %v3836 = vpop.permute.xlu0 %3835
        %3837 = vrot.lane.b32.xlu0 %v3810, 96
        %v3838 = vpop.permute.xlu0 %3837
        %3839 = vrot.lane.b32.xlu0 %v3811, 96
        %v3840 = vpop.permute.xlu0 %3839
        %3841 = vrot.lane.b32.xlu0 %v3812, 96
        %v3842 = vpop.permute.xlu0 %3841
        %3843 = vrot.lane.b32.xlu0 %v3813, 96
        %v3844 = vpop.permute.xlu0 %3843
        %3845 = vrot.lane.b32.xlu0 %v3814, 96
        %v3846 = vpop.permute.xlu0 %3845
        %v3855 = vmul.f32 %v3701, %v3832
        %v3856 = vmul.f32 %v3716, %v3834
        %v3857 = vmul.f32 %v3731, %v3836
        %v3858 = vmul.f32 %v3746, %v3838
        %v3859 = vmul.f32 %v3761, %v3840
        %v3860 = vmul.f32 %v3776, %v3842
        %v3861 = vmul.f32 %v3791, %v3844
        %v3862 = vmul.f32 %v3806, %v3846
        %3871 = vrot.lane.b32.xlu0 %v3855, 16
        %v3872 = vpop.permute.xlu0 %3871
        %3873 = vrot.lane.b32.xlu0 %v3856, 16
        %v3874 = vpop.permute.xlu0 %3873
        %3875 = vrot.lane.b32.xlu0 %v3857, 16
        %v3876 = vpop.permute.xlu0 %3875
        %3877 = vrot.lane.b32.xlu0 %v3858, 16
        %v3878 = vpop.permute.xlu0 %3877
        %3879 = vrot.lane.b32.xlu0 %v3859, 16
        %v3880 = vpop.permute.xlu0 %3879
        %3881 = vrot.lane.b32.xlu0 %v3860, 16
        %v3882 = vpop.permute.xlu0 %3881
        %3883 = vrot.lane.b32.xlu0 %v3861, 16
        %v3884 = vpop.permute.xlu0 %3883
        %3885 = vrot.lane.b32.xlu0 %v3862, 16
        %v3886 = vpop.permute.xlu0 %3885
        %v3895 = vadd.f32 %v3815, %v3872
        %v3896 = vadd.f32 %v3816, %v3874
        %v3897 = vadd.f32 %v3817, %v3876
        %v3898 = vadd.f32 %v3818, %v3878
        %v3899 = vadd.f32 %v3819, %v3880
        %v3900 = vadd.f32 %v3820, %v3882
        %v3901 = vadd.f32 %v3821, %v3884
        %v3902 = vadd.f32 %v3822, %v3886
        %v3903 = vtanh.pop %v3895
        %v3904 = vtanh.pop %v3896
        %v3905 = vtanh.pop %v3897
        %v3906 = vtanh.pop %v3898
        %v3907 = vtanh.pop %v3899
        %v3908 = vtanh.pop %v3900
        %v3909 = vtanh.pop %v3901
        %v3910 = vtanh.pop %v3902
        %3919 = vrot.lane.b32.xlu0 %v3903, 32
        %v3920 = vpop.permute.xlu0 %3919
        %3921 = vrot.lane.b32.xlu0 %v3904, 32
        %v3922 = vpop.permute.xlu0 %3921
        %3923 = vrot.lane.b32.xlu0 %v3905, 32
        %v3924 = vpop.permute.xlu0 %3923
        %3925 = vrot.lane.b32.xlu0 %v3906, 32
        %v3926 = vpop.permute.xlu0 %3925
        %3927 = vrot.lane.b32.xlu0 %v3907, 32
        %v3928 = vpop.permute.xlu0 %3927
        %3929 = vrot.lane.b32.xlu0 %v3908, 32
        %v3930 = vpop.permute.xlu0 %3929
        %3931 = vrot.lane.b32.xlu0 %v3909, 32
        %v3932 = vpop.permute.xlu0 %3931
        %3933 = vrot.lane.b32.xlu0 %v3910, 32
        %v3934 = vpop.permute.xlu0 %3933
        %v3943 = vmul.f32 %v3701, %v3920
        %v3944 = vmul.f32 %v3716, %v3922
        %v3945 = vmul.f32 %v3731, %v3924
        %v3946 = vmul.f32 %v3746, %v3926
        %v3947 = vmul.f32 %v3761, %v3928
        %v3948 = vmul.f32 %v3776, %v3930
        %v3949 = vmul.f32 %v3791, %v3932
        %v3950 = vmul.f32 %v3806, %v3934
        %3951 = vset.pattern.permute.xlu0 6
        %3952 = vperm.xlu0 %3951, %v579
        %v3953 = vpop.permute.xlu0 %3952
        %3955 = vset.pattern.permute.xlu0 6
        %3956 = vperm.xlu0 %3955, %v580
        %v3957 = vpop.permute.xlu0 %3956
        %3959 = vset.pattern.permute.xlu0 6
        %3960 = vperm.xlu0 %3959, %v581
        %v3961 = vpop.permute.xlu0 %3960
        %3963 = vset.pattern.permute.xlu0 6
        %3964 = vperm.xlu0 %3963, %v582
        %v3965 = vpop.permute.xlu0 %3964
        %3967 = vset.pattern.permute.xlu0 6
        %3968 = vperm.xlu0 %3967, %v583
        %v3969 = vpop.permute.xlu0 %3968
        %3971 = vset.pattern.permute.xlu0 6
        %3972 = vperm.xlu0 %3971, %v584
        %v3973 = vpop.permute.xlu0 %3972
        %3975 = vset.pattern.permute.xlu0 6
        %3976 = vperm.xlu0 %3975, %v585
        %v3977 = vpop.permute.xlu0 %3976
        %3979 = vset.pattern.permute.xlu0 6
        %3980 = vperm.xlu0 %3979, %v586
        %v3981 = vpop.permute.xlu0 %3980
        %v3983 = vmul.f32 %v3953, %v619
        %v3984 = vmul.f32 %v3957, %v620
        %v3985 = vmul.f32 %v3961, %v621
        %v3986 = vmul.f32 %v3965, %v622
        %v3987 = vmul.f32 %v3969, %v623
        %v3988 = vmul.f32 %v3973, %v624
        %v3989 = vmul.f32 %v3977, %v625
        %v3990 = vmul.f32 %v3981, %v626
        %v3991 = vadd.f32 %v3983, %v651
        %v3992 = vadd.f32 %v3984, %v652
        %v3993 = vadd.f32 %v3985, %v653
        %v3994 = vadd.f32 %v3986, %v654
        %v3995 = vadd.f32 %v3987, %v655
        %v3996 = vadd.f32 %v3988, %v656
        %v3997 = vadd.f32 %v3989, %v657
        %v3998 = vadd.f32 %v3990, %v658
        %4000 = vrot.lane.b32.xlu0 %v3943, 80
        %v4001 = vpop.permute.xlu0 %4000
        %v4002 = vsel %vm723, %v4001, 0
        %4004 = vmatpush.msra.mxu0 0.0
        %4005 = vmatpush.msra.mxu0 0.0
        %4006 = vmatpush.msra.mxu0 0.0
        %4007 = vmatpush.msra.mxu0 0.0
        %4008 = vmatpush.msra.mxu0 0.0
        %4009 = vmatpush.msra.mxu0 0.0
        %4010 = vmatpush.msra.mxu0 0.0
        %4011 = vmatpush.msra.mxu0 0.0
        %4012 = vmatpush.msra.mxu0 0.0
        %4013 = vmatpush.msra.mxu0 0.0
        %4014 = vmatpush.msra.mxu0 0.0
        %4015 = vmatpush.msra.mxu0 0.0
        %4016 = vmatpush.msra.mxu0 0.0
        %4017 = vmatpush.msra.mxu0 0.0
        %4018 = vmatpush.msra.mxu0 %v588
        %4019 = vmatpush.msra.mxu0 %v587
        %4020 = vmatmul.f32.gmra.mxu0 %v4002
        %v4021 = vpop.f32.mrf.mxu0
        %v4022 = vadd.f32 0.0, %v4021
        %4023 = vdwg.mxu0
        %4025 = vrot.lane.b32.xlu0 %v3944, 80
        %v4026 = vpop.permute.xlu0 %4025
        %v4027 = vsel %vm723, %v4026, 0
        %4029 = vmatpush.msra.mxu0 0.0
        %4030 = vmatpush.msra.mxu0 0.0
        %4031 = vmatpush.msra.mxu0 0.0
        %4032 = vmatpush.msra.mxu0 0.0
        %4033 = vmatpush.msra.mxu0 0.0
        %4034 = vmatpush.msra.mxu0 0.0
        %4035 = vmatpush.msra.mxu0 0.0
        %4036 = vmatpush.msra.mxu0 0.0
        %4037 = vmatpush.msra.mxu0 0.0
        %4038 = vmatpush.msra.mxu0 0.0
        %4039 = vmatpush.msra.mxu0 0.0
        %4040 = vmatpush.msra.mxu0 0.0
        %4041 = vmatpush.msra.mxu0 0.0
        %4042 = vmatpush.msra.mxu0 0.0
        %4043 = vmatpush.msra.mxu0 %v590
        %4044 = vmatpush.msra.mxu0 %v589
        %4045 = vmatmul.f32.gmra.mxu0 %v4027
        %v4046 = vpop.f32.mrf.mxu0
        %v4047 = vadd.f32 0.0, %v4046
        %4048 = vdwg.mxu0
        %4050 = vrot.lane.b32.xlu0 %v3945, 80
        %v4051 = vpop.permute.xlu0 %4050
        %v4052 = vsel %vm723, %v4051, 0
        %4054 = vmatpush.msra.mxu0 0.0
        %4055 = vmatpush.msra.mxu0 0.0
        %4056 = vmatpush.msra.mxu0 0.0
        %4057 = vmatpush.msra.mxu0 0.0
        %4058 = vmatpush.msra.mxu0 0.0
        %4059 = vmatpush.msra.mxu0 0.0
        %4060 = vmatpush.msra.mxu0 0.0
        %4061 = vmatpush.msra.mxu0 0.0
        %4062 = vmatpush.msra.mxu0 0.0
        %4063 = vmatpush.msra.mxu0 0.0
        %4064 = vmatpush.msra.mxu0 0.0
        %4065 = vmatpush.msra.mxu0 0.0
        %4066 = vmatpush.msra.mxu0 0.0
        %4067 = vmatpush.msra.mxu0 0.0
        %4068 = vmatpush.msra.mxu0 %v592
        %4069 = vmatpush.msra.mxu0 %v591
        %4070 = vmatmul.f32.gmra.mxu0 %v4052
        %v4071 = vpop.f32.mrf.mxu0
        %v4072 = vadd.f32 0.0, %v4071
        %4073 = vdwg.mxu0
        %4075 = vrot.lane.b32.xlu0 %v3946, 80
        %v4076 = vpop.permute.xlu0 %4075
        %v4077 = vsel %vm723, %v4076, 0
        %4079 = vmatpush.msra.mxu0 0.0
        %4080 = vmatpush.msra.mxu0 0.0
        %4081 = vmatpush.msra.mxu0 0.0
        %4082 = vmatpush.msra.mxu0 0.0
        %4083 = vmatpush.msra.mxu0 0.0
        %4084 = vmatpush.msra.mxu0 0.0
        %4085 = vmatpush.msra.mxu0 0.0
        %4086 = vmatpush.msra.mxu0 0.0
        %4087 = vmatpush.msra.mxu0 0.0
        %4088 = vmatpush.msra.mxu0 0.0
        %4089 = vmatpush.msra.mxu0 0.0
        %4090 = vmatpush.msra.mxu0 0.0
        %4091 = vmatpush.msra.mxu0 0.0
        %4092 = vmatpush.msra.mxu0 0.0
        %4093 = vmatpush.msra.mxu0 %v594
        %4094 = vmatpush.msra.mxu0 %v593
        %4095 = vmatmul.f32.gmra.mxu0 %v4077
        %v4096 = vpop.f32.mrf.mxu0
        %v4097 = vadd.f32 0.0, %v4096
        %4098 = vdwg.mxu0
        %4100 = vrot.lane.b32.xlu0 %v3947, 80
        %v4101 = vpop.permute.xlu0 %4100
        %v4102 = vsel %vm723, %v4101, 0
        %4104 = vmatpush.msra.mxu0 0.0
        %4105 = vmatpush.msra.mxu0 0.0
        %4106 = vmatpush.msra.mxu0 0.0
        %4107 = vmatpush.msra.mxu0 0.0
        %4108 = vmatpush.msra.mxu0 0.0
        %4109 = vmatpush.msra.mxu0 0.0
        %4110 = vmatpush.msra.mxu0 0.0
        %4111 = vmatpush.msra.mxu0 0.0
        %4112 = vmatpush.msra.mxu0 0.0
        %4113 = vmatpush.msra.mxu0 0.0
        %4114 = vmatpush.msra.mxu0 0.0
        %4115 = vmatpush.msra.mxu0 0.0
        %4116 = vmatpush.msra.mxu0 0.0
        %4117 = vmatpush.msra.mxu0 0.0
        %4118 = vmatpush.msra.mxu0 %v596
        %4119 = vmatpush.msra.mxu0 %v595
        %4120 = vmatmul.f32.gmra.mxu0 %v4102
        %v4121 = vpop.f32.mrf.mxu0
        %v4122 = vadd.f32 0.0, %v4121
        %4123 = vdwg.mxu0
        %4125 = vrot.lane.b32.xlu0 %v3948, 80
        %v4126 = vpop.permute.xlu0 %4125
        %v4127 = vsel %vm723, %v4126, 0
        %4129 = vmatpush.msra.mxu0 0.0
        %4130 = vmatpush.msra.mxu0 0.0
        %4131 = vmatpush.msra.mxu0 0.0
        %4132 = vmatpush.msra.mxu0 0.0
        %4133 = vmatpush.msra.mxu0 0.0
        %4134 = vmatpush.msra.mxu0 0.0
        %4135 = vmatpush.msra.mxu0 0.0
        %4136 = vmatpush.msra.mxu0 0.0
        %4137 = vmatpush.msra.mxu0 0.0
        %4138 = vmatpush.msra.mxu0 0.0
        %4139 = vmatpush.msra.mxu0 0.0
        %4140 = vmatpush.msra.mxu0 0.0
        %4141 = vmatpush.msra.mxu0 0.0
        %4142 = vmatpush.msra.mxu0 0.0
        %4143 = vmatpush.msra.mxu0 %v598
        %4144 = vmatpush.msra.mxu0 %v597
        %4145 = vmatmul.f32.gmra.mxu0 %v4127
        %v4146 = vpop.f32.mrf.mxu0
        %v4147 = vadd.f32 0.0, %v4146
        %4148 = vdwg.mxu0
        %4150 = vrot.lane.b32.xlu0 %v3949, 80
        %v4151 = vpop.permute.xlu0 %4150
        %v4152 = vsel %vm723, %v4151, 0
        %4154 = vmatpush.msra.mxu0 0.0
        %4155 = vmatpush.msra.mxu0 0.0
        %4156 = vmatpush.msra.mxu0 0.0
        %4157 = vmatpush.msra.mxu0 0.0
        %4158 = vmatpush.msra.mxu0 0.0
        %4159 = vmatpush.msra.mxu0 0.0
        %4160 = vmatpush.msra.mxu0 0.0
        %4161 = vmatpush.msra.mxu0 0.0
        %4162 = vmatpush.msra.mxu0 0.0
        %4163 = vmatpush.msra.mxu0 0.0
        %4164 = vmatpush.msra.mxu0 0.0
        %4165 = vmatpush.msra.mxu0 0.0
        %4166 = vmatpush.msra.mxu0 0.0
        %4167 = vmatpush.msra.mxu0 0.0
        %4168 = vmatpush.msra.mxu0 %v600
        %4169 = vmatpush.msra.mxu0 %v599
        %4170 = vmatmul.f32.gmra.mxu0 %v4152
        %v4171 = vpop.f32.mrf.mxu0
        %v4172 = vadd.f32 0.0, %v4171
        %4173 = vdwg.mxu0
        %4175 = vrot.lane.b32.xlu0 %v3950, 80
        %v4176 = vpop.permute.xlu0 %4175
        %v4177 = vsel %vm723, %v4176, 0
        %4179 = vmatpush.msra.mxu0 0.0
        %4180 = vmatpush.msra.mxu0 0.0
        %4181 = vmatpush.msra.mxu0 0.0
        %4182 = vmatpush.msra.mxu0 0.0
        %4183 = vmatpush.msra.mxu0 0.0
        %4184 = vmatpush.msra.mxu0 0.0
        %4185 = vmatpush.msra.mxu0 0.0
        %4186 = vmatpush.msra.mxu0 0.0
        %4187 = vmatpush.msra.mxu0 0.0
        %4188 = vmatpush.msra.mxu0 0.0
        %4189 = vmatpush.msra.mxu0 0.0
        %4190 = vmatpush.msra.mxu0 0.0
        %4191 = vmatpush.msra.mxu0 0.0
        %4192 = vmatpush.msra.mxu0 0.0
        %4193 = vmatpush.msra.mxu0 %v602
        %4194 = vmatpush.msra.mxu0 %v601
        %4195 = vmatmul.f32.gmra.mxu0 %v4177
        %v4196 = vpop.f32.mrf.mxu0
        %v4197 = vadd.f32 0.0, %v4196
        %4198 = vdwg.mxu0
        %v4199 = vadd.f32 %v3991, %v4022
        %v4200 = vadd.f32 %v3992, %v4047
        %v4201 = vadd.f32 %v3993, %v4072
        %v4202 = vadd.f32 %v3994, %v4097
        %v4203 = vadd.f32 %v3995, %v4122
        %v4204 = vadd.f32 %v3996, %v4147
        %v4205 = vadd.f32 %v3997, %v4172
        %v4206 = vadd.f32 %v3998, %v4197
        %v4207 = vxor.u32 %v4199, 2147483648
        %v4208 = vxor.u32 %v4200, 2147483648
        %v4209 = vxor.u32 %v4201, 2147483648
        %v4210 = vxor.u32 %v4202, 2147483648
        %v4211 = vxor.u32 %v4203, 2147483648
        %v4212 = vxor.u32 %v4204, 2147483648
        %v4213 = vxor.u32 %v4205, 2147483648
        %v4214 = vxor.u32 %v4206, 2147483648
        %v4215 = vmul.f32 %v4207, 1.442695
        %v4216 = vpow.pop %v4215
        %v4217 = vmul.f32 %v4208, 1.442695
        %v4218 = vpow.pop %v4217
        %v4219 = vmul.f32 %v4209, 1.442695
        %v4220 = vpow.pop %v4219
        %v4221 = vmul.f32 %v4210, 1.442695
        %v4222 = vpow.pop %v4221
        %v4223 = vmul.f32 %v4211, 1.442695
        %v4224 = vpow.pop %v4223
        %v4225 = vmul.f32 %v4212, 1.442695
        %v4226 = vpow.pop %v4225
        %v4227 = vmul.f32 %v4213, 1.442695
        %v4228 = vpow.pop %v4227
        %v4229 = vmul.f32 %v4214, 1.442695
        %v4230 = vpow.pop %v4229
        %v4231 = vadd.f32 %v4216, 1.0
        %v4232 = vadd.f32 %v4218, 1.0
        %v4233 = vadd.f32 %v4220, 1.0
        %v4234 = vadd.f32 %v4222, 1.0
        %v4235 = vadd.f32 %v4224, 1.0
        %v4236 = vadd.f32 %v4226, 1.0
        %v4237 = vadd.f32 %v4228, 1.0
        %v4238 = vadd.f32 %v4230, 1.0
        %v4239 = vrcp.pop %v4231
        %v4240 = vmul.f32 %v4231, %v4239
        %v4241 = vsub.f32 1.0, %v4240
        %v4242 = vmul.f32 %v4239, %v4241
        %v4243 = vadd.f32 %v4239, %v4242
        %vm4244 = vweird.f32 %v4231
        %vm4245 = vweird.f32 %v4239
        %vm4246 = vmor %vm4244, %vm4245
        %v4247 = vsel %vm4246, %v4239, %v4243
        %v4248 = vand.u32 2147483647, %v4231
        %vm4249 = vcmp.eq.f32.partialorder %v4248, 8.507059e+37
        %v4250 = vand.u32 %v4231, 2147483648
        %v4251 = vor.u32 1.1754944e-38, %v4250
        %v4252 = vsel %vm4249, %v4251, %v4247
        %v4253 = vmul.f32 1.0, %v4252
        %v4254 = vrcp.pop %v4232
        %v4255 = vmul.f32 %v4232, %v4254
        %v4256 = vsub.f32 1.0, %v4255
        %v4257 = vmul.f32 %v4254, %v4256
        %v4258 = vadd.f32 %v4254, %v4257
        %vm4259 = vweird.f32 %v4232
        %vm4260 = vweird.f32 %v4254
        %vm4261 = vmor %vm4259, %vm4260
        %v4262 = vsel %vm4261, %v4254, %v4258
        %v4263 = vand.u32 2147483647, %v4232
        %vm4264 = vcmp.eq.f32.partialorder %v4263, 8.507059e+37
        %v4265 = vand.u32 %v4232, 2147483648
        %v4266 = vor.u32 1.1754944e-38, %v4265
        %v4267 = vsel %vm4264, %v4266, %v4262
        %v4268 = vmul.f32 1.0, %v4267
        %v4269 = vrcp.pop %v4233
        %v4270 = vmul.f32 %v4233, %v4269
        %v4271 = vsub.f32 1.0, %v4270
        %v4272 = vmul.f32 %v4269, %v4271
        %v4273 = vadd.f32 %v4269, %v4272
        %vm4274 = vweird.f32 %v4233
        %vm4275 = vweird.f32 %v4269
        %vm4276 = vmor %vm4274, %vm4275
        %v4277 = vsel %vm4276, %v4269, %v4273
        %v4278 = vand.u32 2147483647, %v4233
        %vm4279 = vcmp.eq.f32.partialorder %v4278, 8.507059e+37
        %v4280 = vand.u32 %v4233, 2147483648
        %v4281 = vor.u32 1.1754944e-38, %v4280
        %v4282 = vsel %vm4279, %v4281, %v4277
        %v4283 = vmul.f32 1.0, %v4282
        %v4284 = vrcp.pop %v4234
        %v4285 = vmul.f32 %v4234, %v4284
        %v4286 = vsub.f32 1.0, %v4285
        %v4287 = vmul.f32 %v4284, %v4286
        %v4288 = vadd.f32 %v4284, %v4287
        %vm4289 = vweird.f32 %v4234
        %vm4290 = vweird.f32 %v4284
        %vm4291 = vmor %vm4289, %vm4290
        %v4292 = vsel %vm4291, %v4284, %v4288
        %v4293 = vand.u32 2147483647, %v4234
        %vm4294 = vcmp.eq.f32.partialorder %v4293, 8.507059e+37
        %v4295 = vand.u32 %v4234, 2147483648
        %v4296 = vor.u32 1.1754944e-38, %v4295
        %v4297 = vsel %vm4294, %v4296, %v4292
        %v4298 = vmul.f32 1.0, %v4297
        %v4299 = vrcp.pop %v4235
        %v4300 = vmul.f32 %v4235, %v4299
        %v4301 = vsub.f32 1.0, %v4300
        %v4302 = vmul.f32 %v4299, %v4301
        %v4303 = vadd.f32 %v4299, %v4302
        %vm4304 = vweird.f32 %v4235
        %vm4305 = vweird.f32 %v4299
        %vm4306 = vmor %vm4304, %vm4305
        %v4307 = vsel %vm4306, %v4299, %v4303
        %v4308 = vand.u32 2147483647, %v4235
        %vm4309 = vcmp.eq.f32.partialorder %v4308, 8.507059e+37
        %v4310 = vand.u32 %v4235, 2147483648
        %v4311 = vor.u32 1.1754944e-38, %v4310
        %v4312 = vsel %vm4309, %v4311, %v4307
        %v4313 = vmul.f32 1.0, %v4312
        %v4314 = vrcp.pop %v4236
        %v4315 = vmul.f32 %v4236, %v4314
        %v4316 = vsub.f32 1.0, %v4315
        %v4317 = vmul.f32 %v4314, %v4316
        %v4318 = vadd.f32 %v4314, %v4317
        %vm4319 = vweird.f32 %v4236
        %vm4320 = vweird.f32 %v4314
        %vm4321 = vmor %vm4319, %vm4320
        %v4322 = vsel %vm4321, %v4314, %v4318
        %v4323 = vand.u32 2147483647, %v4236
        %vm4324 = vcmp.eq.f32.partialorder %v4323, 8.507059e+37
        %v4325 = vand.u32 %v4236, 2147483648
        %v4326 = vor.u32 1.1754944e-38, %v4325
        %v4327 = vsel %vm4324, %v4326, %v4322
        %v4328 = vmul.f32 1.0, %v4327
        %v4329 = vrcp.pop %v4237
        %v4330 = vmul.f32 %v4237, %v4329
        %v4331 = vsub.f32 1.0, %v4330
        %v4332 = vmul.f32 %v4329, %v4331
        %v4333 = vadd.f32 %v4329, %v4332
        %vm4334 = vweird.f32 %v4237
        %vm4335 = vweird.f32 %v4329
        %vm4336 = vmor %vm4334, %vm4335
        %v4337 = vsel %vm4336, %v4329, %v4333
        %v4338 = vand.u32 2147483647, %v4237
        %vm4339 = vcmp.eq.f32.partialorder %v4338, 8.507059e+37
        %v4340 = vand.u32 %v4237, 2147483648
        %v4341 = vor.u32 1.1754944e-38, %v4340
        %v4342 = vsel %vm4339, %v4341, %v4337
        %v4343 = vmul.f32 1.0, %v4342
        %v4344 = vrcp.pop %v4238
        %v4345 = vmul.f32 %v4238, %v4344
        %v4346 = vsub.f32 1.0, %v4345
        %v4347 = vmul.f32 %v4344, %v4346
        %v4348 = vadd.f32 %v4344, %v4347
        %vm4349 = vweird.f32 %v4238
        %vm4350 = vweird.f32 %v4344
        %vm4351 = vmor %vm4349, %vm4350
        %v4352 = vsel %vm4351, %v4344, %v4348
        %v4353 = vand.u32 2147483647, %v4238
        %vm4354 = vcmp.eq.f32.partialorder %v4353, 8.507059e+37
        %v4355 = vand.u32 %v4238, 2147483648
        %v4356 = vor.u32 1.1754944e-38, %v4355
        %v4357 = vsel %vm4354, %v4356, %v4352
        %v4358 = vmul.f32 1.0, %v4357
        %v4359 = vtanh.pop %v4199
        %v4360 = vtanh.pop %v4200
        %v4361 = vtanh.pop %v4201
        %v4362 = vtanh.pop %v4202
        %v4363 = vtanh.pop %v4203
        %v4364 = vtanh.pop %v4204
        %v4365 = vtanh.pop %v4205
        %v4366 = vtanh.pop %v4206
        %v4367 = vmul.f32 %v4253, %v3895
        %v4368 = vmul.f32 %v4268, %v3896
        %v4369 = vmul.f32 %v4283, %v3897
        %v4370 = vmul.f32 %v4298, %v3898
        %v4371 = vmul.f32 %v4313, %v3899
        %v4372 = vmul.f32 %v4328, %v3900
        %v4373 = vmul.f32 %v4343, %v3901
        %v4374 = vmul.f32 %v4358, %v3902
        %4383 = vrot.lane.b32.xlu0 %v4359, 96
        %v4384 = vpop.permute.xlu0 %4383
        %4385 = vrot.lane.b32.xlu0 %v4360, 96
        %v4386 = vpop.permute.xlu0 %4385
        %4387 = vrot.lane.b32.xlu0 %v4361, 96
        %v4388 = vpop.permute.xlu0 %4387
        %4389 = vrot.lane.b32.xlu0 %v4362, 96
        %v4390 = vpop.permute.xlu0 %4389
        %4391 = vrot.lane.b32.xlu0 %v4363, 96
        %v4392 = vpop.permute.xlu0 %4391
        %4393 = vrot.lane.b32.xlu0 %v4364, 96
        %v4394 = vpop.permute.xlu0 %4393
        %4395 = vrot.lane.b32.xlu0 %v4365, 96
        %v4396 = vpop.permute.xlu0 %4395
        %4397 = vrot.lane.b32.xlu0 %v4366, 96
        %v4398 = vpop.permute.xlu0 %4397
        %v4407 = vmul.f32 %v4253, %v4384
        %v4408 = vmul.f32 %v4268, %v4386
        %v4409 = vmul.f32 %v4283, %v4388
        %v4410 = vmul.f32 %v4298, %v4390
        %v4411 = vmul.f32 %v4313, %v4392
        %v4412 = vmul.f32 %v4328, %v4394
        %v4413 = vmul.f32 %v4343, %v4396
        %v4414 = vmul.f32 %v4358, %v4398
        %4423 = vrot.lane.b32.xlu0 %v4407, 16
        %v4424 = vpop.permute.xlu0 %4423
        %4425 = vrot.lane.b32.xlu0 %v4408, 16
        %v4426 = vpop.permute.xlu0 %4425
        %4427 = vrot.lane.b32.xlu0 %v4409, 16
        %v4428 = vpop.permute.xlu0 %4427
        %4429 = vrot.lane.b32.xlu0 %v4410, 16
        %v4430 = vpop.permute.xlu0 %4429
        %4431 = vrot.lane.b32.xlu0 %v4411, 16
        %v4432 = vpop.permute.xlu0 %4431
        %4433 = vrot.lane.b32.xlu0 %v4412, 16
        %v4434 = vpop.permute.xlu0 %4433
        %4435 = vrot.lane.b32.xlu0 %v4413, 16
        %v4436 = vpop.permute.xlu0 %4435
        %4437 = vrot.lane.b32.xlu0 %v4414, 16
        %v4438 = vpop.permute.xlu0 %4437
        %v4447 = vadd.f32 %v4367, %v4424
        %v4448 = vadd.f32 %v4368, %v4426
        %v4449 = vadd.f32 %v4369, %v4428
        %v4450 = vadd.f32 %v4370, %v4430
        %v4451 = vadd.f32 %v4371, %v4432
        %v4452 = vadd.f32 %v4372, %v4434
        %v4453 = vadd.f32 %v4373, %v4436
        %v4454 = vadd.f32 %v4374, %v4438
        %v4455 = vtanh.pop %v4447
        %v4456 = vtanh.pop %v4448
        %v4457 = vtanh.pop %v4449
        %v4458 = vtanh.pop %v4450
        %v4459 = vtanh.pop %v4451
        %v4460 = vtanh.pop %v4452
        %v4461 = vtanh.pop %v4453
        %v4462 = vtanh.pop %v4454
        %4471 = vrot.lane.b32.xlu0 %v4455, 32
        %v4472 = vpop.permute.xlu0 %4471
        %4473 = vrot.lane.b32.xlu0 %v4456, 32
        %v4474 = vpop.permute.xlu0 %4473
        %4475 = vrot.lane.b32.xlu0 %v4457, 32
        %v4476 = vpop.permute.xlu0 %4475
        %4477 = vrot.lane.b32.xlu0 %v4458, 32
        %v4478 = vpop.permute.xlu0 %4477
        %4479 = vrot.lane.b32.xlu0 %v4459, 32
        %v4480 = vpop.permute.xlu0 %4479
        %4481 = vrot.lane.b32.xlu0 %v4460, 32
        %v4482 = vpop.permute.xlu0 %4481
        %4483 = vrot.lane.b32.xlu0 %v4461, 32
        %v4484 = vpop.permute.xlu0 %4483
        %4485 = vrot.lane.b32.xlu0 %v4462, 32
        %v4486 = vpop.permute.xlu0 %4485
        %v4495 = vmul.f32 %v4253, %v4472
        %v4496 = vmul.f32 %v4268, %v4474
        %v4497 = vmul.f32 %v4283, %v4476
        %v4498 = vmul.f32 %v4298, %v4478
        %v4499 = vmul.f32 %v4313, %v4480
        %v4500 = vmul.f32 %v4328, %v4482
        %v4501 = vmul.f32 %v4343, %v4484
        %v4502 = vmul.f32 %v4358, %v4486
        %4503 = vset.pattern.permute.xlu0 7
        %4504 = vperm.xlu0 %4503, %v579
        %v4505 = vpop.permute.xlu0 %4504
        %4507 = vset.pattern.permute.xlu0 7
        %4508 = vperm.xlu0 %4507, %v580
        %v4509 = vpop.permute.xlu0 %4508
        %4511 = vset.pattern.permute.xlu0 7
        %4512 = vperm.xlu0 %4511, %v581
        %v4513 = vpop.permute.xlu0 %4512
        %4515 = vset.pattern.permute.xlu0 7
        %4516 = vperm.xlu0 %4515, %v582
        %v4517 = vpop.permute.xlu0 %4516
        %4519 = vset.pattern.permute.xlu0 7
        %4520 = vperm.xlu0 %4519, %v583
        %v4521 = vpop.permute.xlu0 %4520
        %4523 = vset.pattern.permute.xlu0 7
        %4524 = vperm.xlu0 %4523, %v584
        %v4525 = vpop.permute.xlu0 %4524
        %4527 = vset.pattern.permute.xlu0 7
        %4528 = vperm.xlu0 %4527, %v585
        %v4529 = vpop.permute.xlu0 %4528
        %4531 = vset.pattern.permute.xlu0 7
        %4532 = vperm.xlu0 %4531, %v586
        %v4533 = vpop.permute.xlu0 %4532
        %v4535 = vmul.f32 %v4505, %v619
        %v4536 = vmul.f32 %v4509, %v620
        %v4537 = vmul.f32 %v4513, %v621
        %v4538 = vmul.f32 %v4517, %v622
        %v4539 = vmul.f32 %v4521, %v623
        %v4540 = vmul.f32 %v4525, %v624
        %v4541 = vmul.f32 %v4529, %v625
        %v4542 = vmul.f32 %v4533, %v626
        %v4543 = vadd.f32 %v4535, %v651
        %v4544 = vadd.f32 %v4536, %v652
        %v4545 = vadd.f32 %v4537, %v653
        %v4546 = vadd.f32 %v4538, %v654
        %v4547 = vadd.f32 %v4539, %v655
        %v4548 = vadd.f32 %v4540, %v656
        %v4549 = vadd.f32 %v4541, %v657
        %v4550 = vadd.f32 %v4542, %v658
        %4552 = vrot.lane.b32.xlu0 %v4495, 80
        %v4553 = vpop.permute.xlu0 %4552
        %v4554 = vsel %vm723, %v4553, 0
        %4556 = vmatpush.msra.mxu0 0.0
        %4557 = vmatpush.msra.mxu0 0.0
        %4558 = vmatpush.msra.mxu0 0.0
        %4559 = vmatpush.msra.mxu0 0.0
        %4560 = vmatpush.msra.mxu0 0.0
        %4561 = vmatpush.msra.mxu0 0.0
        %4562 = vmatpush.msra.mxu0 0.0
        %4563 = vmatpush.msra.mxu0 0.0
        %4564 = vmatpush.msra.mxu0 0.0
        %4565 = vmatpush.msra.mxu0 0.0
        %4566 = vmatpush.msra.mxu0 0.0
        %4567 = vmatpush.msra.mxu0 0.0
        %4568 = vmatpush.msra.mxu0 0.0
        %4569 = vmatpush.msra.mxu0 0.0
        %4570 = vmatpush.msra.mxu0 %v588
        %4571 = vmatpush.msra.mxu0 %v587
        %4572 = vmatmul.f32.gmra.mxu0 %v4554
        %v4573 = vpop.f32.mrf.mxu0
        %v4574 = vadd.f32 0.0, %v4573
        %4575 = vdwg.mxu0
        %4577 = vrot.lane.b32.xlu0 %v4496, 80
        %v4578 = vpop.permute.xlu0 %4577
        %v4579 = vsel %vm723, %v4578, 0
        %4581 = vmatpush.msra.mxu0 0.0
        %4582 = vmatpush.msra.mxu0 0.0
        %4583 = vmatpush.msra.mxu0 0.0
        %4584 = vmatpush.msra.mxu0 0.0
        %4585 = vmatpush.msra.mxu0 0.0
        %4586 = vmatpush.msra.mxu0 0.0
        %4587 = vmatpush.msra.mxu0 0.0
        %4588 = vmatpush.msra.mxu0 0.0
        %4589 = vmatpush.msra.mxu0 0.0
        %4590 = vmatpush.msra.mxu0 0.0
        %4591 = vmatpush.msra.mxu0 0.0
        %4592 = vmatpush.msra.mxu0 0.0
        %4593 = vmatpush.msra.mxu0 0.0
        %4594 = vmatpush.msra.mxu0 0.0
        %4595 = vmatpush.msra.mxu0 %v590
        %4596 = vmatpush.msra.mxu0 %v589
        %4597 = vmatmul.f32.gmra.mxu0 %v4579
        %v4598 = vpop.f32.mrf.mxu0
        %v4599 = vadd.f32 0.0, %v4598
        %4600 = vdwg.mxu0
        %4602 = vrot.lane.b32.xlu0 %v4497, 80
        %v4603 = vpop.permute.xlu0 %4602
        %v4604 = vsel %vm723, %v4603, 0
        %4606 = vmatpush.msra.mxu0 0.0
        %4607 = vmatpush.msra.mxu0 0.0
        %4608 = vmatpush.msra.mxu0 0.0
        %4609 = vmatpush.msra.mxu0 0.0
        %4610 = vmatpush.msra.mxu0 0.0
        %4611 = vmatpush.msra.mxu0 0.0
        %4612 = vmatpush.msra.mxu0 0.0
        %4613 = vmatpush.msra.mxu0 0.0
        %4614 = vmatpush.msra.mxu0 0.0
        %4615 = vmatpush.msra.mxu0 0.0
        %4616 = vmatpush.msra.mxu0 0.0
        %4617 = vmatpush.msra.mxu0 0.0
        %4618 = vmatpush.msra.mxu0 0.0
        %4619 = vmatpush.msra.mxu0 0.0
        %4620 = vmatpush.msra.mxu0 %v592
        %4621 = vmatpush.msra.mxu0 %v591
        %4622 = vmatmul.f32.gmra.mxu0 %v4604
        %v4623 = vpop.f32.mrf.mxu0
        %v4624 = vadd.f32 0.0, %v4623
        %4625 = vdwg.mxu0
        %4627 = vrot.lane.b32.xlu0 %v4498, 80
        %v4628 = vpop.permute.xlu0 %4627
        %v4629 = vsel %vm723, %v4628, 0
        %4631 = vmatpush.msra.mxu0 0.0
        %4632 = vmatpush.msra.mxu0 0.0
        %4633 = vmatpush.msra.mxu0 0.0
        %4634 = vmatpush.msra.mxu0 0.0
        %4635 = vmatpush.msra.mxu0 0.0
        %4636 = vmatpush.msra.mxu0 0.0
        %4637 = vmatpush.msra.mxu0 0.0
        %4638 = vmatpush.msra.mxu0 0.0
        %4639 = vmatpush.msra.mxu0 0.0
        %4640 = vmatpush.msra.mxu0 0.0
        %4641 = vmatpush.msra.mxu0 0.0
        %4642 = vmatpush.msra.mxu0 0.0
        %4643 = vmatpush.msra.mxu0 0.0
        %4644 = vmatpush.msra.mxu0 0.0
        %4645 = vmatpush.msra.mxu0 %v594
        %4646 = vmatpush.msra.mxu0 %v593
        %4647 = vmatmul.f32.gmra.mxu0 %v4629
        %v4648 = vpop.f32.mrf.mxu0
        %v4649 = vadd.f32 0.0, %v4648
        %4650 = vdwg.mxu0
        %4652 = vrot.lane.b32.xlu0 %v4499, 80
        %v4653 = vpop.permute.xlu0 %4652
        %v4654 = vsel %vm723, %v4653, 0
        %4656 = vmatpush.msra.mxu0 0.0
        %4657 = vmatpush.msra.mxu0 0.0
        %4658 = vmatpush.msra.mxu0 0.0
        %4659 = vmatpush.msra.mxu0 0.0
        %4660 = vmatpush.msra.mxu0 0.0
        %4661 = vmatpush.msra.mxu0 0.0
        %4662 = vmatpush.msra.mxu0 0.0
        %4663 = vmatpush.msra.mxu0 0.0
        %4664 = vmatpush.msra.mxu0 0.0
        %4665 = vmatpush.msra.mxu0 0.0
        %4666 = vmatpush.msra.mxu0 0.0
        %4667 = vmatpush.msra.mxu0 0.0
        %4668 = vmatpush.msra.mxu0 0.0
        %4669 = vmatpush.msra.mxu0 0.0
        %4670 = vmatpush.msra.mxu0 %v596
        %4671 = vmatpush.msra.mxu0 %v595
        %4672 = vmatmul.f32.gmra.mxu0 %v4654
        %v4673 = vpop.f32.mrf.mxu0
        %v4674 = vadd.f32 0.0, %v4673
        %4675 = vdwg.mxu0
        %4677 = vrot.lane.b32.xlu0 %v4500, 80
        %v4678 = vpop.permute.xlu0 %4677
        %v4679 = vsel %vm723, %v4678, 0
        %4681 = vmatpush.msra.mxu0 0.0
        %4682 = vmatpush.msra.mxu0 0.0
        %4683 = vmatpush.msra.mxu0 0.0
        %4684 = vmatpush.msra.mxu0 0.0
        %4685 = vmatpush.msra.mxu0 0.0
        %4686 = vmatpush.msra.mxu0 0.0
        %4687 = vmatpush.msra.mxu0 0.0
        %4688 = vmatpush.msra.mxu0 0.0
        %4689 = vmatpush.msra.mxu0 0.0
        %4690 = vmatpush.msra.mxu0 0.0
        %4691 = vmatpush.msra.mxu0 0.0
        %4692 = vmatpush.msra.mxu0 0.0
        %4693 = vmatpush.msra.mxu0 0.0
        %4694 = vmatpush.msra.mxu0 0.0
        %4695 = vmatpush.msra.mxu0 %v598
        %4696 = vmatpush.msra.mxu0 %v597
        %4697 = vmatmul.f32.gmra.mxu0 %v4679
        %v4698 = vpop.f32.mrf.mxu0
        %v4699 = vadd.f32 0.0, %v4698
        %4700 = vdwg.mxu0
        %4702 = vrot.lane.b32.xlu0 %v4501, 80
        %v4703 = vpop.permute.xlu0 %4702
        %v4704 = vsel %vm723, %v4703, 0
        %4706 = vmatpush.msra.mxu0 0.0
        %4707 = vmatpush.msra.mxu0 0.0
        %4708 = vmatpush.msra.mxu0 0.0
        %4709 = vmatpush.msra.mxu0 0.0
        %4710 = vmatpush.msra.mxu0 0.0
        %4711 = vmatpush.msra.mxu0 0.0
        %4712 = vmatpush.msra.mxu0 0.0
        %4713 = vmatpush.msra.mxu0 0.0
        %4714 = vmatpush.msra.mxu0 0.0
        %4715 = vmatpush.msra.mxu0 0.0
        %4716 = vmatpush.msra.mxu0 0.0
        %4717 = vmatpush.msra.mxu0 0.0
        %4718 = vmatpush.msra.mxu0 0.0
        %4719 = vmatpush.msra.mxu0 0.0
        %4720 = vmatpush.msra.mxu0 %v600
        %4721 = vmatpush.msra.mxu0 %v599
        %4722 = vmatmul.f32.gmra.mxu0 %v4704
        %v4723 = vpop.f32.mrf.mxu0
        %v4724 = vadd.f32 0.0, %v4723
        %4725 = vdwg.mxu0
        %4727 = vrot.lane.b32.xlu0 %v4502, 80
        %v4728 = vpop.permute.xlu0 %4727
        %v4729 = vsel %vm723, %v4728, 0
        %4731 = vmatpush.msra.mxu0 0.0
        %4732 = vmatpush.msra.mxu0 0.0
        %4733 = vmatpush.msra.mxu0 0.0
        %4734 = vmatpush.msra.mxu0 0.0
        %4735 = vmatpush.msra.mxu0 0.0
        %4736 = vmatpush.msra.mxu0 0.0
        %4737 = vmatpush.msra.mxu0 0.0
        %4738 = vmatpush.msra.mxu0 0.0
        %4739 = vmatpush.msra.mxu0 0.0
        %4740 = vmatpush.msra.mxu0 0.0
        %4741 = vmatpush.msra.mxu0 0.0
        %4742 = vmatpush.msra.mxu0 0.0
        %4743 = vmatpush.msra.mxu0 0.0
        %4744 = vmatpush.msra.mxu0 0.0
        %4745 = vmatpush.msra.mxu0 %v602
        %4746 = vmatpush.msra.mxu0 %v601
        %4747 = vmatmul.f32.gmra.mxu0 %v4729
        %v4748 = vpop.f32.mrf.mxu0
        %v4749 = vadd.f32 0.0, %v4748
        %4750 = vdwg.mxu0
        %v4751 = vadd.f32 %v4543, %v4574
        %v4752 = vadd.f32 %v4544, %v4599
        %v4753 = vadd.f32 %v4545, %v4624
        %v4754 = vadd.f32 %v4546, %v4649
        %v4755 = vadd.f32 %v4547, %v4674
        %v4756 = vadd.f32 %v4548, %v4699
        %v4757 = vadd.f32 %v4549, %v4724
        %v4758 = vadd.f32 %v4550, %v4749
        %v4759 = vxor.u32 %v4751, 2147483648
        %v4760 = vxor.u32 %v4752, 2147483648
        %v4761 = vxor.u32 %v4753, 2147483648
        %v4762 = vxor.u32 %v4754, 2147483648
        %v4763 = vxor.u32 %v4755, 2147483648
        %v4764 = vxor.u32 %v4756, 2147483648
        %v4765 = vxor.u32 %v4757, 2147483648
        %v4766 = vxor.u32 %v4758, 2147483648
        %v4767 = vmul.f32 %v4759, 1.442695
        %v4768 = vpow.pop %v4767
        %v4769 = vmul.f32 %v4760, 1.442695
        %v4770 = vpow.pop %v4769
        %v4771 = vmul.f32 %v4761, 1.442695
        %v4772 = vpow.pop %v4771
        %v4773 = vmul.f32 %v4762, 1.442695
        %v4774 = vpow.pop %v4773
        %v4775 = vmul.f32 %v4763, 1.442695
        %v4776 = vpow.pop %v4775
        %v4777 = vmul.f32 %v4764, 1.442695
        %v4778 = vpow.pop %v4777
        %v4779 = vmul.f32 %v4765, 1.442695
        %v4780 = vpow.pop %v4779
        %v4781 = vmul.f32 %v4766, 1.442695
        %v4782 = vpow.pop %v4781
        %v4783 = vadd.f32 %v4768, 1.0
        %v4784 = vadd.f32 %v4770, 1.0
        %v4785 = vadd.f32 %v4772, 1.0
        %v4786 = vadd.f32 %v4774, 1.0
        %v4787 = vadd.f32 %v4776, 1.0
        %v4788 = vadd.f32 %v4778, 1.0
        %v4789 = vadd.f32 %v4780, 1.0
        %v4790 = vadd.f32 %v4782, 1.0
        %v4791 = vrcp.pop %v4783
        %v4792 = vmul.f32 %v4783, %v4791
        %v4793 = vsub.f32 1.0, %v4792
        %v4794 = vmul.f32 %v4791, %v4793
        %v4795 = vadd.f32 %v4791, %v4794
        %vm4796 = vweird.f32 %v4783
        %vm4797 = vweird.f32 %v4791
        %vm4798 = vmor %vm4796, %vm4797
        %v4799 = vsel %vm4798, %v4791, %v4795
        %v4800 = vand.u32 2147483647, %v4783
        %vm4801 = vcmp.eq.f32.partialorder %v4800, 8.507059e+37
        %v4802 = vand.u32 %v4783, 2147483648
        %v4803 = vor.u32 1.1754944e-38, %v4802
        %v4804 = vsel %vm4801, %v4803, %v4799
        %v4805 = vmul.f32 1.0, %v4804
        %v4806 = vrcp.pop %v4784
        %v4807 = vmul.f32 %v4784, %v4806
        %v4808 = vsub.f32 1.0, %v4807
        %v4809 = vmul.f32 %v4806, %v4808
        %v4810 = vadd.f32 %v4806, %v4809
        %vm4811 = vweird.f32 %v4784
        %vm4812 = vweird.f32 %v4806
        %vm4813 = vmor %vm4811, %vm4812
        %v4814 = vsel %vm4813, %v4806, %v4810
        %v4815 = vand.u32 2147483647, %v4784
        %vm4816 = vcmp.eq.f32.partialorder %v4815, 8.507059e+37
        %v4817 = vand.u32 %v4784, 2147483648
        %v4818 = vor.u32 1.1754944e-38, %v4817
        %v4819 = vsel %vm4816, %v4818, %v4814
        %v4820 = vmul.f32 1.0, %v4819
        %v4821 = vrcp.pop %v4785
        %v4822 = vmul.f32 %v4785, %v4821
        %v4823 = vsub.f32 1.0, %v4822
        %v4824 = vmul.f32 %v4821, %v4823
        %v4825 = vadd.f32 %v4821, %v4824
        %vm4826 = vweird.f32 %v4785
        %vm4827 = vweird.f32 %v4821
        %vm4828 = vmor %vm4826, %vm4827
        %v4829 = vsel %vm4828, %v4821, %v4825
        %v4830 = vand.u32 2147483647, %v4785
        %vm4831 = vcmp.eq.f32.partialorder %v4830, 8.507059e+37
        %v4832 = vand.u32 %v4785, 2147483648
        %v4833 = vor.u32 1.1754944e-38, %v4832
        %v4834 = vsel %vm4831, %v4833, %v4829
        %v4835 = vmul.f32 1.0, %v4834
        %v4836 = vrcp.pop %v4786
        %v4837 = vmul.f32 %v4786, %v4836
        %v4838 = vsub.f32 1.0, %v4837
        %v4839 = vmul.f32 %v4836, %v4838
        %v4840 = vadd.f32 %v4836, %v4839
        %vm4841 = vweird.f32 %v4786
        %vm4842 = vweird.f32 %v4836
        %vm4843 = vmor %vm4841, %vm4842
        %v4844 = vsel %vm4843, %v4836, %v4840
        %v4845 = vand.u32 2147483647, %v4786
        %vm4846 = vcmp.eq.f32.partialorder %v4845, 8.507059e+37
        %v4847 = vand.u32 %v4786, 2147483648
        %v4848 = vor.u32 1.1754944e-38, %v4847
        %v4849 = vsel %vm4846, %v4848, %v4844
        %v4850 = vmul.f32 1.0, %v4849
        %v4851 = vrcp.pop %v4787
        %v4852 = vmul.f32 %v4787, %v4851
        %v4853 = vsub.f32 1.0, %v4852
        %v4854 = vmul.f32 %v4851, %v4853
        %v4855 = vadd.f32 %v4851, %v4854
        %vm4856 = vweird.f32 %v4787
        %vm4857 = vweird.f32 %v4851
        %vm4858 = vmor %vm4856, %vm4857
        %v4859 = vsel %vm4858, %v4851, %v4855
        %v4860 = vand.u32 2147483647, %v4787
        %vm4861 = vcmp.eq.f32.partialorder %v4860, 8.507059e+37
        %v4862 = vand.u32 %v4787, 2147483648
        %v4863 = vor.u32 1.1754944e-38, %v4862
        %v4864 = vsel %vm4861, %v4863, %v4859
        %v4865 = vmul.f32 1.0, %v4864
        %v4866 = vrcp.pop %v4788
        %v4867 = vmul.f32 %v4788, %v4866
        %v4868 = vsub.f32 1.0, %v4867
        %v4869 = vmul.f32 %v4866, %v4868
        %v4870 = vadd.f32 %v4866, %v4869
        %vm4871 = vweird.f32 %v4788
        %vm4872 = vweird.f32 %v4866
        %vm4873 = vmor %vm4871, %vm4872
        %v4874 = vsel %vm4873, %v4866, %v4870
        %v4875 = vand.u32 2147483647, %v4788
        %vm4876 = vcmp.eq.f32.partialorder %v4875, 8.507059e+37
        %v4877 = vand.u32 %v4788, 2147483648
        %v4878 = vor.u32 1.1754944e-38, %v4877
        %v4879 = vsel %vm4876, %v4878, %v4874
        %v4880 = vmul.f32 1.0, %v4879
        %v4881 = vrcp.pop %v4789
        %v4882 = vmul.f32 %v4789, %v4881
        %v4883 = vsub.f32 1.0, %v4882
        %v4884 = vmul.f32 %v4881, %v4883
        %v4885 = vadd.f32 %v4881, %v4884
        %vm4886 = vweird.f32 %v4789
        %vm4887 = vweird.f32 %v4881
        %vm4888 = vmor %vm4886, %vm4887
        %v4889 = vsel %vm4888, %v4881, %v4885
        %v4890 = vand.u32 2147483647, %v4789
        %vm4891 = vcmp.eq.f32.partialorder %v4890, 8.507059e+37
        %v4892 = vand.u32 %v4789, 2147483648
        %v4893 = vor.u32 1.1754944e-38, %v4892
        %v4894 = vsel %vm4891, %v4893, %v4889
        %v4895 = vmul.f32 1.0, %v4894
        %v4896 = vrcp.pop %v4790
        %v4897 = vmul.f32 %v4790, %v4896
        %v4898 = vsub.f32 1.0, %v4897
        %v4899 = vmul.f32 %v4896, %v4898
        %v4900 = vadd.f32 %v4896, %v4899
        %vm4901 = vweird.f32 %v4790
        %vm4902 = vweird.f32 %v4896
        %vm4903 = vmor %vm4901, %vm4902
        %v4904 = vsel %vm4903, %v4896, %v4900
        %v4905 = vand.u32 2147483647, %v4790
        %vm4906 = vcmp.eq.f32.partialorder %v4905, 8.507059e+37
        %v4907 = vand.u32 %v4790, 2147483648
        %v4908 = vor.u32 1.1754944e-38, %v4907
        %v4909 = vsel %vm4906, %v4908, %v4904
        %v4910 = vmul.f32 1.0, %v4909
        %v4911 = vtanh.pop %v4751
        %v4912 = vtanh.pop %v4752
        %v4913 = vtanh.pop %v4753
        %v4914 = vtanh.pop %v4754
        %v4915 = vtanh.pop %v4755
        %v4916 = vtanh.pop %v4756
        %v4917 = vtanh.pop %v4757
        %v4918 = vtanh.pop %v4758
        %v4919 = vmul.f32 %v4805, %v4447
        %v4920 = vmul.f32 %v4820, %v4448
        %v4921 = vmul.f32 %v4835, %v4449
        %v4922 = vmul.f32 %v4850, %v4450
        %v4923 = vmul.f32 %v4865, %v4451
        %v4924 = vmul.f32 %v4880, %v4452
        %v4925 = vmul.f32 %v4895, %v4453
        %v4926 = vmul.f32 %v4910, %v4454
        %4935 = vrot.lane.b32.xlu0 %v4911, 96
        %v4936 = vpop.permute.xlu0 %4935
        %4937 = vrot.lane.b32.xlu0 %v4912, 96
        %v4938 = vpop.permute.xlu0 %4937
        %4939 = vrot.lane.b32.xlu0 %v4913, 96
        %v4940 = vpop.permute.xlu0 %4939
        %4941 = vrot.lane.b32.xlu0 %v4914, 96
        %v4942 = vpop.permute.xlu0 %4941
        %4943 = vrot.lane.b32.xlu0 %v4915, 96
        %v4944 = vpop.permute.xlu0 %4943
        %4945 = vrot.lane.b32.xlu0 %v4916, 96
        %v4946 = vpop.permute.xlu0 %4945
        %4947 = vrot.lane.b32.xlu0 %v4917, 96
        %v4948 = vpop.permute.xlu0 %4947
        %4949 = vrot.lane.b32.xlu0 %v4918, 96
        %v4950 = vpop.permute.xlu0 %4949
        %v4959 = vmul.f32 %v4805, %v4936
        %v4960 = vmul.f32 %v4820, %v4938
        %v4961 = vmul.f32 %v4835, %v4940
        %v4962 = vmul.f32 %v4850, %v4942
        %v4963 = vmul.f32 %v4865, %v4944
        %v4964 = vmul.f32 %v4880, %v4946
        %v4965 = vmul.f32 %v4895, %v4948
        %v4966 = vmul.f32 %v4910, %v4950
        %4975 = vrot.lane.b32.xlu0 %v4959, 16
        %v4976 = vpop.permute.xlu0 %4975
        %4977 = vrot.lane.b32.xlu0 %v4960, 16
        %v4978 = vpop.permute.xlu0 %4977
        %4979 = vrot.lane.b32.xlu0 %v4961, 16
        %v4980 = vpop.permute.xlu0 %4979
        %4981 = vrot.lane.b32.xlu0 %v4962, 16
        %v4982 = vpop.permute.xlu0 %4981
        %4983 = vrot.lane.b32.xlu0 %v4963, 16
        %v4984 = vpop.permute.xlu0 %4983
        %4985 = vrot.lane.b32.xlu0 %v4964, 16
        %v4986 = vpop.permute.xlu0 %4985
        %4987 = vrot.lane.b32.xlu0 %v4965, 16
        %v4988 = vpop.permute.xlu0 %4987
        %4989 = vrot.lane.b32.xlu0 %v4966, 16
        %v4990 = vpop.permute.xlu0 %4989
        %v4999 = vadd.f32 %v4919, %v4976
        %v5000 = vadd.f32 %v4920, %v4978
        %v5001 = vadd.f32 %v4921, %v4980
        %v5002 = vadd.f32 %v4922, %v4982
        %v5003 = vadd.f32 %v4923, %v4984
        %v5004 = vadd.f32 %v4924, %v4986
        %v5005 = vadd.f32 %v4925, %v4988
        %v5006 = vadd.f32 %v4926, %v4990
        %v5007 = vtanh.pop %v4999
        %v5008 = vtanh.pop %v5000
        %v5009 = vtanh.pop %v5001
        %v5010 = vtanh.pop %v5002
        %v5011 = vtanh.pop %v5003
        %v5012 = vtanh.pop %v5004
        %v5013 = vtanh.pop %v5005
        %v5014 = vtanh.pop %v5006
        %5023 = vrot.lane.b32.xlu0 %v5007, 32
        %v5024 = vpop.permute.xlu0 %5023
        %5025 = vrot.lane.b32.xlu0 %v5008, 32
        %v5026 = vpop.permute.xlu0 %5025
        %5027 = vrot.lane.b32.xlu0 %v5009, 32
        %v5028 = vpop.permute.xlu0 %5027
        %5029 = vrot.lane.b32.xlu0 %v5010, 32
        %v5030 = vpop.permute.xlu0 %5029
        %5031 = vrot.lane.b32.xlu0 %v5011, 32
        %v5032 = vpop.permute.xlu0 %5031
        %5033 = vrot.lane.b32.xlu0 %v5012, 32
        %v5034 = vpop.permute.xlu0 %5033
        %5035 = vrot.lane.b32.xlu0 %v5013, 32
        %v5036 = vpop.permute.xlu0 %5035
        %5037 = vrot.lane.b32.xlu0 %v5014, 32
        %v5038 = vpop.permute.xlu0 %5037
        %v5047 = vmul.f32 %v4805, %v5024
        %v5048 = vmul.f32 %v4820, %v5026
        %v5049 = vmul.f32 %v4835, %v5028
        %v5050 = vmul.f32 %v4850, %v5030
        %v5051 = vmul.f32 %v4865, %v5032
        %v5052 = vmul.f32 %v4880, %v5034
        %v5053 = vmul.f32 %v4895, %v5036
        %v5054 = vmul.f32 %v4910, %v5038
        %v5055 = vld [vmem:[%s544] sm:$0xff]
        %v5056 = vld [vmem:[%s544 + $0x8] sm:$0xff]
        %v5057 = vld [vmem:[%s544 + $0x10] sm:$0xff]
        %v5058 = vld [vmem:[%s544 + $0x18] sm:$0xff]
        %v5059 = vld [vmem:[%s544 + $0x20] sm:$0xff]
        %v5060 = vld [vmem:[%s544 + $0x28] sm:$0xff]
        %v5061 = vld [vmem:[%s544 + $0x30] sm:$0xff]
        %v5062 = vld [vmem:[%s544 + $0x38] sm:$0xff]
        %v5063 = vld [vmem:[%s544 + $0x40] sm:$0xff]
        %v5064 = vld [vmem:[%s544 + $0x48] sm:$0xff]
        %v5065 = vld [vmem:[%s544 + $0x50] sm:$0xff]
        %v5066 = vld [vmem:[%s544 + $0x58] sm:$0xff]
        %v5067 = vld [vmem:[%s544 + $0x60] sm:$0xff]
        %v5068 = vld [vmem:[%s544 + $0x68] sm:$0xff]
        %v5069 = vld [vmem:[%s544 + $0x70] sm:$0xff]
        %v5070 = vld [vmem:[%s544 + $0x78] sm:$0xff]
        %v5071 = vld [vmem:[%s549] sm:$0x1]
        %v5072 = vld [vmem:[%s549 + $0x1] sm:$0x1]
        %v5073 = vld [vmem:[%s549 + $0x2] sm:$0x1]
        %v5074 = vld [vmem:[%s549 + $0x3] sm:$0x1]
        %v5075 = vld [vmem:[%s549 + $0x4] sm:$0x1]
        %v5076 = vld [vmem:[%s549 + $0x5] sm:$0x1]
        %v5077 = vld [vmem:[%s549 + $0x6] sm:$0x1]
        %v5078 = vld [vmem:[%s549 + $0x7] sm:$0x1]
        %v5087 = vperm.slane %v5071, 0
        %v5088 = vperm.slane %v5072, 0
        %v5089 = vperm.slane %v5073, 0
        %v5090 = vperm.slane %v5074, 0
        %v5091 = vperm.slane %v5075, 0
        %v5092 = vperm.slane %v5076, 0
        %v5093 = vperm.slane %v5077, 0
        %v5094 = vperm.slane %v5078, 0
        %5104 = vrot.lane.b32.xlu0 %v5047, 80
        %v5105 = vpop.permute.xlu0 %5104
        %v5106 = vsel %vm723, %v5105, 0
        %5108 = vmatpush.msra.mxu0 0.0
        %5109 = vmatpush.msra.mxu0 0.0
        %5110 = vmatpush.msra.mxu0 0.0
        %5111 = vmatpush.msra.mxu0 0.0
        %5112 = vmatpush.msra.mxu0 0.0
        %5113 = vmatpush.msra.mxu0 0.0
        %5114 = vmatpush.msra.mxu0 0.0
        %5115 = vmatpush.msra.mxu0 0.0
        %5116 = vmatpush.msra.mxu0 0.0
        %5117 = vmatpush.msra.mxu0 0.0
        %5118 = vmatpush.msra.mxu0 0.0
        %5119 = vmatpush.msra.mxu0 0.0
        %5120 = vmatpush.msra.mxu0 0.0
        %5121 = vmatpush.msra.mxu0 0.0
        %5122 = vmatpush.msra.mxu0 %v5056
        %5123 = vmatpush.msra.mxu0 %v5055
        %5124 = vmatmul.f32.gmra.mxu0 %v5106
        %v5125 = vpop.f32.mrf.mxu0
        %v5126 = vadd.f32 %v5087, %v5125
        %5127 = vdwg.mxu0
        %5129 = vrot.lane.b32.xlu0 %v5048, 80
        %v5130 = vpop.permute.xlu0 %5129
        %v5131 = vsel %vm723, %v5130, 0
        %5133 = vmatpush.msra.mxu0 0.0
        %5134 = vmatpush.msra.mxu0 0.0
        %5135 = vmatpush.msra.mxu0 0.0
        %5136 = vmatpush.msra.mxu0 0.0
        %5137 = vmatpush.msra.mxu0 0.0
        %5138 = vmatpush.msra.mxu0 0.0
        %5139 = vmatpush.msra.mxu0 0.0
        %5140 = vmatpush.msra.mxu0 0.0
        %5141 = vmatpush.msra.mxu0 0.0
        %5142 = vmatpush.msra.mxu0 0.0
        %5143 = vmatpush.msra.mxu0 0.0
        %5144 = vmatpush.msra.mxu0 0.0
        %5145 = vmatpush.msra.mxu0 0.0
        %5146 = vmatpush.msra.mxu0 0.0
        %5147 = vmatpush.msra.mxu0 %v5058
        %5148 = vmatpush.msra.mxu0 %v5057
        %5149 = vmatmul.f32.gmra.mxu0 %v5131
        %v5150 = vpop.f32.mrf.mxu0
        %v5151 = vadd.f32 %v5088, %v5150
        %5152 = vdwg.mxu0
        %5154 = vrot.lane.b32.xlu0 %v5049, 80
        %v5155 = vpop.permute.xlu0 %5154
        %v5156 = vsel %vm723, %v5155, 0
        %5158 = vmatpush.msra.mxu0 0.0
        %5159 = vmatpush.msra.mxu0 0.0
        %5160 = vmatpush.msra.mxu0 0.0
        %5161 = vmatpush.msra.mxu0 0.0
        %5162 = vmatpush.msra.mxu0 0.0
        %5163 = vmatpush.msra.mxu0 0.0
        %5164 = vmatpush.msra.mxu0 0.0
        %5165 = vmatpush.msra.mxu0 0.0
        %5166 = vmatpush.msra.mxu0 0.0
        %5167 = vmatpush.msra.mxu0 0.0
        %5168 = vmatpush.msra.mxu0 0.0
        %5169 = vmatpush.msra.mxu0 0.0
        %5170 = vmatpush.msra.mxu0 0.0
        %5171 = vmatpush.msra.mxu0 0.0
        %5172 = vmatpush.msra.mxu0 %v5060
        %5173 = vmatpush.msra.mxu0 %v5059
        %5174 = vmatmul.f32.gmra.mxu0 %v5156
        %v5175 = vpop.f32.mrf.mxu0
        %v5176 = vadd.f32 %v5089, %v5175
        %5177 = vdwg.mxu0
        %5179 = vrot.lane.b32.xlu0 %v5050, 80
        %v5180 = vpop.permute.xlu0 %5179
        %v5181 = vsel %vm723, %v5180, 0
        %5183 = vmatpush.msra.mxu0 0.0
        %5184 = vmatpush.msra.mxu0 0.0
        %5185 = vmatpush.msra.mxu0 0.0
        %5186 = vmatpush.msra.mxu0 0.0
        %5187 = vmatpush.msra.mxu0 0.0
        %5188 = vmatpush.msra.mxu0 0.0
        %5189 = vmatpush.msra.mxu0 0.0
        %5190 = vmatpush.msra.mxu0 0.0
        %5191 = vmatpush.msra.mxu0 0.0
        %5192 = vmatpush.msra.mxu0 0.0
        %5193 = vmatpush.msra.mxu0 0.0
        %5194 = vmatpush.msra.mxu0 0.0
        %5195 = vmatpush.msra.mxu0 0.0
        %5196 = vmatpush.msra.mxu0 0.0
        %5197 = vmatpush.msra.mxu0 %v5062
        %5198 = vmatpush.msra.mxu0 %v5061
        %5199 = vmatmul.f32.gmra.mxu0 %v5181
        %v5200 = vpop.f32.mrf.mxu0
        %v5201 = vadd.f32 %v5090, %v5200
        %5202 = vdwg.mxu0
        %5204 = vrot.lane.b32.xlu0 %v5051, 80
        %v5205 = vpop.permute.xlu0 %5204
        %v5206 = vsel %vm723, %v5205, 0
        %5208 = vmatpush.msra.mxu0 0.0
        %5209 = vmatpush.msra.mxu0 0.0
        %5210 = vmatpush.msra.mxu0 0.0
        %5211 = vmatpush.msra.mxu0 0.0
        %5212 = vmatpush.msra.mxu0 0.0
        %5213 = vmatpush.msra.mxu0 0.0
        %5214 = vmatpush.msra.mxu0 0.0
        %5215 = vmatpush.msra.mxu0 0.0
        %5216 = vmatpush.msra.mxu0 0.0
        %5217 = vmatpush.msra.mxu0 0.0
        %5218 = vmatpush.msra.mxu0 0.0
        %5219 = vmatpush.msra.mxu0 0.0
        %5220 = vmatpush.msra.mxu0 0.0
        %5221 = vmatpush.msra.mxu0 0.0
        %5222 = vmatpush.msra.mxu0 %v5064
        %5223 = vmatpush.msra.mxu0 %v5063
        %5224 = vmatmul.f32.gmra.mxu0 %v5206
        %v5225 = vpop.f32.mrf.mxu0
        %v5226 = vadd.f32 %v5091, %v5225
        %5227 = vdwg.mxu0
        %5229 = vrot.lane.b32.xlu0 %v5052, 80
        %v5230 = vpop.permute.xlu0 %5229
        %v5231 = vsel %vm723, %v5230, 0
        %5233 = vmatpush.msra.mxu0 0.0
        %5234 = vmatpush.msra.mxu0 0.0
        %5235 = vmatpush.msra.mxu0 0.0
        %5236 = vmatpush.msra.mxu0 0.0
        %5237 = vmatpush.msra.mxu0 0.0
        %5238 = vmatpush.msra.mxu0 0.0
        %5239 = vmatpush.msra.mxu0 0.0
        %5240 = vmatpush.msra.mxu0 0.0
        %5241 = vmatpush.msra.mxu0 0.0
        %5242 = vmatpush.msra.mxu0 0.0
        %5243 = vmatpush.msra.mxu0 0.0
        %5244 = vmatpush.msra.mxu0 0.0
        %5245 = vmatpush.msra.mxu0 0.0
        %5246 = vmatpush.msra.mxu0 0.0
        %5247 = vmatpush.msra.mxu0 %v5066
        %5248 = vmatpush.msra.mxu0 %v5065
        %5249 = vmatmul.f32.gmra.mxu0 %v5231
        %v5250 = vpop.f32.mrf.mxu0
        %v5251 = vadd.f32 %v5092, %v5250
        %5252 = vdwg.mxu0
        %5254 = vrot.lane.b32.xlu0 %v5053, 80
        %v5255 = vpop.permute.xlu0 %5254
        %v5256 = vsel %vm723, %v5255, 0
        %5258 = vmatpush.msra.mxu0 0.0
        %5259 = vmatpush.msra.mxu0 0.0
        %5260 = vmatpush.msra.mxu0 0.0
        %5261 = vmatpush.msra.mxu0 0.0
        %5262 = vmatpush.msra.mxu0 0.0
        %5263 = vmatpush.msra.mxu0 0.0
        %5264 = vmatpush.msra.mxu0 0.0
        %5265 = vmatpush.msra.mxu0 0.0
        %5266 = vmatpush.msra.mxu0 0.0
        %5267 = vmatpush.msra.mxu0 0.0
        %5268 = vmatpush.msra.mxu0 0.0
        %5269 = vmatpush.msra.mxu0 0.0
        %5270 = vmatpush.msra.mxu0 0.0
        %5271 = vmatpush.msra.mxu0 0.0
        %5272 = vmatpush.msra.mxu0 %v5068
        %5273 = vmatpush.msra.mxu0 %v5067
        %5274 = vmatmul.f32.gmra.mxu0 %v5256
        %v5275 = vpop.f32.mrf.mxu0
        %v5276 = vadd.f32 %v5093, %v5275
        %5277 = vdwg.mxu0
        %5279 = vrot.lane.b32.xlu0 %v5054, 80
        %v5280 = vpop.permute.xlu0 %5279
        %v5281 = vsel %vm723, %v5280, 0
        %5283 = vmatpush.msra.mxu0 0.0
        %5284 = vmatpush.msra.mxu0 0.0
        %5285 = vmatpush.msra.mxu0 0.0
        %5286 = vmatpush.msra.mxu0 0.0
        %5287 = vmatpush.msra.mxu0 0.0
        %5288 = vmatpush.msra.mxu0 0.0
        %5289 = vmatpush.msra.mxu0 0.0
        %5290 = vmatpush.msra.mxu0 0.0
        %5291 = vmatpush.msra.mxu0 0.0
        %5292 = vmatpush.msra.mxu0 0.0
        %5293 = vmatpush.msra.mxu0 0.0
        %5294 = vmatpush.msra.mxu0 0.0
        %5295 = vmatpush.msra.mxu0 0.0
        %5296 = vmatpush.msra.mxu0 0.0
        %5297 = vmatpush.msra.mxu0 %v5070
        %5298 = vmatpush.msra.mxu0 %v5069
        %5299 = vmatmul.f32.gmra.mxu0 %v5281
        %v5300 = vpop.f32.mrf.mxu0
        %v5301 = vadd.f32 %v5094, %v5300
        %5302 = vdwg.mxu0
        %v5303 = vld [vmem:[%s556] sm:$0xff]
        %v5304 = vld [vmem:[%s556 + $0x8] sm:$0xff]
        %v5305 = vld [vmem:[%s556 + $0x10] sm:$0xff]
        %v5306 = vld [vmem:[%s556 + $0x18] sm:$0xff]
        %v5307 = vld [vmem:[%s556 + $0x20] sm:$0xff]
        %v5308 = vld [vmem:[%s556 + $0x28] sm:$0xff]
        %v5309 = vld [vmem:[%s556 + $0x30] sm:$0xff]
        %v5310 = vld [vmem:[%s556 + $0x38] sm:$0xff]
        %v5311 = vld [vmem:[%s556 + $0x40] sm:$0xff]
        %v5312 = vld [vmem:[%s556 + $0x48] sm:$0xff]
        %v5313 = vld [vmem:[%s556 + $0x50] sm:$0xff]
        %v5314 = vld [vmem:[%s556 + $0x58] sm:$0xff]
        %v5315 = vld [vmem:[%s556 + $0x60] sm:$0xff]
        %v5316 = vld [vmem:[%s556 + $0x68] sm:$0xff]
        %v5317 = vld [vmem:[%s556 + $0x70] sm:$0xff]
        %v5318 = vld [vmem:[%s556 + $0x78] sm:$0xff]
        %v5319 = vld [vmem:[%s561] sm:$0x1]
        %v5320 = vld [vmem:[%s561 + $0x1] sm:$0x1]
        %v5321 = vld [vmem:[%s561 + $0x2] sm:$0x1]
        %v5322 = vld [vmem:[%s561 + $0x3] sm:$0x1]
        %v5323 = vld [vmem:[%s561 + $0x4] sm:$0x1]
        %v5324 = vld [vmem:[%s561 + $0x5] sm:$0x1]
        %v5325 = vld [vmem:[%s561 + $0x6] sm:$0x1]
        %v5326 = vld [vmem:[%s561 + $0x7] sm:$0x1]
        %v5335 = vperm.slane %v5319, 0
        %v5336 = vperm.slane %v5320, 0
        %v5337 = vperm.slane %v5321, 0
        %v5338 = vperm.slane %v5322, 0
        %v5339 = vperm.slane %v5323, 0
        %v5340 = vperm.slane %v5324, 0
        %v5341 = vperm.slane %v5325, 0
        %v5342 = vperm.slane %v5326, 0
        %5351 = vmatpush.msra.mxu0 0.0
        %5352 = vmatpush.msra.mxu0 0.0
        %5353 = vmatpush.msra.mxu0 0.0
        %5354 = vmatpush.msra.mxu0 0.0
        %5355 = vmatpush.msra.mxu0 0.0
        %5356 = vmatpush.msra.mxu0 0.0
        %5357 = vmatpush.msra.mxu0 0.0
        %5358 = vmatpush.msra.mxu0 0.0
        %5359 = vmatpush.msra.mxu0 0.0
        %5360 = vmatpush.msra.mxu0 0.0
        %5361 = vmatpush.msra.mxu0 0.0
        %5362 = vmatpush.msra.mxu0 0.0
        %5363 = vmatpush.msra.mxu0 0.0
        %5364 = vmatpush.msra.mxu0 0.0
        %5365 = vmatpush.msra.mxu0 %v5304
        %5366 = vmatpush.msra.mxu0 %v5303
        %5367 = vmatmul.f32.gmra.mxu0 %v5106
        %v5368 = vpop.f32.mrf.mxu0
        %v5369 = vadd.f32 %v5335, %v5368
        %5370 = vdwg.mxu0
        %5371 = vmatpush.msra.mxu0 0.0
        %5372 = vmatpush.msra.mxu0 0.0
        %5373 = vmatpush.msra.mxu0 0.0
        %5374 = vmatpush.msra.mxu0 0.0
        %5375 = vmatpush.msra.mxu0 0.0
        %5376 = vmatpush.msra.mxu0 0.0
        %5377 = vmatpush.msra.mxu0 0.0
        %5378 = vmatpush.msra.mxu0 0.0
        %5379 = vmatpush.msra.mxu0 0.0
        %5380 = vmatpush.msra.mxu0 0.0
        %5381 = vmatpush.msra.mxu0 0.0
        %5382 = vmatpush.msra.mxu0 0.0
        %5383 = vmatpush.msra.mxu0 0.0
        %5384 = vmatpush.msra.mxu0 0.0
        %5385 = vmatpush.msra.mxu0 %v5306
        %5386 = vmatpush.msra.mxu0 %v5305
        %5387 = vmatmul.f32.gmra.mxu0 %v5131
        %v5388 = vpop.f32.mrf.mxu0
        %v5389 = vadd.f32 %v5336, %v5388
        %5390 = vdwg.mxu0
        %5391 = vmatpush.msra.mxu0 0.0
        %5392 = vmatpush.msra.mxu0 0.0
        %5393 = vmatpush.msra.mxu0 0.0
        %5394 = vmatpush.msra.mxu0 0.0
        %5395 = vmatpush.msra.mxu0 0.0
        %5396 = vmatpush.msra.mxu0 0.0
        %5397 = vmatpush.msra.mxu0 0.0
        %5398 = vmatpush.msra.mxu0 0.0
        %5399 = vmatpush.msra.mxu0 0.0
        %5400 = vmatpush.msra.mxu0 0.0
        %5401 = vmatpush.msra.mxu0 0.0
        %5402 = vmatpush.msra.mxu0 0.0
        %5403 = vmatpush.msra.mxu0 0.0
        %5404 = vmatpush.msra.mxu0 0.0
        %5405 = vmatpush.msra.mxu0 %v5308
        %5406 = vmatpush.msra.mxu0 %v5307
        %5407 = vmatmul.f32.gmra.mxu0 %v5156
        %v5408 = vpop.f32.mrf.mxu0
        %v5409 = vadd.f32 %v5337, %v5408
        %5410 = vdwg.mxu0
        %5411 = vmatpush.msra.mxu0 0.0
        %5412 = vmatpush.msra.mxu0 0.0
        %5413 = vmatpush.msra.mxu0 0.0
        %5414 = vmatpush.msra.mxu0 0.0
        %5415 = vmatpush.msra.mxu0 0.0
        %5416 = vmatpush.msra.mxu0 0.0
        %5417 = vmatpush.msra.mxu0 0.0
        %5418 = vmatpush.msra.mxu0 0.0
        %5419 = vmatpush.msra.mxu0 0.0
        %5420 = vmatpush.msra.mxu0 0.0
        %5421 = vmatpush.msra.mxu0 0.0
        %5422 = vmatpush.msra.mxu0 0.0
        %5423 = vmatpush.msra.mxu0 0.0
        %5424 = vmatpush.msra.mxu0 0.0
        %5425 = vmatpush.msra.mxu0 %v5310
        %5426 = vmatpush.msra.mxu0 %v5309
        %5427 = vmatmul.f32.gmra.mxu0 %v5181
        %v5428 = vpop.f32.mrf.mxu0
        %v5429 = vadd.f32 %v5338, %v5428
        %5430 = vdwg.mxu0
        %5431 = vmatpush.msra.mxu0 0.0
        %5432 = vmatpush.msra.mxu0 0.0
        %5433 = vmatpush.msra.mxu0 0.0
        %5434 = vmatpush.msra.mxu0 0.0
        %5435 = vmatpush.msra.mxu0 0.0
        %5436 = vmatpush.msra.mxu0 0.0
        %5437 = vmatpush.msra.mxu0 0.0
        %5438 = vmatpush.msra.mxu0 0.0
        %5439 = vmatpush.msra.mxu0 0.0
        %5440 = vmatpush.msra.mxu0 0.0
        %5441 = vmatpush.msra.mxu0 0.0
        %5442 = vmatpush.msra.mxu0 0.0
        %5443 = vmatpush.msra.mxu0 0.0
        %5444 = vmatpush.msra.mxu0 0.0
        %5445 = vmatpush.msra.mxu0 %v5312
        %5446 = vmatpush.msra.mxu0 %v5311
        %5447 = vmatmul.f32.gmra.mxu0 %v5206
        %v5448 = vpop.f32.mrf.mxu0
        %v5449 = vadd.f32 %v5339, %v5448
        %5450 = vdwg.mxu0
        %5451 = vmatpush.msra.mxu0 0.0
        %5452 = vmatpush.msra.mxu0 0.0
        %5453 = vmatpush.msra.mxu0 0.0
        %5454 = vmatpush.msra.mxu0 0.0
        %5455 = vmatpush.msra.mxu0 0.0
        %5456 = vmatpush.msra.mxu0 0.0
        %5457 = vmatpush.msra.mxu0 0.0
        %5458 = vmatpush.msra.mxu0 0.0
        %5459 = vmatpush.msra.mxu0 0.0
        %5460 = vmatpush.msra.mxu0 0.0
        %5461 = vmatpush.msra.mxu0 0.0
        %5462 = vmatpush.msra.mxu0 0.0
        %5463 = vmatpush.msra.mxu0 0.0
        %5464 = vmatpush.msra.mxu0 0.0
        %5465 = vmatpush.msra.mxu0 %v5314
        %5466 = vmatpush.msra.mxu0 %v5313
        %5467 = vmatmul.f32.gmra.mxu0 %v5231
        %v5468 = vpop.f32.mrf.mxu0
        %v5469 = vadd.f32 %v5340, %v5468
        %5470 = vdwg.mxu0
        %5471 = vmatpush.msra.mxu0 0.0
        %5472 = vmatpush.msra.mxu0 0.0
        %5473 = vmatpush.msra.mxu0 0.0
        %5474 = vmatpush.msra.mxu0 0.0
        %5475 = vmatpush.msra.mxu0 0.0
        %5476 = vmatpush.msra.mxu0 0.0
        %5477 = vmatpush.msra.mxu0 0.0
        %5478 = vmatpush.msra.mxu0 0.0
        %5479 = vmatpush.msra.mxu0 0.0
        %5480 = vmatpush.msra.mxu0 0.0
        %5481 = vmatpush.msra.mxu0 0.0
        %5482 = vmatpush.msra.mxu0 0.0
        %5483 = vmatpush.msra.mxu0 0.0
        %5484 = vmatpush.msra.mxu0 0.0
        %5485 = vmatpush.msra.mxu0 %v5316
        %5486 = vmatpush.msra.mxu0 %v5315
        %5487 = vmatmul.f32.gmra.mxu0 %v5256
        %v5488 = vpop.f32.mrf.mxu0
        %v5489 = vadd.f32 %v5341, %v5488
        %5490 = vdwg.mxu0
        %5491 = vmatpush.msra.mxu0 0.0
        %5492 = vmatpush.msra.mxu0 0.0
        %5493 = vmatpush.msra.mxu0 0.0
        %5494 = vmatpush.msra.mxu0 0.0
        %5495 = vmatpush.msra.mxu0 0.0
        %5496 = vmatpush.msra.mxu0 0.0
        %5497 = vmatpush.msra.mxu0 0.0
        %5498 = vmatpush.msra.mxu0 0.0
        %5499 = vmatpush.msra.mxu0 0.0
        %5500 = vmatpush.msra.mxu0 0.0
        %5501 = vmatpush.msra.mxu0 0.0
        %5502 = vmatpush.msra.mxu0 0.0
        %5503 = vmatpush.msra.mxu0 0.0
        %5504 = vmatpush.msra.mxu0 0.0
        %5505 = vmatpush.msra.mxu0 %v5318
        %5506 = vmatpush.msra.mxu0 %v5317
        %5507 = vmatmul.f32.gmra.mxu0 %v5281
        %v5508 = vpop.f32.mrf.mxu0
        %v5509 = vadd.f32 %v5342, %v5508
        %5510 = vdwg.mxu0
        %v5511 = vmul.f32 %v5369, 0.5
        %v5512 = vmul.f32 %v5389, 0.5
        %v5513 = vmul.f32 %v5409, 0.5
        %v5514 = vmul.f32 %v5429, 0.5
        %v5515 = vmul.f32 %v5449, 0.5
        %v5516 = vmul.f32 %v5469, 0.5
        %v5517 = vmul.f32 %v5489, 0.5
        %v5518 = vmul.f32 %v5509, 0.5
        %v5519 = vmul.f32 %v5511, 1.442695
        %v5520 = vpow.pop %v5519
        %v5521 = vmul.f32 %v5512, 1.442695
        %v5522 = vpow.pop %v5521
        %v5523 = vmul.f32 %v5513, 1.442695
        %v5524 = vpow.pop %v5523
        %v5525 = vmul.f32 %v5514, 1.442695
        %v5526 = vpow.pop %v5525
        %v5527 = vmul.f32 %v5515, 1.442695
        %v5528 = vpow.pop %v5527
        %v5529 = vmul.f32 %v5516, 1.442695
        %v5530 = vpow.pop %v5529
        %v5531 = vmul.f32 %v5517, 1.442695
        %v5532 = vpow.pop %v5531
        %v5533 = vmul.f32 %v5518, 1.442695
        %v5534 = vpow.pop %v5533
        %v5535 = vld [vmem:[%s567] sm:$0xf]
        %v5536 = vld [vmem:[%s567 + $0x4] sm:$0xf]
        %v5537 = vld [vmem:[%s567 + $0x8] sm:$0xf]
        %v5538 = vld [vmem:[%s567 + $0xc] sm:$0xf]
        %v5539 = vld [vmem:[%s567 + $0x10] sm:$0xf]
        %v5540 = vld [vmem:[%s567 + $0x14] sm:$0xf]
        %v5541 = vld [vmem:[%s567 + $0x18] sm:$0xf]
        %v5542 = vld [vmem:[%s567 + $0x1c] sm:$0xf]
        %v5543 = vmul.f32 %v5520, %v5535
        %v5544 = vmul.f32 %v5522, %v5536
        %v5545 = vmul.f32 %v5524, %v5537
        %v5546 = vmul.f32 %v5526, %v5538
        %v5547 = vmul.f32 %v5528, %v5539
        %v5548 = vmul.f32 %v5530, %v5540
        %v5549 = vmul.f32 %v5532, %v5541
        %v5550 = vmul.f32 %v5534, %v5542
        %v5551 = vadd.f32 %v5126, %v5543
        %v5552 = vadd.f32 %v5151, %v5544
        %v5553 = vadd.f32 %v5176, %v5545
        %v5554 = vadd.f32 %v5201, %v5546
        %v5555 = vadd.f32 %v5226, %v5547
        %v5556 = vadd.f32 %v5251, %v5548
        %v5557 = vadd.f32 %v5276, %v5549
        %v5558 = vadd.f32 %v5301, %v5550
        %v5559 = vld [vmem:[#allocation2] sm:$0xf]
        %vm5560 = vcmask 60416
        %v5561 = vsel %vm5560, %v5551, 0.0
        %v5562 = vsel %vm5560, %v5552, 0.0
        %v5563 = vadd.f32 %v5561, %v5562
        %v5564 = vsel %vm5560, %v5553, 0.0
        %v5565 = vadd.f32 %v5563, %v5564
        %v5566 = vsel %vm5560, %v5554, 0.0
        %v5567 = vadd.f32 %v5565, %v5566
        %v5568 = vsel %vm5560, %v5555, 0.0
        %v5569 = vadd.f32 %v5567, %v5568
        %v5570 = vsel %vm5560, %v5556, 0.0
        %v5571 = vadd.f32 %v5569, %v5570
        %v5572 = vsel %vm5560, %v5557, 0.0
        %v5573 = vadd.f32 %v5571, %v5572
        %v5574 = vsel %vm5560, %v5558, 0.0
        %v5575 = vadd.f32 %v5573, %v5574
        %v5576 = vadd.f32 %v5559, %v5575
        %5577 = vst.msk [vmem:[#allocation2] sm:$0xf] %vm5560, %v5576
        %v5578 = vld [vmem:[#allocation4] sm:$0xf]
        %v5579 = vsel %vm5560, %v5126, 0.0
        %v5580 = vsel %vm5560, %v5151, 0.0
        %v5581 = vadd.f32 %v5579, %v5580
        %v5582 = vsel %vm5560, %v5176, 0.0
        %v5583 = vadd.f32 %v5581, %v5582
        %v5584 = vsel %vm5560, %v5201, 0.0
        %v5585 = vadd.f32 %v5583, %v5584
        %v5586 = vsel %vm5560, %v5226, 0.0
        %v5587 = vadd.f32 %v5585, %v5586
        %v5588 = vsel %vm5560, %v5251, 0.0
        %v5589 = vadd.f32 %v5587, %v5588
        %v5590 = vsel %vm5560, %v5276, 0.0
        %v5591 = vadd.f32 %v5589, %v5590
        %v5592 = vsel %vm5560, %v5301, 0.0
        %v5593 = vadd.f32 %v5591, %v5592
        %v5594 = vadd.f32 %v5578, %v5593
        %5595 = vst.msk [vmem:[#allocation4] sm:$0xf] %vm5560, %v5594
        %v5596 = vld [vmem:[#allocation6] sm:$0xf]
        %v5597 = vsel %vm5560, %v5369, 0.0
        %v5598 = vsel %vm5560, %v5389, 0.0
        %v5599 = vadd.f32 %v5597, %v5598
        %v5600 = vsel %vm5560, %v5409, 0.0
        %v5601 = vadd.f32 %v5599, %v5600
        %v5602 = vsel %vm5560, %v5429, 0.0
        %v5603 = vadd.f32 %v5601, %v5602
        %v5604 = vsel %vm5560, %v5449, 0.0
        %v5605 = vadd.f32 %v5603, %v5604
        %v5606 = vsel %vm5560, %v5469, 0.0
        %v5607 = vadd.f32 %v5605, %v5606
        %v5608 = vsel %vm5560, %v5489, 0.0
        %v5609 = vadd.f32 %v5607, %v5608
        %v5610 = vsel %vm5560, %v5509, 0.0
        %v5611 = vadd.f32 %v5609, %v5610
        %v5612 = vadd.f32 %v5596, %v5611
        %5613 = vst.msk [vmem:[#allocation6] sm:$0xf] %vm5560, %v5612
        %p5614 = scmp.eq.s32.totalorder %s27, 8
        // Predicated region
        $region61: #{tpu_custom_call.1} parent=55 // pred_check
          %p5615 = pneg %p5614
        $region62: #{tpu_custom_call.1} parent=55 // pred_check_branch
          %5617 = sbr.rel (%p5615) target = $region64
        $region63: #{tpu_custom_call.1} parent=55 // pred_region
          %v5618 = vld [vmem:[#allocation4] sm:$0xf]
          %v5619 = vld [vmem:[#allocation6] sm:$0xf]
          %v5620 = vadd.f32 %v5619, 1.0
          %v5621 = vmul.f32 %v5618, %v5618
          %v5622 = vsub.f32 %v5620, %v5621
          %v5623 = vmul.f32 %v5619, 1.442695
          %v5624 = vpow.pop %v5623
          %v5625 = vsub.f32 %v5622, %v5624
          %v5626 = vsel %vm5560, %v5625, 0.0
          %5627 = vadd.xlane.f32.xlu0 %v5626
          %v5628 = vpop.xlane.xlu0 %5627
          %v5629 = vmul.f32 %v5628, -0.5
          %vm5630 = vcmask 1043456
          %v5631 = vsel %vm5630, %v5629, 0.0
          %v5632 = vrot.slane %v5631, 4
          %v5633 = vadd.f32 %v5631, %v5632
          %v5634 = vrot.slane %v5633, 2
          %v5635 = vadd.f32 %v5633, %v5634
          %v5636 = vrot.slane %v5635, 1
          %v5637 = vadd.f32 %v5635, %v5636
          %v5638 = vrcp.pop 4.0
          %v5639 = vmul.f32 4.0, %v5638
          %v5640 = vsub.f32 1.0, %v5639
          %v5641 = vmul.f32 %v5638, %v5640
          %v5642 = vadd.f32 %v5638, %v5641
          %vm5643 = vweird.f32 %v5638
          %v5644 = vsel %vm5643, %v5638, %v5642
          %v5645 = vmul.f32 %v5637, %v5644
          %vm5646 = vcmask 0
          %5647 = vst.msk [vmem:[#allocation7] sm:$0x1] %vm5646, %v5645
        $region64: #{tpu_custom_call.1} parent=55 // pred_fallthru
          _
        // Predicated region
        $region65: #{tpu_custom_call.1} parent=55 // pred_check
          %p5648 = pneg %p274
        $region66: #{tpu_custom_call.1} parent=55 // pred_check_branch
          %5650 = sbr.rel (%p5648) target = $region68
        $region67: #{tpu_custom_call.1} parent=55 // pred_region
          %5652 = vsyncadd [#allocation3], 0
          %s5654 = sshll.u32 [#allocation2], 4
          %s5655 = int_to_ptr.vmem [resolvable:$true] %s5654
          %s5656 = sshll.u32 %s9, 4
          %s5657 = int_to_ptr.hbm [resolvable:$true] %s5656
          %5659 = dma.vmem_to_hbm [thread:$0]  %s5655, 64, %s5657, [#allocation3]
        $region68: #{tpu_custom_call.1} parent=55 // pred_fallthru
          _
        // Predicated region
        $region69: #{tpu_custom_call.1} parent=55 // pred_check
          %p5660 = pneg %p295
        $region70: #{tpu_custom_call.1} parent=55 // pred_check_branch
          %5662 = sbr.rel (%p5660) target = $region72
        $region71: #{tpu_custom_call.1} parent=55 // pred_region
          %5664 = vsyncadd [#allocation5], 0
          %s5666 = sshll.u32 [#allocation4], 4
          %s5667 = int_to_ptr.vmem [resolvable:$true] %s5666
          %s5668 = sshll.u32 %s10, 4
          %s5669 = int_to_ptr.hbm [resolvable:$true] %s5668
          %5671 = dma.vmem_to_hbm [thread:$0]  %s5667, 64, %s5669, [#allocation5]
        $region72: #{tpu_custom_call.1} parent=55 // pred_fallthru
          _
        // Predicated region
        $region73: #{tpu_custom_call.1} parent=55 // pred_check
          %p5672 = pneg %p316
        $region74: #{tpu_custom_call.1} parent=55 // pred_check_branch
          %5674 = sbr.rel (%p5672) target = $region76
        $region75: #{tpu_custom_call.1} parent=55 // pred_region
          %5676 = vsyncadd [#allocation5], 0
          %s5678 = sshll.u32 [#allocation6], 4
          %s5679 = int_to_ptr.vmem [resolvable:$true] %s5678
          %s5680 = sshll.u32 %s11, 4
          %s5681 = int_to_ptr.hbm [resolvable:$true] %s5680
          %5683 = dma.vmem_to_hbm [thread:$0]  %s5679, 64, %s5681, [#allocation5]
        $region76: #{tpu_custom_call.1} parent=55 // pred_fallthru
          _
        // Predicated region
        $region77: #{tpu_custom_call.1} parent=55 // pred_check
          %p5684 = pneg %p337
        $region78: #{tpu_custom_call.1} parent=55 // pred_check_branch
          %5686 = sbr.rel (%p5684) target = $region80
        $region79: #{tpu_custom_call.1} parent=55 // pred_region
          %5688 = vsyncadd [#allocation8], 0
          %s5690 = sshll.u32 [#allocation7], 4
          %s5691 = int_to_ptr.vmem [resolvable:$true] %s5690
          %s5692 = sshll.u32 %s12, 4
          %s5693 = int_to_ptr.hbm [resolvable:$true] %s5692
          %5695 = dma.vmem_to_hbm [thread:$0]  %s5691, 16, %s5693, [#allocation8]
        $region80: #{tpu_custom_call.1} parent=55 // pred_fallthru
          _
        // Predicated region
        $region81: #{tpu_custom_call.1} parent=55 // pred_check
          %p5696 = pneg %p274
        $region82: #{tpu_custom_call.1} parent=55 // pred_check_branch
          %5698 = sbr.rel (%p5696) target = $region84
        $region83: #{tpu_custom_call.1} parent=55 // pred_region
          %5700 = dma.done [#allocation3], 64
        $region84: #{tpu_custom_call.1} parent=55 // pred_fallthru
          _
        // Predicated region
        $region85: #{tpu_custom_call.1} parent=55 // pred_check
          %p5701 = pneg %p295
        $region86: #{tpu_custom_call.1} parent=55 // pred_check_branch
          %5703 = sbr.rel (%p5701) target = $region88
        $region87: #{tpu_custom_call.1} parent=55 // pred_region
          %5705 = dma.done [#allocation5], 64
        $region88: #{tpu_custom_call.1} parent=55 // pred_fallthru
          _
        // Predicated region
        $region89: #{tpu_custom_call.1} parent=55 // pred_check
          %p5706 = pneg %p316
        $region90: #{tpu_custom_call.1} parent=55 // pred_check_branch
          %5708 = sbr.rel (%p5706) target = $region92
        $region91: #{tpu_custom_call.1} parent=55 // pred_region
          %5710 = dma.done [#allocation5], 64
        $region92: #{tpu_custom_call.1} parent=55 // pred_fallthru
          _
        // Predicated region
        $region93: #{tpu_custom_call.1} parent=55 // pred_check
          %p5711 = pneg %p337
        $region94: #{tpu_custom_call.1} parent=55 // pred_check_branch
          %5713 = sbr.rel (%p5711) target = $region96
        $region95: #{tpu_custom_call.1} parent=55 // pred_region
          %5715 = dma.done [#allocation8], 16
        $region96: #{tpu_custom_call.1} parent=55 // pred_fallthru
          _
      $region56: #{tpu_custom_call.1} parent=5 // pred_fallthru
        _
      %p5716 = scmp.le.s32.totalorder 2, %s22
      // Predicated region
      $region97: #{tpu_custom_call.1} parent=5 // pred_check
        %p5717 = pneg %p5716
      $region98: #{tpu_custom_call.1} parent=5 // pred_check_branch
        %5719 = sbr.rel (%p5717) target = $region100
      $region99: #{tpu_custom_call.1} parent=5 // pred_region
        %s5720 = ssub.s32 %s22, 2
      $region100: #{tpu_custom_call.1} parent=5 // pred_fallthru
        _
    $region6: #{tpu_custom_call.1} parent=1 // loop_footer
      %s26 = sadd.s32 1, %s22
    $region7: #{tpu_custom_call.1} parent=1 // loop_footer_branch
      %21 = sbr.rel target = $region3
    $region8: #{tpu_custom_call.1} parent=1 // loop_exit
      _
    %5721 = vsyncpa [#allocation3], 1
    %s5722 = scalar_lea.sflag [#allocation3], 1
    %5723 = vsyncpa %s5722, 1
    %5724 = vsyncpa [#allocation5], 1
    %5725 = vsyncpa [#allocation8], 1

</llo_original>
